<compile_context>
chip_gen: v5e
topology: v5e:2x2
jax: 0.10.0
libtpu: 0.0.40
codegen_flags: <defaults>
</compile_context>

<pallas_src>
import math
import functools

import jax
import jax.numpy as jnp
from jax.experimental import pallas as pl
from jax.experimental.pallas import tpu as pltpu


# ----------------------------------------------------------------------------
# Fused kernel: grid over layers, batch collapsed, activations resident in the
# output blocks.
# ----------------------------------------------------------------------------
def _encoder_kernel(tgt_ref, src_ref, *rest, B, T, S, D, H):
    (t_wq, t_wk, t_wv, t_bq, t_bk, t_bv, t_wo, t_bo,
     s_wq, s_wk, s_wv, s_bq, s_bk, s_bv, s_wo, s_bo,
     ln_t1_w, ln_t1_b, ln_s1_w, ln_s1_b,
     ff_t_w1, ff_t_b1, ff_t_w2, ff_t_b2,
     ff_s_w1, ff_s_b1, ff_s_w2, ff_s_b2,
     ln_t2_w, ln_t2_b, ln_s2_w, ln_s2_b,
     tgt_out_ref, src_out_ref) = rest

    hd = D // H
    cdt = jnp.bfloat16                      # MXU input dtype (f32 accumulation)
    l = pl.program_id(0)

    # Layer 0: seed the layer-resident activations. The OUTPUT blocks are the
    # resident buffers: their BlockSpec index map is constant over the layer
    # axis, so the same VMEM block is revisited every grid step and only
    # written back to HBM after the last layer.
    # NOTE: correct only while the out_specs index_map stays constant in `l`.
    @pl.when(l == 0)
    def _():
        tgt_out_ref[...] = tgt_ref[...]
        src_out_ref[...] = src_ref[...]

    tgt2 = tgt_out_ref[...]                 # (B*T, D) f32
    src2 = src_out_ref[...]                 # (B*S, D) f32

    def mha(q2, kv2, Lq, Lk, wq, wk, wv, bq, bk, bv, wo, bo):
        # q2: (B*Lq, D) f32, kv2: (B*Lk, D) f32 -> (B*Lq, D) f32
        q2c = q2.astype(cdt)
        kv2c = kv2.astype(cdt)
        # Lane-dense full-D projections: one MXU matmul each (K = D, N = D).
        # The 1/sqrt(hd) scale is folded into wq / bq on the host.
        q = jnp.dot(q2c, wq[...], preferred_element_type=jnp.float32) + bq[...]
        k = jnp.dot(kv2c, wk[...], preferred_element_type=jnp.float32) + bk[...]
        v = jnp.dot(kv2c, wv[...], preferred_element_type=jnp.float32) + bv[...]
        qb = q.reshape(B, Lq, D).astype(cdt)
        kb = k.reshape(B, Lk, D).astype(cdt)
        vb = v.reshape(B, Lk, D).astype(cdt)

        # Scores / weighted-sum as batched dot_generals (batch dim = B); only
        # the small static head loop remains unrolled.
        # TODO(synk): for large H, fold heads into the einsum batch dim too
        # ((B*H, L, hd) operands) instead of the static head loop.
        head_outs = []
        for h in range(H):
            qh = qb[:, :, h * hd:(h + 1) * hd]
            kh = kb[:, :, h * hd:(h + 1) * hd]
            vh = vb[:, :, h * hd:(h + 1) * hd]
            sc = jnp.einsum('bqd,bkd->bqk', qh, kh,
                            preferred_element_type=jnp.float32)   # (B, Lq, Lk)
            sc = sc - jnp.max(sc, axis=-1, keepdims=True)
            p = jnp.exp(sc)
            # Exact reciprocal (EUP) -> parity with the fp32 reference.
            p = p * pl.reciprocal(jnp.sum(p, axis=-1, keepdims=True))
            head_outs.append(
                jnp.einsum('bqk,bkd->bqd', p.astype(cdt), vh,
                           preferred_element_type=jnp.float32))   # (B, Lq, hd)
        # Single D-deep out-projection on the lane-concatenated head outputs.
        o = jnp.concatenate(head_outs, axis=-1).reshape(B * Lq, D)
        return (jnp.dot(o.astype(cdt), wo[...],
                        preferred_element_type=jnp.float32) + bo[...])

    def layer_norm(x2, Lx, w_ref, b_ref, eps=1e-5):
        # nn.LayerNorm([seq, dim]): normalize over seq AND dim, per sample.
        # Two-pass (centered) f32 statistics, batched over B.
        x = x2.reshape(B, Lx, D)
        inv_n = 1.0 / (Lx * D)
        mean = jnp.sum(jnp.sum(x, axis=2, keepdims=True), axis=1,
                       keepdims=True) * inv_n                      # (B, 1, 1)
        xc = x - mean
        var = jnp.sum(jnp.sum(xc * xc, axis=2, keepdims=True), axis=1,
                      keepdims=True) * inv_n
        y = xc * jax.lax.rsqrt(var + eps) * w_ref[...] + b_ref[...]
        return y.reshape(B * Lx, D)

    def ff(x2, w1, b1, w2, b2):
        # TODO(synk): on v7x with realistic D, K-tile the 4D-wide FF weights
        # (emit_pipeline over K chunks) instead of holding resident slabs.
        h1 = jnp.dot(x2.astype(cdt), w1[...],
                     preferred_element_type=jnp.float32) + b1[...]
        h1 = jnp.maximum(h1, 0.0)
        return jnp.dot(h1.astype(cdt), w2[...],
                       preferred_element_type=jnp.float32) + b2[...]

    # Cross attention (both directions use this layer's ORIGINAL tgt/src).
    tgt_attn = mha(tgt2, src2, T, S, t_wq, t_wk, t_wv, t_bq, t_bk, t_bv, t_wo, t_bo)
    src_attn = mha(src2, tgt2, S, T, s_wq, s_wk, s_wv, s_bq, s_bk, s_bv, s_wo, s_bo)

    tgt_n = layer_norm(tgt_attn + tgt2, T, ln_t1_w, ln_t1_b)
    src_n = layer_norm(src_attn + src2, S, ln_s1_w, ln_s1_b)

    tgt_f = ff(tgt_n, ff_t_w1, ff_t_b1, ff_t_w2, ff_t_b2)
    src_f = ff(src_n, ff_s_w1, ff_s_b1, ff_s_w2, ff_s_b2)

    # Write the new activations back into the resident output blocks; the next
    # grid step (layer) reads them, the last one is DMA'd back to HBM.
    tgt_out_ref[...] = layer_norm(tgt_f + tgt_n, T, ln_t2_w, ln_t2_b)
    src_out_ref[...] = layer_norm(src_f + src_n, S, ln_s2_w, ln_s2_b)


# ----------------------------------------------------------------------------
# Wrapper: single pallas_call over all layers
# ----------------------------------------------------------------------------
def transformer_encoder(tgt, src, packed_params, num_heads):
    B, T, D = tgt.shape
    _, S, _ = src.shape
    L = packed_params[0].shape[0]

    tgt2 = tgt.reshape(B * T, D)
    src2 = src.reshape(B * S, D)

    def act_spec(rows):
        return pl.BlockSpec((rows, D), lambda l: (0, 0))

    def w_spec(arr):
        # leading layer axis squeezed out; block index follows the grid step.
        return pl.BlockSpec((None,) + arr.shape[1:],
                            lambda l, _n=arr.ndim: (l,) + (0,) * (_n - 1))

    in_specs = ([act_spec(B * T), act_spec(B * S)]
                + [w_spec(p) for p in packed_params])
    out_specs = (act_spec(B * T), act_spec(B * S))

    # Explicit scoped-VMEM budget: double-buffered per-layer weights + resident
    # activation blocks (+ slack), clamped to remain safe on v7x (64 MiB VMEM).
    w_bytes = sum(math.prod(p.shape[1:]) * p.dtype.itemsize for p in packed_params)
    act_bytes = 2 * (B * T + B * S) * D * 4
    vmem_limit = int(min(max(2 * w_bytes + act_bytes + (4 << 20), 32 << 20),
                         56 << 20))

    kernel = functools.partial(_encoder_kernel, B=B, T=T, S=S, D=D, H=num_heads)

    out_t, out_s = pl.pallas_call(
        kernel,
        out_shape=(jax.ShapeDtypeStruct((B * T, D), jnp.float32),
                   jax.ShapeDtypeStruct((B * S, D), jnp.float32)),
        grid_spec=pltpu.PrefetchScalarGridSpec(
            num_scalar_prefetch=0,
            grid=(L,),
            in_specs=in_specs,
            out_specs=out_specs,
        ),
        compiler_params=pltpu.CompilerParams(
            dimension_semantics=("arbitrary",),
            vmem_limit_bytes=vmem_limit),
    )(tgt2, src2, *packed_params)

    # TODO(synk): add a leading 'parallel' batch-chunk grid axis (block the
    # activations/outputs by batch) so v7x's second TensorCore is used.
    return out_t.reshape(B, T, D), out_s.reshape(B, S, D)


# ----------------------------------------------------------------------------
# Host-side weight preprocessing (transpose / scale-fold / bf16 / stack over L)
# ----------------------------------------------------------------------------
def pack_params(layer_params, D, H):
    hd = D // H
    scale = 1.0 / math.sqrt(hd)
    bf = jnp.bfloat16
    per_layer = []
    for p in layer_params:
        (t_in_w, t_in_b, t_out_w, t_out_b,
         s_in_w, s_in_b, s_out_w, s_out_b,
         ln_t1_w, ln_t1_b, ln_s1_w, ln_s1_b,
         ff_t_w1, ff_t_b1, ff_t_w2, ff_t_b2,
         ff_s_w1, ff_s_b1, ff_s_w2, ff_s_b2,
         ln_t2_w, ln_t2_b, ln_s2_w, ln_s2_b) = p

        def attn_pack(in_w, in_b, out_w, out_b):
            # torch weights are (out, in); pre-transpose for x @ W form and
            # fold the 1/sqrt(hd) attention scale into the Q weights/bias.
            wq = (in_w[0:D].T * scale).astype(bf)
            wk = in_w[D:2 * D].T.astype(bf)
            wv = in_w[2 * D:3 * D].T.astype(bf)
            bq = in_b[:, 0:D] * scale                    # (1, D) f32
            bk = in_b[:, D:2 * D]
            bv = in_b[:, 2 * D:3 * D]
            wo = out_w.T.astype(bf)                      # (D, D)
            return [wq, wk, wv, bq, bk, bv, wo, out_b]

        packed = (
            attn_pack(t_in_w, t_in_b, t_out_w, t_out_b)
            + attn_pack(s_in_w, s_in_b, s_out_w, s_out_b)
            + [ln_t1_w, ln_t1_b, ln_s1_w, ln_s1_b]
            + [ff_t_w1.T.astype(bf), ff_t_b1, ff_t_w2.T.astype(bf), ff_t_b2]
            + [ff_s_w1.T.astype(bf), ff_s_b1, ff_s_w2.T.astype(bf), ff_s_b2]
            + [ln_t2_w, ln_t2_b, ln_s2_w, ln_s2_b]
        )
        per_layer.append(packed)

    n = len(per_layer[0])
    return [jnp.stack([layer[i] for layer in per_layer], axis=0)
            for i in range(n)]


# ----------------------------------------------------------------------------
# Deterministic parameter initialization (PyTorch param shapes, synthetic vals)
# ----------------------------------------------------------------------------
def init_layer_params(key, D, T, S, ff_k=4):
    ks = jax.random.split(key, 24)

    def w(k, shape, scale=0.05):
        return (scale * jax.random.normal(k, shape)).astype(jnp.float32)

    return [
        # attention (tgt-query): in_proj (3D,D), in_bias (1,3D), out (D,D), out_b (1,D)
        w(ks[0], (3 * D, D)), w(ks[1], (1, 3 * D)),
        w(ks[2], (D, D)),     w(ks[3], (1, D)),
        # attention (src-query)
        w(ks[4], (3 * D, D)), w(ks[5], (1, 3 * D)),
        w(ks[6], (D, D)),     w(ks[7], (1, D)),
        # LN_t1 / LN_s1 : affine over [seq, dim]
        jnp.ones((T, D), jnp.float32) + w(ks[8], (T, D)),  w(ks[9], (T, D)),
        jnp.ones((S, D), jnp.float32) + w(ks[10], (S, D)), w(ks[11], (S, D)),
        # FF tgt: Linear(D,4D), Linear(4D,D)  (PyTorch weight = (out,in))
        w(ks[12], (ff_k * D, D)), w(ks[13], (1, ff_k * D)),
        w(ks[14], (D, ff_k * D)), w(ks[15], (1, D)),
        # FF src
        w(ks[16], (ff_k * D, D)), w(ks[17], (1, ff_k * D)),
        w(ks[18], (D, ff_k * D)), w(ks[19], (1, D)),
        # LN_t2 / LN_s2
        jnp.ones((T, D), jnp.float32) + w(ks[20], (T, D)), w(ks[21], (T, D)),
        jnp.ones((S, D), jnp.float32) + w(ks[22], (S, D)), w(ks[23], (S, D)),
    ]


# ----------------------------------------------------------------------------
# Pure-JAX reference (mirrors PyTorch semantics, f32 HIGHEST precision)
# ----------------------------------------------------------------------------
def ref_layer(tgt, src, p, num_heads):
    (t_in_w, t_in_b, t_out_w, t_out_b,
     s_in_w, s_in_b, s_out_w, s_out_b,
     ln_t1_w, ln_t1_b, ln_s1_w, ln_s1_b,
     ff_t_w1, ff_t_b1, ff_t_w2, ff_t_b2,
     ff_s_w1, ff_s_b1, ff_s_w2, ff_s_b2,
     ln_t2_w, ln_t2_b, ln_s2_w, ln_s2_b) = p
    D = tgt.shape[-1]
    hd = D // num_heads
    hp = jax.lax.Precision.HIGHEST

    def mha(q_in, kv_in, in_w, in_b, out_w, out_b):
        q = jnp.einsum('bld,ed->ble', q_in, in_w[0:D], precision=hp) + in_b[0, 0:D]
        k = jnp.einsum('bld,ed->ble', kv_in, in_w[D:2 * D], precision=hp) + in_b[0, D:2 * D]
        v = jnp.einsum('bld,ed->ble', kv_in, in_w[2 * D:3 * D], precision=hp) + in_b[0, 2 * D:3 * D]
        B, Lq, _ = q.shape
        Lk = k.shape[1]
        q = q.reshape(B, Lq, num_heads, hd) / math.sqrt(hd)
        k = k.reshape(B, Lk, num_heads, hd)
        v = v.reshape(B, Lk, num_heads, hd)
        sc = jnp.einsum('blhd,bshd->bhls', q, k, precision=hp)
        pr = jax.nn.softmax(sc, axis=-1)
        o = jnp.einsum('bhls,bshd->blhd', pr, v, precision=hp).reshape(B, Lq, D)
        return jnp.einsum('bld,ed->ble', o, out_w, precision=hp) + out_b[0]

    def ln(x, w_, b_, eps=1e-5):
        mean = jnp.mean(x, axis=(1, 2), keepdims=True)
        var = jnp.mean((x - mean) ** 2, axis=(1, 2), keepdims=True)
        return (x - mean) / jnp.sqrt(var + eps) * w_ + b_

    def ff(x, w1, b1, w2, b2):
        h = jnp.maximum(jnp.einsum('bld,ed->ble', x, w1, precision=hp) + b1[0], 0.0)
        return jnp.einsum('ble,de->bld', h, w2, precision=hp) + b2[0]

    ta = mha(tgt, src, t_in_w, t_in_b, t_out_w, t_out_b)
    sa = mha(src, tgt, s_in_w, s_in_b, s_out_w, s_out_b)
    tn = ln(ta + tgt, ln_t1_w, ln_t1_b)
    sn = ln(sa + src, ln_s1_w, ln_s1_b)
    t_out = ln(ff(tn, ff_t_w1, ff_t_b1, ff_t_w2, ff_t_b2) + tn, ln_t2_w, ln_t2_b)
    s_out = ln(ff(sn, ff_s_w1, ff_s_b1, ff_s_w2, ff_s_b2) + sn, ln_s2_w, ln_s2_b)
    return t_out, s_out


if __name__ == "__main__":
    B, D, H, T, S, L = 2, 32, 4, 8, 16, 2   # batch, model_dim, heads, tgt_seq, src_seq, layers

    key = jax.random.PRNGKey(0)
    k_tgt, k_src, k_params = jax.random.split(key, 3)
    tgt = jax.random.normal(k_tgt, (B, T, D), jnp.float32)
    src = jax.random.normal(k_src, (B, S, D), jnp.float32)

    layer_keys = jax.random.split(k_params, L)
    layer_params = [init_layer_params(k, D, T, S) for k in layer_keys]
    packed_params = pack_params(layer_params, D, H)

    out_tgt, out_src = transformer_encoder(tgt, src, packed_params, H)
    jax.block_until_ready((out_tgt, out_src))

    # Reference check (f32, PyTorch layout).
    ref_tgt, ref_src = tgt, src
    for p in layer_params:
        ref_tgt, ref_src = ref_layer(ref_tgt, ref_src, p, H)

    assert out_tgt.shape == (B, T, D) and out_src.shape == (B, S, D)
    # bf16 MXU inputs -> slightly relaxed tolerance vs the f32 reference.
    assert jnp.allclose(out_tgt, ref_tgt, atol=2e-2, rtol=2e-2)
    assert jnp.allclose(out_src, ref_src, atol=2e-2, rtol=2e-2)
    print("KERNEL_OK")
</pallas_src>

<mosaic_0001>
module attributes {stable_mosaic.version = 11 : i64} {
  func.func @_encoder_kernel(%arg0: i32, %arg1: memref<16x32xf32, #tpu.memory_space<vmem>>, %arg2: memref<32x32xf32, #tpu.memory_space<vmem>>, %arg3: memref<1x32x32xbf16, #tpu.memory_space<vmem>>, %arg4: memref<1x32x32xbf16, #tpu.memory_space<vmem>>, %arg5: memref<1x32x32xbf16, #tpu.memory_space<vmem>>, %arg6: memref<1x1x32xf32, #tpu.memory_space<vmem>>, %arg7: memref<1x1x32xf32, #tpu.memory_space<vmem>>, %arg8: memref<1x1x32xf32, #tpu.memory_space<vmem>>, %arg9: memref<1x32x32xbf16, #tpu.memory_space<vmem>>, %arg10: memref<1x1x32xf32, #tpu.memory_space<vmem>>, %arg11: memref<1x32x32xbf16, #tpu.memory_space<vmem>>, %arg12: memref<1x32x32xbf16, #tpu.memory_space<vmem>>, %arg13: memref<1x32x32xbf16, #tpu.memory_space<vmem>>, %arg14: memref<1x1x32xf32, #tpu.memory_space<vmem>>, %arg15: memref<1x1x32xf32, #tpu.memory_space<vmem>>, %arg16: memref<1x1x32xf32, #tpu.memory_space<vmem>>, %arg17: memref<1x32x32xbf16, #tpu.memory_space<vmem>>, %arg18: memref<1x1x32xf32, #tpu.memory_space<vmem>>, %arg19: memref<1x8x32xf32, #tpu.memory_space<vmem>>, %arg20: memref<1x8x32xf32, #tpu.memory_space<vmem>>, %arg21: memref<1x16x32xf32, #tpu.memory_space<vmem>>, %arg22: memref<1x16x32xf32, #tpu.memory_space<vmem>>, %arg23: memref<1x32x128xbf16, #tpu.memory_space<vmem>>, %arg24: memref<1x1x128xf32, #tpu.memory_space<vmem>>, %arg25: memref<1x128x32xbf16, #tpu.memory_space<vmem>>, %arg26: memref<1x1x32xf32, #tpu.memory_space<vmem>>, %arg27: memref<1x32x128xbf16, #tpu.memory_space<vmem>>, %arg28: memref<1x1x128xf32, #tpu.memory_space<vmem>>, %arg29: memref<1x128x32xbf16, #tpu.memory_space<vmem>>, %arg30: memref<1x1x32xf32, #tpu.memory_space<vmem>>, %arg31: memref<1x8x32xf32, #tpu.memory_space<vmem>>, %arg32: memref<1x8x32xf32, #tpu.memory_space<vmem>>, %arg33: memref<1x16x32xf32, #tpu.memory_space<vmem>>, %arg34: memref<1x16x32xf32, #tpu.memory_space<vmem>>, %arg35: memref<16x32xf32, #tpu.memory_space<vmem>>, %arg36: memref<32x32xf32, #tpu.memory_space<vmem>>) attributes {dimension_semantics = [#tpu.dimension_semantics<arbitrary>], iteration_bounds = array<i64: 2>, scalar_prefetch = 0 : i64, scratch_operands = 0 : i64, tpu.core_type = #tpu.core_type<tc>, window_params = [{pipeline_mode = #tpu.pipeline_mode<synchronous>, transform_indices = @transform_0, window_bounds = array<i64: 16, 32>}, {pipeline_mode = #tpu.pipeline_mode<synchronous>, transform_indices = @transform_1, window_bounds = array<i64: 32, 32>}, {transform_indices = @transform_2, window_bounds = array<i64: 1, 32, 32>}, {transform_indices = @transform_3, window_bounds = array<i64: 1, 32, 32>}, {transform_indices = @transform_4, window_bounds = array<i64: 1, 32, 32>}, {transform_indices = @transform_5, window_bounds = array<i64: 1, 1, 32>}, {transform_indices = @transform_6, window_bounds = array<i64: 1, 1, 32>}, {transform_indices = @transform_7, window_bounds = array<i64: 1, 1, 32>}, {transform_indices = @transform_8, window_bounds = array<i64: 1, 32, 32>}, {transform_indices = @transform_9, window_bounds = array<i64: 1, 1, 32>}, {transform_indices = @transform_10, window_bounds = array<i64: 1, 32, 32>}, {transform_indices = @transform_11, window_bounds = array<i64: 1, 32, 32>}, {transform_indices = @transform_12, window_bounds = array<i64: 1, 32, 32>}, {transform_indices = @transform_13, window_bounds = array<i64: 1, 1, 32>}, {transform_indices = @transform_14, window_bounds = array<i64: 1, 1, 32>}, {transform_indices = @transform_15, window_bounds = array<i64: 1, 1, 32>}, {transform_indices = @transform_16, window_bounds = array<i64: 1, 32, 32>}, {transform_indices = @transform_17, window_bounds = array<i64: 1, 1, 32>}, {transform_indices = @transform_18, window_bounds = array<i64: 1, 8, 32>}, {transform_indices = @transform_19, window_bounds = array<i64: 1, 8, 32>}, {transform_indices = @transform_20, window_bounds = array<i64: 1, 16, 32>}, {transform_indices = @transform_21, window_bounds = array<i64: 1, 16, 32>}, {transform_indices = @transform_22, window_bounds = array<i64: 1, 32, 128>}, {transform_indices = @transform_23, window_bounds = array<i64: 1, 1, 128>}, {transform_indices = @transform_24, window_bounds = array<i64: 1, 128, 32>}, {transform_indices = @transform_25, window_bounds = array<i64: 1, 1, 32>}, {transform_indices = @transform_26, window_bounds = array<i64: 1, 32, 128>}, {transform_indices = @transform_27, window_bounds = array<i64: 1, 1, 128>}, {transform_indices = @transform_28, window_bounds = array<i64: 1, 128, 32>}, {transform_indices = @transform_29, window_bounds = array<i64: 1, 1, 32>}, {transform_indices = @transform_30, window_bounds = array<i64: 1, 8, 32>}, {transform_indices = @transform_31, window_bounds = array<i64: 1, 8, 32>}, {transform_indices = @transform_32, window_bounds = array<i64: 1, 16, 32>}, {transform_indices = @transform_33, window_bounds = array<i64: 1, 16, 32>}, {pipeline_mode = #tpu.pipeline_mode<synchronous>, transform_indices = @transform_34, window_bounds = array<i64: 16, 32>}, {pipeline_mode = #tpu.pipeline_mode<synchronous>, transform_indices = @transform_35, window_bounds = array<i64: 32, 32>}]} {
    %c0_i32 = arith.constant 0 : i32
    %0 = arith.cmpi eq, %arg0, %c0_i32 : i32
    %1 = arith.extui %0 : i1 to i32
    %c0_i32_0 = arith.constant 0 : i32
    %2 = arith.cmpi ne, %1, %c0_i32_0 : i32
    scf.if %2 {
      %c0_177 = arith.constant 0 : index
      %c0_178 = arith.constant 0 : index
      %381 = vector.load %arg1[%c0_177, %c0_178] : memref<16x32xf32, #tpu.memory_space<vmem>>, vector<16x32xf32>
      %c0_179 = arith.constant 0 : index
      %c0_180 = arith.constant 0 : index
      %382 = vector.load %arg35[%c0_179, %c0_180] : memref<16x32xf32, #tpu.memory_space<vmem>>, vector<16x32xf32>
      tpu.vector_store %arg35[%c0_179, %c0_180], %381 {strides = array<i32>} : memref<16x32xf32, #tpu.memory_space<vmem>>, vector<16x32xf32>,
      %c0_181 = arith.constant 0 : index
      %c0_182 = arith.constant 0 : index
      %383 = vector.load %arg2[%c0_181, %c0_182] : memref<32x32xf32, #tpu.memory_space<vmem>>, vector<32x32xf32>
      %c0_183 = arith.constant 0 : index
      %c0_184 = arith.constant 0 : index
      %384 = vector.load %arg36[%c0_183, %c0_184] : memref<32x32xf32, #tpu.memory_space<vmem>>, vector<32x32xf32>
      tpu.vector_store %arg36[%c0_183, %c0_184], %383 {strides = array<i32>} : memref<32x32xf32, #tpu.memory_space<vmem>>, vector<32x32xf32>,
    } else {
    }
    %c0 = arith.constant 0 : index
    %c0_1 = arith.constant 0 : index
    %3 = vector.load %arg35[%c0, %c0_1] : memref<16x32xf32, #tpu.memory_space<vmem>>, vector<16x32xf32>
    %c0_2 = arith.constant 0 : index
    %c0_3 = arith.constant 0 : index
    %4 = vector.load %arg36[%c0_2, %c0_3] : memref<32x32xf32, #tpu.memory_space<vmem>>, vector<32x32xf32>
    %5 = arith.truncf %3 : vector<16x32xf32> to vector<16x32xbf16>
    %6 = arith.truncf %4 : vector<32x32xf32> to vector<32x32xbf16>
    %c0_4 = arith.constant 0 : index
    %c0_5 = arith.constant 0 : index
    %c0_6 = arith.constant 0 : index
    %7 = vector.load %arg3[%c0_4, %c0_5, %c0_6] : memref<1x32x32xbf16, #tpu.memory_space<vmem>>, vector<1x32x32xbf16>
    %8 = vector.shape_cast %7 : vector<1x32x32xbf16> to vector<32x32xbf16>
    %cst = arith.constant dense<0.000000e+00> : vector<16x32xf32>
    %9 = tpu.matmul %5, %8, %cst {dimension_numbers = #tpu.dot_dimension_numbers<[1], [0], [0], [1], [0, 0, 1, 1], [], []>} : vector<16x32xbf16>, vector<32x32xbf16>, vector<16x32xf32> -> vector<16x32xf32>
    %c0_7 = arith.constant 0 : index
    %c0_8 = arith.constant 0 : index
    %c0_9 = arith.constant 0 : index
    %10 = vector.load %arg6[%c0_7, %c0_8, %c0_9] : memref<1x1x32xf32, #tpu.memory_space<vmem>>, vector<1x1x32xf32>
    %11 = vector.shape_cast %10 : vector<1x1x32xf32> to vector<1x32xf32>
    %12 = vector.broadcast %11 : vector<1x32xf32> to vector<16x32xf32>
    %13 = arith.addf %9, %12 : vector<16x32xf32>
    %c0_10 = arith.constant 0 : index
    %c0_11 = arith.constant 0 : index
    %c0_12 = arith.constant 0 : index
    %14 = vector.load %arg4[%c0_10, %c0_11, %c0_12] : memref<1x32x32xbf16, #tpu.memory_space<vmem>>, vector<1x32x32xbf16>
    %15 = vector.shape_cast %14 : vector<1x32x32xbf16> to vector<32x32xbf16>
    %cst_13 = arith.constant dense<0.000000e+00> : vector<32x32xf32>
    %16 = tpu.matmul %6, %15, %cst_13 {dimension_numbers = #tpu.dot_dimension_numbers<[1], [0], [0], [1], [0, 0, 1, 1], [], []>} : vector<32x32xbf16>, vector<32x32xbf16>, vector<32x32xf32> -> vector<32x32xf32>
    %c0_14 = arith.constant 0 : index
    %c0_15 = arith.constant 0 : index
    %c0_16 = arith.constant 0 : index
    %17 = vector.load %arg7[%c0_14, %c0_15, %c0_16] : memref<1x1x32xf32, #tpu.memory_space<vmem>>, vector<1x1x32xf32>
    %18 = vector.shape_cast %17 : vector<1x1x32xf32> to vector<1x32xf32>
    %19 = vector.broadcast %18 : vector<1x32xf32> to vector<32x32xf32>
    %20 = arith.addf %16, %19 : vector<32x32xf32>
    %c0_17 = arith.constant 0 : index
    %c0_18 = arith.constant 0 : index
    %c0_19 = arith.constant 0 : index
    %21 = vector.load %arg5[%c0_17, %c0_18, %c0_19] : memref<1x32x32xbf16, #tpu.memory_space<vmem>>, vector<1x32x32xbf16>
    %22 = vector.shape_cast %21 : vector<1x32x32xbf16> to vector<32x32xbf16>
    %cst_20 = arith.constant dense<0.000000e+00> : vector<32x32xf32>
    %23 = tpu.matmul %6, %22, %cst_20 {dimension_numbers = #tpu.dot_dimension_numbers<[1], [0], [0], [1], [0, 0, 1, 1], [], []>} : vector<32x32xbf16>, vector<32x32xbf16>, vector<32x32xf32> -> vector<32x32xf32>
    %c0_21 = arith.constant 0 : index
    %c0_22 = arith.constant 0 : index
    %c0_23 = arith.constant 0 : index
    %24 = vector.load %arg8[%c0_21, %c0_22, %c0_23] : memref<1x1x32xf32, #tpu.memory_space<vmem>>, vector<1x1x32xf32>
    %25 = vector.shape_cast %24 : vector<1x1x32xf32> to vector<1x32xf32>
    %26 = vector.broadcast %25 : vector<1x32xf32> to vector<32x32xf32>
    %27 = arith.addf %23, %26 : vector<32x32xf32>
    %28 = vector.shape_cast %13 : vector<16x32xf32> to vector<2x8x32xf32>
    %29 = arith.truncf %28 : vector<2x8x32xf32> to vector<2x8x32xbf16>
    %30 = vector.shape_cast %20 : vector<32x32xf32> to vector<2x16x32xf32>
    %31 = arith.truncf %30 : vector<2x16x32xf32> to vector<2x16x32xbf16>
    %32 = vector.shape_cast %27 : vector<32x32xf32> to vector<2x16x32xf32>
    %33 = arith.truncf %32 : vector<2x16x32xf32> to vector<2x16x32xbf16>
    %34 = vector.extract_strided_slice %29 {offsets = [0, 0, 0], sizes = [2, 8, 8], strides = [1, 1, 1]} : vector<2x8x32xbf16> to vector<2x8x8xbf16>
    %35 = vector.extract_strided_slice %31 {offsets = [0, 0, 0], sizes = [2, 16, 8], strides = [1, 1, 1]} : vector<2x16x32xbf16> to vector<2x16x8xbf16>
    %36 = vector.extract_strided_slice %33 {offsets = [0, 0, 0], sizes = [2, 16, 8], strides = [1, 1, 1]} : vector<2x16x32xbf16> to vector<2x16x8xbf16>
    "tpu.trace_start"() <{level = 10 : i32, message = "bqd,bkd->bqk"}> : () -> ()
    %cst_24 = arith.constant dense<0.000000e+00> : vector<2x8x16xf32>
    %37 = tpu.matmul %34, %35, %cst_24 {dimension_numbers = #tpu.dot_dimension_numbers<[2], [2], [1], [1], [0, 0, 0, 1, 1, 1], [0], [0]>} : vector<2x8x8xbf16>, vector<2x16x8xbf16>, vector<2x8x16xf32> -> vector<2x8x16xf32>
    "tpu.trace_stop"() : () -> ()
    %cst_25 = arith.constant dense<0xFF800000> : vector<2x8xf32>
    %38 = vector.multi_reduction <maximumf>, %37, %cst_25 [2] : vector<2x8x16xf32> to vector<2x8xf32>
    %39 = vector.shape_cast %38 : vector<2x8xf32> to vector<2x8x1xf32>
    %40 = vector.broadcast %39 : vector<2x8x1xf32> to vector<2x8x16xf32>
    %41 = arith.subf %37, %40 : vector<2x8x16xf32>
    %42 = math.exp %41 : vector<2x8x16xf32>
    %cst_26 = arith.constant dense<0.000000e+00> : vector<2x8xf32>
    %43 = vector.multi_reduction <add>, %42, %cst_26 [2] : vector<2x8x16xf32> to vector<2x8xf32>
    %44 = vector.shape_cast %43 : vector<2x8xf32> to vector<2x8x1xf32>
    %45 = tpu.reciprocal %44 : vector<2x8x1xf32> -> vector<2x8x1xf32>
    %46 = vector.broadcast %45 : vector<2x8x1xf32> to vector<2x8x16xf32>
    %47 = arith.mulf %42, %46 : vector<2x8x16xf32>
    %48 = arith.truncf %47 : vector<2x8x16xf32> to vector<2x8x16xbf16>
    "tpu.trace_start"() <{level = 10 : i32, message = "bqk,bkd->bqd"}> : () -> ()
    %cst_27 = arith.constant dense<0.000000e+00> : vector<2x8x8xf32>
    %49 = tpu.matmul %48, %36, %cst_27 {dimension_numbers = #tpu.dot_dimension_numbers<[2], [1], [1], [2], [0, 0, 0, 1, 1, 2], [0], [0]>} : vector<2x8x16xbf16>, vector<2x16x8xbf16>, vector<2x8x8xf32> -> vector<2x8x8xf32>
    "tpu.trace_stop"() : () -> ()
    %50 = vector.extract_strided_slice %29 {offsets = [0, 0, 8], sizes = [2, 8, 8], strides = [1, 1, 1]} : vector<2x8x32xbf16> to vector<2x8x8xbf16>
    %51 = vector.extract_strided_slice %31 {offsets = [0, 0, 8], sizes = [2, 16, 8], strides = [1, 1, 1]} : vector<2x16x32xbf16> to vector<2x16x8xbf16>
    %52 = vector.extract_strided_slice %33 {offsets = [0, 0, 8], sizes = [2, 16, 8], strides = [1, 1, 1]} : vector<2x16x32xbf16> to vector<2x16x8xbf16>
    "tpu.trace_start"() <{level = 10 : i32, message = "bqd,bkd->bqk"}> : () -> ()
    %cst_28 = arith.constant dense<0.000000e+00> : vector<2x8x16xf32>
    %53 = tpu.matmul %50, %51, %cst_28 {dimension_numbers = #tpu.dot_dimension_numbers<[2], [2], [1], [1], [0, 0, 0, 1, 1, 1], [0], [0]>} : vector<2x8x8xbf16>, vector<2x16x8xbf16>, vector<2x8x16xf32> -> vector<2x8x16xf32>
    "tpu.trace_stop"() : () -> ()
    %cst_29 = arith.constant dense<0xFF800000> : vector<2x8xf32>
    %54 = vector.multi_reduction <maximumf>, %53, %cst_29 [2] : vector<2x8x16xf32> to vector<2x8xf32>
    %55 = vector.shape_cast %54 : vector<2x8xf32> to vector<2x8x1xf32>
    %56 = vector.broadcast %55 : vector<2x8x1xf32> to vector<2x8x16xf32>
    %57 = arith.subf %53, %56 : vector<2x8x16xf32>
    %58 = math.exp %57 : vector<2x8x16xf32>
    %cst_30 = arith.constant dense<0.000000e+00> : vector<2x8xf32>
    %59 = vector.multi_reduction <add>, %58, %cst_30 [2] : vector<2x8x16xf32> to vector<2x8xf32>
    %60 = vector.shape_cast %59 : vector<2x8xf32> to vector<2x8x1xf32>
    %61 = tpu.reciprocal %60 : vector<2x8x1xf32> -> vector<2x8x1xf32>
    %62 = vector.broadcast %61 : vector<2x8x1xf32> to vector<2x8x16xf32>
    %63 = arith.mulf %58, %62 : vector<2x8x16xf32>
    %64 = arith.truncf %63 : vector<2x8x16xf32> to vector<2x8x16xbf16>
    "tpu.trace_start"() <{level = 10 : i32, message = "bqk,bkd->bqd"}> : () -> ()
    %cst_31 = arith.constant dense<0.000000e+00> : vector<2x8x8xf32>
    %65 = tpu.matmul %64, %52, %cst_31 {dimension_numbers = #tpu.dot_dimension_numbers<[2], [1], [1], [2], [0, 0, 0, 1, 1, 2], [0], [0]>} : vector<2x8x16xbf16>, vector<2x16x8xbf16>, vector<2x8x8xf32> -> vector<2x8x8xf32>
    "tpu.trace_stop"() : () -> ()
    %66 = vector.extract_strided_slice %29 {offsets = [0, 0, 16], sizes = [2, 8, 8], strides = [1, 1, 1]} : vector<2x8x32xbf16> to vector<2x8x8xbf16>
    %67 = vector.extract_strided_slice %31 {offsets = [0, 0, 16], sizes = [2, 16, 8], strides = [1, 1, 1]} : vector<2x16x32xbf16> to vector<2x16x8xbf16>
    %68 = vector.extract_strided_slice %33 {offsets = [0, 0, 16], sizes = [2, 16, 8], strides = [1, 1, 1]} : vector<2x16x32xbf16> to vector<2x16x8xbf16>
    "tpu.trace_start"() <{level = 10 : i32, message = "bqd,bkd->bqk"}> : () -> ()
    %cst_32 = arith.constant dense<0.000000e+00> : vector<2x8x16xf32>
    %69 = tpu.matmul %66, %67, %cst_32 {dimension_numbers = #tpu.dot_dimension_numbers<[2], [2], [1], [1], [0, 0, 0, 1, 1, 1], [0], [0]>} : vector<2x8x8xbf16>, vector<2x16x8xbf16>, vector<2x8x16xf32> -> vector<2x8x16xf32>
    "tpu.trace_stop"() : () -> ()
    %cst_33 = arith.constant dense<0xFF800000> : vector<2x8xf32>
    %70 = vector.multi_reduction <maximumf>, %69, %cst_33 [2] : vector<2x8x16xf32> to vector<2x8xf32>
    %71 = vector.shape_cast %70 : vector<2x8xf32> to vector<2x8x1xf32>
    %72 = vector.broadcast %71 : vector<2x8x1xf32> to vector<2x8x16xf32>
    %73 = arith.subf %69, %72 : vector<2x8x16xf32>
    %74 = math.exp %73 : vector<2x8x16xf32>
    %cst_34 = arith.constant dense<0.000000e+00> : vector<2x8xf32>
    %75 = vector.multi_reduction <add>, %74, %cst_34 [2] : vector<2x8x16xf32> to vector<2x8xf32>
    %76 = vector.shape_cast %75 : vector<2x8xf32> to vector<2x8x1xf32>
    %77 = tpu.reciprocal %76 : vector<2x8x1xf32> -> vector<2x8x1xf32>
    %78 = vector.broadcast %77 : vector<2x8x1xf32> to vector<2x8x16xf32>
    %79 = arith.mulf %74, %78 : vector<2x8x16xf32>
    %80 = arith.truncf %79 : vector<2x8x16xf32> to vector<2x8x16xbf16>
    "tpu.trace_start"() <{level = 10 : i32, message = "bqk,bkd->bqd"}> : () -> ()
    %cst_35 = arith.constant dense<0.000000e+00> : vector<2x8x8xf32>
    %81 = tpu.matmul %80, %68, %cst_35 {dimension_numbers = #tpu.dot_dimension_numbers<[2], [1], [1], [2], [0, 0, 0, 1, 1, 2], [0], [0]>} : vector<2x8x16xbf16>, vector<2x16x8xbf16>, vector<2x8x8xf32> -> vector<2x8x8xf32>
    "tpu.trace_stop"() : () -> ()
    %82 = vector.extract_strided_slice %29 {offsets = [0, 0, 24], sizes = [2, 8, 8], strides = [1, 1, 1]} : vector<2x8x32xbf16> to vector<2x8x8xbf16>
    %83 = vector.extract_strided_slice %31 {offsets = [0, 0, 24], sizes = [2, 16, 8], strides = [1, 1, 1]} : vector<2x16x32xbf16> to vector<2x16x8xbf16>
    %84 = vector.extract_strided_slice %33 {offsets = [0, 0, 24], sizes = [2, 16, 8], strides = [1, 1, 1]} : vector<2x16x32xbf16> to vector<2x16x8xbf16>
    "tpu.trace_start"() <{level = 10 : i32, message = "bqd,bkd->bqk"}> : () -> ()
    %cst_36 = arith.constant dense<0.000000e+00> : vector<2x8x16xf32>
    %85 = tpu.matmul %82, %83, %cst_36 {dimension_numbers = #tpu.dot_dimension_numbers<[2], [2], [1], [1], [0, 0, 0, 1, 1, 1], [0], [0]>} : vector<2x8x8xbf16>, vector<2x16x8xbf16>, vector<2x8x16xf32> -> vector<2x8x16xf32>
    "tpu.trace_stop"() : () -> ()
    %cst_37 = arith.constant dense<0xFF800000> : vector<2x8xf32>
    %86 = vector.multi_reduction <maximumf>, %85, %cst_37 [2] : vector<2x8x16xf32> to vector<2x8xf32>
    %87 = vector.shape_cast %86 : vector<2x8xf32> to vector<2x8x1xf32>
    %88 = vector.broadcast %87 : vector<2x8x1xf32> to vector<2x8x16xf32>
    %89 = arith.subf %85, %88 : vector<2x8x16xf32>
    %90 = math.exp %89 : vector<2x8x16xf32>
    %cst_38 = arith.constant dense<0.000000e+00> : vector<2x8xf32>
    %91 = vector.multi_reduction <add>, %90, %cst_38 [2] : vector<2x8x16xf32> to vector<2x8xf32>
    %92 = vector.shape_cast %91 : vector<2x8xf32> to vector<2x8x1xf32>
    %93 = tpu.reciprocal %92 : vector<2x8x1xf32> -> vector<2x8x1xf32>
    %94 = vector.broadcast %93 : vector<2x8x1xf32> to vector<2x8x16xf32>
    %95 = arith.mulf %90, %94 : vector<2x8x16xf32>
    %96 = arith.truncf %95 : vector<2x8x16xf32> to vector<2x8x16xbf16>
    "tpu.trace_start"() <{level = 10 : i32, message = "bqk,bkd->bqd"}> : () -> ()
    %cst_39 = arith.constant dense<0.000000e+00> : vector<2x8x8xf32>
    %97 = tpu.matmul %96, %84, %cst_39 {dimension_numbers = #tpu.dot_dimension_numbers<[2], [1], [1], [2], [0, 0, 0, 1, 1, 2], [0], [0]>} : vector<2x8x16xbf16>, vector<2x16x8xbf16>, vector<2x8x8xf32> -> vector<2x8x8xf32>
    "tpu.trace_stop"() : () -> ()
    %98 = tpu.concatenate %49, %65, %81, %97 in 2 : vector<2x8x8xf32>, vector<2x8x8xf32>, vector<2x8x8xf32>, vector<2x8x8xf32> -> vector<2x8x32xf32>
    %99 = vector.shape_cast %98 : vector<2x8x32xf32> to vector<16x32xf32>
    %100 = arith.truncf %99 : vector<16x32xf32> to vector<16x32xbf16>
    %c0_40 = arith.constant 0 : index
    %c0_41 = arith.constant 0 : index
    %c0_42 = arith.constant 0 : index
    %101 = vector.load %arg9[%c0_40, %c0_41, %c0_42] : memref<1x32x32xbf16, #tpu.memory_space<vmem>>, vector<1x32x32xbf16>
    %102 = vector.shape_cast %101 : vector<1x32x32xbf16> to vector<32x32xbf16>
    %cst_43 = arith.constant dense<0.000000e+00> : vector<16x32xf32>
    %103 = tpu.matmul %100, %102, %cst_43 {dimension_numbers = #tpu.dot_dimension_numbers<[1], [0], [0], [1], [0, 0, 1, 1], [], []>} : vector<16x32xbf16>, vector<32x32xbf16>, vector<16x32xf32> -> vector<16x32xf32>
    %c0_44 = arith.constant 0 : index
    %c0_45 = arith.constant 0 : index
    %c0_46 = arith.constant 0 : index
    %104 = vector.load %arg10[%c0_44, %c0_45, %c0_46] : memref<1x1x32xf32, #tpu.memory_space<vmem>>, vector<1x1x32xf32>
    %105 = vector.shape_cast %104 : vector<1x1x32xf32> to vector<1x32xf32>
    %106 = vector.broadcast %105 : vector<1x32xf32> to vector<16x32xf32>
    %107 = arith.addf %103, %106 : vector<16x32xf32>
    %108 = arith.truncf %4 : vector<32x32xf32> to vector<32x32xbf16>
    %109 = arith.truncf %3 : vector<16x32xf32> to vector<16x32xbf16>
    %c0_47 = arith.constant 0 : index
    %c0_48 = arith.constant 0 : index
    %c0_49 = arith.constant 0 : index
    %110 = vector.load %arg11[%c0_47, %c0_48, %c0_49] : memref<1x32x32xbf16, #tpu.memory_space<vmem>>, vector<1x32x32xbf16>
    %111 = vector.shape_cast %110 : vector<1x32x32xbf16> to vector<32x32xbf16>
    %cst_50 = arith.constant dense<0.000000e+00> : vector<32x32xf32>
    %112 = tpu.matmul %108, %111, %cst_50 {dimension_numbers = #tpu.dot_dimension_numbers<[1], [0], [0], [1], [0, 0, 1, 1], [], []>} : vector<32x32xbf16>, vector<32x32xbf16>, vector<32x32xf32> -> vector<32x32xf32>
    %c0_51 = arith.constant 0 : index
    %c0_52 = arith.constant 0 : index
    %c0_53 = arith.constant 0 : index
    %113 = vector.load %arg14[%c0_51, %c0_52, %c0_53] : memref<1x1x32xf32, #tpu.memory_space<vmem>>, vector<1x1x32xf32>
    %114 = vector.shape_cast %113 : vector<1x1x32xf32> to vector<1x32xf32>
    %115 = vector.broadcast %114 : vector<1x32xf32> to vector<32x32xf32>
    %116 = arith.addf %112, %115 : vector<32x32xf32>
    %c0_54 = arith.constant 0 : index
    %c0_55 = arith.constant 0 : index
    %c0_56 = arith.constant 0 : index
    %117 = vector.load %arg12[%c0_54, %c0_55, %c0_56] : memref<1x32x32xbf16, #tpu.memory_space<vmem>>, vector<1x32x32xbf16>
    %118 = vector.shape_cast %117 : vector<1x32x32xbf16> to vector<32x32xbf16>
    %cst_57 = arith.constant dense<0.000000e+00> : vector<16x32xf32>
    %119 = tpu.matmul %109, %118, %cst_57 {dimension_numbers = #tpu.dot_dimension_numbers<[1], [0], [0], [1], [0, 0, 1, 1], [], []>} : vector<16x32xbf16>, vector<32x32xbf16>, vector<16x32xf32> -> vector<16x32xf32>
    %c0_58 = arith.constant 0 : index
    %c0_59 = arith.constant 0 : index
    %c0_60 = arith.constant 0 : index
    %120 = vector.load %arg15[%c0_58, %c0_59, %c0_60] : memref<1x1x32xf32, #tpu.memory_space<vmem>>, vector<1x1x32xf32>
    %121 = vector.shape_cast %120 : vector<1x1x32xf32> to vector<1x32xf32>
    %122 = vector.broadcast %121 : vector<1x32xf32> to vector<16x32xf32>
    %123 = arith.addf %119, %122 : vector<16x32xf32>
    %c0_61 = arith.constant 0 : index
    %c0_62 = arith.constant 0 : index
    %c0_63 = arith.constant 0 : index
    %124 = vector.load %arg13[%c0_61, %c0_62, %c0_63] : memref<1x32x32xbf16, #tpu.memory_space<vmem>>, vector<1x32x32xbf16>
    %125 = vector.shape_cast %124 : vector<1x32x32xbf16> to vector<32x32xbf16>
    %cst_64 = arith.constant dense<0.000000e+00> : vector<16x32xf32>
    %126 = tpu.matmul %109, %125, %cst_64 {dimension_numbers = #tpu.dot_dimension_numbers<[1], [0], [0], [1], [0, 0, 1, 1], [], []>} : vector<16x32xbf16>, vector<32x32xbf16>, vector<16x32xf32> -> vector<16x32xf32>
    %c0_65 = arith.constant 0 : index
    %c0_66 = arith.constant 0 : index
    %c0_67 = arith.constant 0 : index
    %127 = vector.load %arg16[%c0_65, %c0_66, %c0_67] : memref<1x1x32xf32, #tpu.memory_space<vmem>>, vector<1x1x32xf32>
    %128 = vector.shape_cast %127 : vector<1x1x32xf32> to vector<1x32xf32>
    %129 = vector.broadcast %128 : vector<1x32xf32> to vector<16x32xf32>
    %130 = arith.addf %126, %129 : vector<16x32xf32>
    %131 = vector.shape_cast %116 : vector<32x32xf32> to vector<2x16x32xf32>
    %132 = arith.truncf %131 : vector<2x16x32xf32> to vector<2x16x32xbf16>
    %133 = vector.shape_cast %123 : vector<16x32xf32> to vector<2x8x32xf32>
    %134 = arith.truncf %133 : vector<2x8x32xf32> to vector<2x8x32xbf16>
    %135 = vector.shape_cast %130 : vector<16x32xf32> to vector<2x8x32xf32>
    %136 = arith.truncf %135 : vector<2x8x32xf32> to vector<2x8x32xbf16>
    %137 = vector.extract_strided_slice %132 {offsets = [0, 0, 0], sizes = [2, 16, 8], strides = [1, 1, 1]} : vector<2x16x32xbf16> to vector<2x16x8xbf16>
    %138 = vector.extract_strided_slice %134 {offsets = [0, 0, 0], sizes = [2, 8, 8], strides = [1, 1, 1]} : vector<2x8x32xbf16> to vector<2x8x8xbf16>
    %139 = vector.extract_strided_slice %136 {offsets = [0, 0, 0], sizes = [2, 8, 8], strides = [1, 1, 1]} : vector<2x8x32xbf16> to vector<2x8x8xbf16>
    "tpu.trace_start"() <{level = 10 : i32, message = "bqd,bkd->bqk"}> : () -> ()
    %cst_68 = arith.constant dense<0.000000e+00> : vector<2x16x8xf32>
    %140 = tpu.matmul %137, %138, %cst_68 {dimension_numbers = #tpu.dot_dimension_numbers<[2], [2], [1], [1], [0, 0, 0, 1, 1, 1], [0], [0]>} : vector<2x16x8xbf16>, vector<2x8x8xbf16>, vector<2x16x8xf32> -> vector<2x16x8xf32>
    "tpu.trace_stop"() : () -> ()
    %cst_69 = arith.constant dense<0xFF800000> : vector<2x16xf32>
    %141 = vector.multi_reduction <maximumf>, %140, %cst_69 [2] : vector<2x16x8xf32> to vector<2x16xf32>
    %142 = vector.shape_cast %141 : vector<2x16xf32> to vector<2x16x1xf32>
    %143 = vector.broadcast %142 : vector<2x16x1xf32> to vector<2x16x8xf32>
    %144 = arith.subf %140, %143 : vector<2x16x8xf32>
    %145 = math.exp %144 : vector<2x16x8xf32>
    %cst_70 = arith.constant dense<0.000000e+00> : vector<2x16xf32>
    %146 = vector.multi_reduction <add>, %145, %cst_70 [2] : vector<2x16x8xf32> to vector<2x16xf32>
    %147 = vector.shape_cast %146 : vector<2x16xf32> to vector<2x16x1xf32>
    %148 = tpu.reciprocal %147 : vector<2x16x1xf32> -> vector<2x16x1xf32>
    %149 = vector.broadcast %148 : vector<2x16x1xf32> to vector<2x16x8xf32>
    %150 = arith.mulf %145, %149 : vector<2x16x8xf32>
    %151 = arith.truncf %150 : vector<2x16x8xf32> to vector<2x16x8xbf16>
    "tpu.trace_start"() <{level = 10 : i32, message = "bqk,bkd->bqd"}> : () -> ()
    %cst_71 = arith.constant dense<0.000000e+00> : vector<2x16x8xf32>
    %152 = tpu.matmul %151, %139, %cst_71 {dimension_numbers = #tpu.dot_dimension_numbers<[2], [1], [1], [2], [0, 0, 0, 1, 1, 2], [0], [0]>} : vector<2x16x8xbf16>, vector<2x8x8xbf16>, vector<2x16x8xf32> -> vector<2x16x8xf32>
    "tpu.trace_stop"() : () -> ()
    %153 = vector.extract_strided_slice %132 {offsets = [0, 0, 8], sizes = [2, 16, 8], strides = [1, 1, 1]} : vector<2x16x32xbf16> to vector<2x16x8xbf16>
    %154 = vector.extract_strided_slice %134 {offsets = [0, 0, 8], sizes = [2, 8, 8], strides = [1, 1, 1]} : vector<2x8x32xbf16> to vector<2x8x8xbf16>
    %155 = vector.extract_strided_slice %136 {offsets = [0, 0, 8], sizes = [2, 8, 8], strides = [1, 1, 1]} : vector<2x8x32xbf16> to vector<2x8x8xbf16>
    "tpu.trace_start"() <{level = 10 : i32, message = "bqd,bkd->bqk"}> : () -> ()
    %cst_72 = arith.constant dense<0.000000e+00> : vector<2x16x8xf32>
    %156 = tpu.matmul %153, %154, %cst_72 {dimension_numbers = #tpu.dot_dimension_numbers<[2], [2], [1], [1], [0, 0, 0, 1, 1, 1], [0], [0]>} : vector<2x16x8xbf16>, vector<2x8x8xbf16>, vector<2x16x8xf32> -> vector<2x16x8xf32>
    "tpu.trace_stop"() : () -> ()
    %cst_73 = arith.constant dense<0xFF800000> : vector<2x16xf32>
    %157 = vector.multi_reduction <maximumf>, %156, %cst_73 [2] : vector<2x16x8xf32> to vector<2x16xf32>
    %158 = vector.shape_cast %157 : vector<2x16xf32> to vector<2x16x1xf32>
    %159 = vector.broadcast %158 : vector<2x16x1xf32> to vector<2x16x8xf32>
    %160 = arith.subf %156, %159 : vector<2x16x8xf32>
    %161 = math.exp %160 : vector<2x16x8xf32>
    %cst_74 = arith.constant dense<0.000000e+00> : vector<2x16xf32>
    %162 = vector.multi_reduction <add>, %161, %cst_74 [2] : vector<2x16x8xf32> to vector<2x16xf32>
    %163 = vector.shape_cast %162 : vector<2x16xf32> to vector<2x16x1xf32>
    %164 = tpu.reciprocal %163 : vector<2x16x1xf32> -> vector<2x16x1xf32>
    %165 = vector.broadcast %164 : vector<2x16x1xf32> to vector<2x16x8xf32>
    %166 = arith.mulf %161, %165 : vector<2x16x8xf32>
    %167 = arith.truncf %166 : vector<2x16x8xf32> to vector<2x16x8xbf16>
    "tpu.trace_start"() <{level = 10 : i32, message = "bqk,bkd->bqd"}> : () -> ()
    %cst_75 = arith.constant dense<0.000000e+00> : vector<2x16x8xf32>
    %168 = tpu.matmul %167, %155, %cst_75 {dimension_numbers = #tpu.dot_dimension_numbers<[2], [1], [1], [2], [0, 0, 0, 1, 1, 2], [0], [0]>} : vector<2x16x8xbf16>, vector<2x8x8xbf16>, vector<2x16x8xf32> -> vector<2x16x8xf32>
    "tpu.trace_stop"() : () -> ()
    %169 = vector.extract_strided_slice %132 {offsets = [0, 0, 16], sizes = [2, 16, 8], strides = [1, 1, 1]} : vector<2x16x32xbf16> to vector<2x16x8xbf16>
    %170 = vector.extract_strided_slice %134 {offsets = [0, 0, 16], sizes = [2, 8, 8], strides = [1, 1, 1]} : vector<2x8x32xbf16> to vector<2x8x8xbf16>
    %171 = vector.extract_strided_slice %136 {offsets = [0, 0, 16], sizes = [2, 8, 8], strides = [1, 1, 1]} : vector<2x8x32xbf16> to vector<2x8x8xbf16>
    "tpu.trace_start"() <{level = 10 : i32, message = "bqd,bkd->bqk"}> : () -> ()
    %cst_76 = arith.constant dense<0.000000e+00> : vector<2x16x8xf32>
    %172 = tpu.matmul %169, %170, %cst_76 {dimension_numbers = #tpu.dot_dimension_numbers<[2], [2], [1], [1], [0, 0, 0, 1, 1, 1], [0], [0]>} : vector<2x16x8xbf16>, vector<2x8x8xbf16>, vector<2x16x8xf32> -> vector<2x16x8xf32>
    "tpu.trace_stop"() : () -> ()
    %cst_77 = arith.constant dense<0xFF800000> : vector<2x16xf32>
    %173 = vector.multi_reduction <maximumf>, %172, %cst_77 [2] : vector<2x16x8xf32> to vector<2x16xf32>
    %174 = vector.shape_cast %173 : vector<2x16xf32> to vector<2x16x1xf32>
    %175 = vector.broadcast %174 : vector<2x16x1xf32> to vector<2x16x8xf32>
    %176 = arith.subf %172, %175 : vector<2x16x8xf32>
    %177 = math.exp %176 : vector<2x16x8xf32>
    %cst_78 = arith.constant dense<0.000000e+00> : vector<2x16xf32>
    %178 = vector.multi_reduction <add>, %177, %cst_78 [2] : vector<2x16x8xf32> to vector<2x16xf32>
    %179 = vector.shape_cast %178 : vector<2x16xf32> to vector<2x16x1xf32>
    %180 = tpu.reciprocal %179 : vector<2x16x1xf32> -> vector<2x16x1xf32>
    %181 = vector.broadcast %180 : vector<2x16x1xf32> to vector<2x16x8xf32>
    %182 = arith.mulf %177, %181 : vector<2x16x8xf32>
    %183 = arith.truncf %182 : vector<2x16x8xf32> to vector<2x16x8xbf16>
    "tpu.trace_start"() <{level = 10 : i32, message = "bqk,bkd->bqd"}> : () -> ()
    %cst_79 = arith.constant dense<0.000000e+00> : vector<2x16x8xf32>
    %184 = tpu.matmul %183, %171, %cst_79 {dimension_numbers = #tpu.dot_dimension_numbers<[2], [1], [1], [2], [0, 0, 0, 1, 1, 2], [0], [0]>} : vector<2x16x8xbf16>, vector<2x8x8xbf16>, vector<2x16x8xf32> -> vector<2x16x8xf32>
    "tpu.trace_stop"() : () -> ()
    %185 = vector.extract_strided_slice %132 {offsets = [0, 0, 24], sizes = [2, 16, 8], strides = [1, 1, 1]} : vector<2x16x32xbf16> to vector<2x16x8xbf16>
    %186 = vector.extract_strided_slice %134 {offsets = [0, 0, 24], sizes = [2, 8, 8], strides = [1, 1, 1]} : vector<2x8x32xbf16> to vector<2x8x8xbf16>
    %187 = vector.extract_strided_slice %136 {offsets = [0, 0, 24], sizes = [2, 8, 8], strides = [1, 1, 1]} : vector<2x8x32xbf16> to vector<2x8x8xbf16>
    "tpu.trace_start"() <{level = 10 : i32, message = "bqd,bkd->bqk"}> : () -> ()
    %cst_80 = arith.constant dense<0.000000e+00> : vector<2x16x8xf32>
    %188 = tpu.matmul %185, %186, %cst_80 {dimension_numbers = #tpu.dot_dimension_numbers<[2], [2], [1], [1], [0, 0, 0, 1, 1, 1], [0], [0]>} : vector<2x16x8xbf16>, vector<2x8x8xbf16>, vector<2x16x8xf32> -> vector<2x16x8xf32>
    "tpu.trace_stop"() : () -> ()
    %cst_81 = arith.constant dense<0xFF800000> : vector<2x16xf32>
    %189 = vector.multi_reduction <maximumf>, %188, %cst_81 [2] : vector<2x16x8xf32> to vector<2x16xf32>
    %190 = vector.shape_cast %189 : vector<2x16xf32> to vector<2x16x1xf32>
    %191 = vector.broadcast %190 : vector<2x16x1xf32> to vector<2x16x8xf32>
    %192 = arith.subf %188, %191 : vector<2x16x8xf32>
    %193 = math.exp %192 : vector<2x16x8xf32>
    %cst_82 = arith.constant dense<0.000000e+00> : vector<2x16xf32>
    %194 = vector.multi_reduction <add>, %193, %cst_82 [2] : vector<2x16x8xf32> to vector<2x16xf32>
    %195 = vector.shape_cast %194 : vector<2x16xf32> to vector<2x16x1xf32>
    %196 = tpu.reciprocal %195 : vector<2x16x1xf32> -> vector<2x16x1xf32>
    %197 = vector.broadcast %196 : vector<2x16x1xf32> to vector<2x16x8xf32>
    %198 = arith.mulf %193, %197 : vector<2x16x8xf32>
    %199 = arith.truncf %198 : vector<2x16x8xf32> to vector<2x16x8xbf16>
    "tpu.trace_start"() <{level = 10 : i32, message = "bqk,bkd->bqd"}> : () -> ()
    %cst_83 = arith.constant dense<0.000000e+00> : vector<2x16x8xf32>
    %200 = tpu.matmul %199, %187, %cst_83 {dimension_numbers = #tpu.dot_dimension_numbers<[2], [1], [1], [2], [0, 0, 0, 1, 1, 2], [0], [0]>} : vector<2x16x8xbf16>, vector<2x8x8xbf16>, vector<2x16x8xf32> -> vector<2x16x8xf32>
    "tpu.trace_stop"() : () -> ()
    %201 = tpu.concatenate %152, %168, %184, %200 in 2 : vector<2x16x8xf32>, vector<2x16x8xf32>, vector<2x16x8xf32>, vector<2x16x8xf32> -> vector<2x16x32xf32>
    %202 = vector.shape_cast %201 : vector<2x16x32xf32> to vector<32x32xf32>
    %203 = arith.truncf %202 : vector<32x32xf32> to vector<32x32xbf16>
    %c0_84 = arith.constant 0 : index
    %c0_85 = arith.constant 0 : index
    %c0_86 = arith.constant 0 : index
    %204 = vector.load %arg17[%c0_84, %c0_85, %c0_86] : memref<1x32x32xbf16, #tpu.memory_space<vmem>>, vector<1x32x32xbf16>
    %205 = vector.shape_cast %204 : vector<1x32x32xbf16> to vector<32x32xbf16>
    %cst_87 = arith.constant dense<0.000000e+00> : vector<32x32xf32>
    %206 = tpu.matmul %203, %205, %cst_87 {dimension_numbers = #tpu.dot_dimension_numbers<[1], [0], [0], [1], [0, 0, 1, 1], [], []>} : vector<32x32xbf16>, vector<32x32xbf16>, vector<32x32xf32> -> vector<32x32xf32>
    %c0_88 = arith.constant 0 : index
    %c0_89 = arith.constant 0 : index
    %c0_90 = arith.constant 0 : index
    %207 = vector.load %arg18[%c0_88, %c0_89, %c0_90] : memref<1x1x32xf32, #tpu.memory_space<vmem>>, vector<1x1x32xf32>
    %208 = vector.shape_cast %207 : vector<1x1x32xf32> to vector<1x32xf32>
    %209 = vector.broadcast %208 : vector<1x32xf32> to vector<32x32xf32>
    %210 = arith.addf %206, %209 : vector<32x32xf32>
    %211 = arith.addf %107, %3 : vector<16x32xf32>
    %212 = vector.shape_cast %211 : vector<16x32xf32> to vector<2x8x32xf32>
    %cst_91 = arith.constant dense<0.000000e+00> : vector<2x8xf32>
    %213 = vector.multi_reduction <add>, %212, %cst_91 [2] : vector<2x8x32xf32> to vector<2x8xf32>
    %214 = vector.shape_cast %213 : vector<2x8xf32> to vector<2x8x1xf32>
    %cst_92 = arith.constant dense<0.000000e+00> : vector<2x1xf32>
    %215 = vector.multi_reduction <add>, %214, %cst_92 [1] : vector<2x8x1xf32> to vector<2x1xf32>
    %216 = vector.shape_cast %215 : vector<2x1xf32> to vector<2x1x1xf32>
    %cst_93 = arith.constant 3.906250e-03 : f32
    %217 = vector.broadcast %cst_93 : f32 to vector<2x1x1xf32>
    %218 = arith.mulf %216, %217 : vector<2x1x1xf32>
    %219 = vector.broadcast %218 : vector<2x1x1xf32> to vector<2x8x32xf32>
    %220 = arith.subf %212, %219 : vector<2x8x32xf32>
    %221 = arith.mulf %220, %220 : vector<2x8x32xf32>
    %cst_94 = arith.constant dense<0.000000e+00> : vector<2x8xf32>
    %222 = vector.multi_reduction <add>, %221, %cst_94 [2] : vector<2x8x32xf32> to vector<2x8xf32>
    %223 = vector.shape_cast %222 : vector<2x8xf32> to vector<2x8x1xf32>
    %cst_95 = arith.constant dense<0.000000e+00> : vector<2x1xf32>
    %224 = vector.multi_reduction <add>, %223, %cst_95 [1] : vector<2x8x1xf32> to vector<2x1xf32>
    %225 = vector.shape_cast %224 : vector<2x1xf32> to vector<2x1x1xf32>
    %cst_96 = arith.constant 3.906250e-03 : f32
    %226 = vector.broadcast %cst_96 : f32 to vector<2x1x1xf32>
    %227 = arith.mulf %225, %226 : vector<2x1x1xf32>
    %cst_97 = arith.constant 9.99999974E-6 : f32
    %228 = vector.broadcast %cst_97 : f32 to vector<2x1x1xf32>
    %229 = arith.addf %227, %228 : vector<2x1x1xf32>
    %230 = math.rsqrt %229 : vector<2x1x1xf32>
    %231 = vector.broadcast %230 : vector<2x1x1xf32> to vector<2x8x32xf32>
    %232 = arith.mulf %220, %231 : vector<2x8x32xf32>
    %c0_98 = arith.constant 0 : index
    %c0_99 = arith.constant 0 : index
    %c0_100 = arith.constant 0 : index
    %233 = vector.load %arg19[%c0_98, %c0_99, %c0_100] : memref<1x8x32xf32, #tpu.memory_space<vmem>>, vector<1x8x32xf32>
    %234 = vector.shape_cast %233 : vector<1x8x32xf32> to vector<8x32xf32>
    %235 = vector.shape_cast %234 : vector<8x32xf32> to vector<1x8x32xf32>
    %236 = vector.broadcast %235 : vector<1x8x32xf32> to vector<2x8x32xf32>
    %237 = arith.mulf %232, %236 : vector<2x8x32xf32>
    %c0_101 = arith.constant 0 : index
    %c0_102 = arith.constant 0 : index
    %c0_103 = arith.constant 0 : index
    %238 = vector.load %arg20[%c0_101, %c0_102, %c0_103] : memref<1x8x32xf32, #tpu.memory_space<vmem>>, vector<1x8x32xf32>
    %239 = vector.shape_cast %238 : vector<1x8x32xf32> to vector<8x32xf32>
    %240 = vector.shape_cast %239 : vector<8x32xf32> to vector<1x8x32xf32>
    %241 = vector.broadcast %240 : vector<1x8x32xf32> to vector<2x8x32xf32>
    %242 = arith.addf %237, %241 : vector<2x8x32xf32>
    %243 = vector.shape_cast %242 : vector<2x8x32xf32> to vector<16x32xf32>
    %244 = arith.addf %210, %4 : vector<32x32xf32>
    %245 = vector.shape_cast %244 : vector<32x32xf32> to vector<2x16x32xf32>
    %cst_104 = arith.constant dense<0.000000e+00> : vector<2x16xf32>
    %246 = vector.multi_reduction <add>, %245, %cst_104 [2] : vector<2x16x32xf32> to vector<2x16xf32>
    %247 = vector.shape_cast %246 : vector<2x16xf32> to vector<2x16x1xf32>
    %cst_105 = arith.constant dense<0.000000e+00> : vector<2x1xf32>
    %248 = vector.multi_reduction <add>, %247, %cst_105 [1] : vector<2x16x1xf32> to vector<2x1xf32>
    %249 = vector.shape_cast %248 : vector<2x1xf32> to vector<2x1x1xf32>
    %cst_106 = arith.constant 0.001953125 : f32
    %250 = vector.broadcast %cst_106 : f32 to vector<2x1x1xf32>
    %251 = arith.mulf %249, %250 : vector<2x1x1xf32>
    %252 = vector.broadcast %251 : vector<2x1x1xf32> to vector<2x16x32xf32>
    %253 = arith.subf %245, %252 : vector<2x16x32xf32>
    %254 = arith.mulf %253, %253 : vector<2x16x32xf32>
    %cst_107 = arith.constant dense<0.000000e+00> : vector<2x16xf32>
    %255 = vector.multi_reduction <add>, %254, %cst_107 [2] : vector<2x16x32xf32> to vector<2x16xf32>
    %256 = vector.shape_cast %255 : vector<2x16xf32> to vector<2x16x1xf32>
    %cst_108 = arith.constant dense<0.000000e+00> : vector<2x1xf32>
    %257 = vector.multi_reduction <add>, %256, %cst_108 [1] : vector<2x16x1xf32> to vector<2x1xf32>
    %258 = vector.shape_cast %257 : vector<2x1xf32> to vector<2x1x1xf32>
    %cst_109 = arith.constant 0.001953125 : f32
    %259 = vector.broadcast %cst_109 : f32 to vector<2x1x1xf32>
    %260 = arith.mulf %258, %259 : vector<2x1x1xf32>
    %cst_110 = arith.constant 9.99999974E-6 : f32
    %261 = vector.broadcast %cst_110 : f32 to vector<2x1x1xf32>
    %262 = arith.addf %260, %261 : vector<2x1x1xf32>
    %263 = math.rsqrt %262 : vector<2x1x1xf32>
    %264 = vector.broadcast %263 : vector<2x1x1xf32> to vector<2x16x32xf32>
    %265 = arith.mulf %253, %264 : vector<2x16x32xf32>
    %c0_111 = arith.constant 0 : index
    %c0_112 = arith.constant 0 : index
    %c0_113 = arith.constant 0 : index
    %266 = vector.load %arg21[%c0_111, %c0_112, %c0_113] : memref<1x16x32xf32, #tpu.memory_space<vmem>>, vector<1x16x32xf32>
    %267 = vector.shape_cast %266 : vector<1x16x32xf32> to vector<16x32xf32>
    %268 = vector.shape_cast %267 : vector<16x32xf32> to vector<1x16x32xf32>
    %269 = vector.broadcast %268 : vector<1x16x32xf32> to vector<2x16x32xf32>
    %270 = arith.mulf %265, %269 : vector<2x16x32xf32>
    %c0_114 = arith.constant 0 : index
    %c0_115 = arith.constant 0 : index
    %c0_116 = arith.constant 0 : index
    %271 = vector.load %arg22[%c0_114, %c0_115, %c0_116] : memref<1x16x32xf32, #tpu.memory_space<vmem>>, vector<1x16x32xf32>
    %272 = vector.shape_cast %271 : vector<1x16x32xf32> to vector<16x32xf32>
    %273 = vector.shape_cast %272 : vector<16x32xf32> to vector<1x16x32xf32>
    %274 = vector.broadcast %273 : vector<1x16x32xf32> to vector<2x16x32xf32>
    %275 = arith.addf %270, %274 : vector<2x16x32xf32>
    %276 = vector.shape_cast %275 : vector<2x16x32xf32> to vector<32x32xf32>
    %277 = arith.truncf %243 : vector<16x32xf32> to vector<16x32xbf16>
    %c0_117 = arith.constant 0 : index
    %c0_118 = arith.constant 0 : index
    %c0_119 = arith.constant 0 : index
    %278 = vector.load %arg23[%c0_117, %c0_118, %c0_119] : memref<1x32x128xbf16, #tpu.memory_space<vmem>>, vector<1x32x128xbf16>
    %279 = vector.shape_cast %278 : vector<1x32x128xbf16> to vector<32x128xbf16>
    %cst_120 = arith.constant dense<0.000000e+00> : vector<16x128xf32>
    %280 = tpu.matmul %277, %279, %cst_120 {dimension_numbers = #tpu.dot_dimension_numbers<[1], [0], [0], [1], [0, 0, 1, 1], [], []>} : vector<16x32xbf16>, vector<32x128xbf16>, vector<16x128xf32> -> vector<16x128xf32>
    %c0_121 = arith.constant 0 : index
    %c0_122 = arith.constant 0 : index
    %c0_123 = arith.constant 0 : index
    %281 = vector.load %arg24[%c0_121, %c0_122, %c0_123] : memref<1x1x128xf32, #tpu.memory_space<vmem>>, vector<1x1x128xf32>
    %282 = vector.shape_cast %281 : vector<1x1x128xf32> to vector<1x128xf32>
    %283 = vector.broadcast %282 : vector<1x128xf32> to vector<16x128xf32>
    %284 = arith.addf %280, %283 : vector<16x128xf32>
    %cst_124 = arith.constant 0.000000e+00 : f32
    %285 = vector.broadcast %cst_124 : f32 to vector<16x128xf32>
    %286 = arith.maximumf %284, %285 : vector<16x128xf32>
    %287 = arith.truncf %286 : vector<16x128xf32> to vector<16x128xbf16>
    %c0_125 = arith.constant 0 : index
    %c0_126 = arith.constant 0 : index
    %c0_127 = arith.constant 0 : index
    %288 = vector.load %arg25[%c0_125, %c0_126, %c0_127] : memref<1x128x32xbf16, #tpu.memory_space<vmem>>, vector<1x128x32xbf16>
    %289 = vector.shape_cast %288 : vector<1x128x32xbf16> to vector<128x32xbf16>
    %cst_128 = arith.constant dense<0.000000e+00> : vector<16x32xf32>
    %290 = tpu.matmul %287, %289, %cst_128 {dimension_numbers = #tpu.dot_dimension_numbers<[1], [0], [0], [1], [0, 0, 1, 1], [], []>} : vector<16x128xbf16>, vector<128x32xbf16>, vector<16x32xf32> -> vector<16x32xf32>
    %c0_129 = arith.constant 0 : index
    %c0_130 = arith.constant 0 : index
    %c0_131 = arith.constant 0 : index
    %291 = vector.load %arg26[%c0_129, %c0_130, %c0_131] : memref<1x1x32xf32, #tpu.memory_space<vmem>>, vector<1x1x32xf32>
    %292 = vector.shape_cast %291 : vector<1x1x32xf32> to vector<1x32xf32>
    %293 = vector.broadcast %292 : vector<1x32xf32> to vector<16x32xf32>
    %294 = arith.addf %290, %293 : vector<16x32xf32>
    %295 = arith.truncf %276 : vector<32x32xf32> to vector<32x32xbf16>
    %c0_132 = arith.constant 0 : index
    %c0_133 = arith.constant 0 : index
    %c0_134 = arith.constant 0 : index
    %296 = vector.load %arg27[%c0_132, %c0_133, %c0_134] : memref<1x32x128xbf16, #tpu.memory_space<vmem>>, vector<1x32x128xbf16>
    %297 = vector.shape_cast %296 : vector<1x32x128xbf16> to vector<32x128xbf16>
    %cst_135 = arith.constant dense<0.000000e+00> : vector<32x128xf32>
    %298 = tpu.matmul %295, %297, %cst_135 {dimension_numbers = #tpu.dot_dimension_numbers<[1], [0], [0], [1], [0, 0, 1, 1], [], []>} : vector<32x32xbf16>, vector<32x128xbf16>, vector<32x128xf32> -> vector<32x128xf32>
    %c0_136 = arith.constant 0 : index
    %c0_137 = arith.constant 0 : index
    %c0_138 = arith.constant 0 : index
    %299 = vector.load %arg28[%c0_136, %c0_137, %c0_138] : memref<1x1x128xf32, #tpu.memory_space<vmem>>, vector<1x1x128xf32>
    %300 = vector.shape_cast %299 : vector<1x1x128xf32> to vector<1x128xf32>
    %301 = vector.broadcast %300 : vector<1x128xf32> to vector<32x128xf32>
    %302 = arith.addf %298, %301 : vector<32x128xf32>
    %cst_139 = arith.constant 0.000000e+00 : f32
    %303 = vector.broadcast %cst_139 : f32 to vector<32x128xf32>
    %304 = arith.maximumf %302, %303 : vector<32x128xf32>
    %305 = arith.truncf %304 : vector<32x128xf32> to vector<32x128xbf16>
    %c0_140 = arith.constant 0 : index
    %c0_141 = arith.constant 0 : index
    %c0_142 = arith.constant 0 : index
    %306 = vector.load %arg29[%c0_140, %c0_141, %c0_142] : memref<1x128x32xbf16, #tpu.memory_space<vmem>>, vector<1x128x32xbf16>
    %307 = vector.shape_cast %306 : vector<1x128x32xbf16> to vector<128x32xbf16>
    %cst_143 = arith.constant dense<0.000000e+00> : vector<32x32xf32>
    %308 = tpu.matmul %305, %307, %cst_143 {dimension_numbers = #tpu.dot_dimension_numbers<[1], [0], [0], [1], [0, 0, 1, 1], [], []>} : vector<32x128xbf16>, vector<128x32xbf16>, vector<32x32xf32> -> vector<32x32xf32>
    %c0_144 = arith.constant 0 : index
    %c0_145 = arith.constant 0 : index
    %c0_146 = arith.constant 0 : index
    %309 = vector.load %arg30[%c0_144, %c0_145, %c0_146] : memref<1x1x32xf32, #tpu.memory_space<vmem>>, vector<1x1x32xf32>
    %310 = vector.shape_cast %309 : vector<1x1x32xf32> to vector<1x32xf32>
    %311 = vector.broadcast %310 : vector<1x32xf32> to vector<32x32xf32>
    %312 = arith.addf %308, %311 : vector<32x32xf32>
    %313 = arith.addf %294, %243 : vector<16x32xf32>
    %314 = vector.shape_cast %313 : vector<16x32xf32> to vector<2x8x32xf32>
    %cst_147 = arith.constant dense<0.000000e+00> : vector<2x8xf32>
    %315 = vector.multi_reduction <add>, %314, %cst_147 [2] : vector<2x8x32xf32> to vector<2x8xf32>
    %316 = vector.shape_cast %315 : vector<2x8xf32> to vector<2x8x1xf32>
    %cst_148 = arith.constant dense<0.000000e+00> : vector<2x1xf32>
    %317 = vector.multi_reduction <add>, %316, %cst_148 [1] : vector<2x8x1xf32> to vector<2x1xf32>
    %318 = vector.shape_cast %317 : vector<2x1xf32> to vector<2x1x1xf32>
    %cst_149 = arith.constant 3.906250e-03 : f32
    %319 = vector.broadcast %cst_149 : f32 to vector<2x1x1xf32>
    %320 = arith.mulf %318, %319 : vector<2x1x1xf32>
    %321 = vector.broadcast %320 : vector<2x1x1xf32> to vector<2x8x32xf32>
    %322 = arith.subf %314, %321 : vector<2x8x32xf32>
    %323 = arith.mulf %322, %322 : vector<2x8x32xf32>
    %cst_150 = arith.constant dense<0.000000e+00> : vector<2x8xf32>
    %324 = vector.multi_reduction <add>, %323, %cst_150 [2] : vector<2x8x32xf32> to vector<2x8xf32>
    %325 = vector.shape_cast %324 : vector<2x8xf32> to vector<2x8x1xf32>
    %cst_151 = arith.constant dense<0.000000e+00> : vector<2x1xf32>
    %326 = vector.multi_reduction <add>, %325, %cst_151 [1] : vector<2x8x1xf32> to vector<2x1xf32>
    %327 = vector.shape_cast %326 : vector<2x1xf32> to vector<2x1x1xf32>
    %cst_152 = arith.constant 3.906250e-03 : f32
    %328 = vector.broadcast %cst_152 : f32 to vector<2x1x1xf32>
    %329 = arith.mulf %327, %328 : vector<2x1x1xf32>
    %cst_153 = arith.constant 9.99999974E-6 : f32
    %330 = vector.broadcast %cst_153 : f32 to vector<2x1x1xf32>
    %331 = arith.addf %329, %330 : vector<2x1x1xf32>
    %332 = math.rsqrt %331 : vector<2x1x1xf32>
    %333 = vector.broadcast %332 : vector<2x1x1xf32> to vector<2x8x32xf32>
    %334 = arith.mulf %322, %333 : vector<2x8x32xf32>
    %c0_154 = arith.constant 0 : index
    %c0_155 = arith.constant 0 : index
    %c0_156 = arith.constant 0 : index
    %335 = vector.load %arg31[%c0_154, %c0_155, %c0_156] : memref<1x8x32xf32, #tpu.memory_space<vmem>>, vector<1x8x32xf32>
    %336 = vector.shape_cast %335 : vector<1x8x32xf32> to vector<8x32xf32>
    %337 = vector.shape_cast %336 : vector<8x32xf32> to vector<1x8x32xf32>
    %338 = vector.broadcast %337 : vector<1x8x32xf32> to vector<2x8x32xf32>
    %339 = arith.mulf %334, %338 : vector<2x8x32xf32>
    %c0_157 = arith.constant 0 : index
    %c0_158 = arith.constant 0 : index
    %c0_159 = arith.constant 0 : index
    %340 = vector.load %arg32[%c0_157, %c0_158, %c0_159] : memref<1x8x32xf32, #tpu.memory_space<vmem>>, vector<1x8x32xf32>
    %341 = vector.shape_cast %340 : vector<1x8x32xf32> to vector<8x32xf32>
    %342 = vector.shape_cast %341 : vector<8x32xf32> to vector<1x8x32xf32>
    %343 = vector.broadcast %342 : vector<1x8x32xf32> to vector<2x8x32xf32>
    %344 = arith.addf %339, %343 : vector<2x8x32xf32>
    %345 = vector.shape_cast %344 : vector<2x8x32xf32> to vector<16x32xf32>
    %c0_160 = arith.constant 0 : index
    %c0_161 = arith.constant 0 : index
    %346 = vector.load %arg35[%c0_160, %c0_161] : memref<16x32xf32, #tpu.memory_space<vmem>>, vector<16x32xf32>
    tpu.vector_store %arg35[%c0_160, %c0_161], %345 {strides = array<i32>} : memref<16x32xf32, #tpu.memory_space<vmem>>, vector<16x32xf32>,
    %347 = arith.addf %312, %276 : vector<32x32xf32>
    %348 = vector.shape_cast %347 : vector<32x32xf32> to vector<2x16x32xf32>
    %cst_162 = arith.constant dense<0.000000e+00> : vector<2x16xf32>
    %349 = vector.multi_reduction <add>, %348, %cst_162 [2] : vector<2x16x32xf32> to vector<2x16xf32>
    %350 = vector.shape_cast %349 : vector<2x16xf32> to vector<2x16x1xf32>
    %cst_163 = arith.constant dense<0.000000e+00> : vector<2x1xf32>
    %351 = vector.multi_reduction <add>, %350, %cst_163 [1] : vector<2x16x1xf32> to vector<2x1xf32>
    %352 = vector.shape_cast %351 : vector<2x1xf32> to vector<2x1x1xf32>
    %cst_164 = arith.constant 0.001953125 : f32
    %353 = vector.broadcast %cst_164 : f32 to vector<2x1x1xf32>
    %354 = arith.mulf %352, %353 : vector<2x1x1xf32>
    %355 = vector.broadcast %354 : vector<2x1x1xf32> to vector<2x16x32xf32>
    %356 = arith.subf %348, %355 : vector<2x16x32xf32>
    %357 = arith.mulf %356, %356 : vector<2x16x32xf32>
    %cst_165 = arith.constant dense<0.000000e+00> : vector<2x16xf32>
    %358 = vector.multi_reduction <add>, %357, %cst_165 [2] : vector<2x16x32xf32> to vector<2x16xf32>
    %359 = vector.shape_cast %358 : vector<2x16xf32> to vector<2x16x1xf32>
    %cst_166 = arith.constant dense<0.000000e+00> : vector<2x1xf32>
    %360 = vector.multi_reduction <add>, %359, %cst_166 [1] : vector<2x16x1xf32> to vector<2x1xf32>
    %361 = vector.shape_cast %360 : vector<2x1xf32> to vector<2x1x1xf32>
    %cst_167 = arith.constant 0.001953125 : f32
    %362 = vector.broadcast %cst_167 : f32 to vector<2x1x1xf32>
    %363 = arith.mulf %361, %362 : vector<2x1x1xf32>
    %cst_168 = arith.constant 9.99999974E-6 : f32
    %364 = vector.broadcast %cst_168 : f32 to vector<2x1x1xf32>
    %365 = arith.addf %363, %364 : vector<2x1x1xf32>
    %366 = math.rsqrt %365 : vector<2x1x1xf32>
    %367 = vector.broadcast %366 : vector<2x1x1xf32> to vector<2x16x32xf32>
    %368 = arith.mulf %356, %367 : vector<2x16x32xf32>
    %c0_169 = arith.constant 0 : index
    %c0_170 = arith.constant 0 : index
    %c0_171 = arith.constant 0 : index
    %369 = vector.load %arg33[%c0_169, %c0_170, %c0_171] : memref<1x16x32xf32, #tpu.memory_space<vmem>>, vector<1x16x32xf32>
    %370 = vector.shape_cast %369 : vector<1x16x32xf32> to vector<16x32xf32>
    %371 = vector.shape_cast %370 : vector<16x32xf32> to vector<1x16x32xf32>
    %372 = vector.broadcast %371 : vector<1x16x32xf32> to vector<2x16x32xf32>
    %373 = arith.mulf %368, %372 : vector<2x16x32xf32>
    %c0_172 = arith.constant 0 : index
    %c0_173 = arith.constant 0 : index
    %c0_174 = arith.constant 0 : index
    %374 = vector.load %arg34[%c0_172, %c0_173, %c0_174] : memref<1x16x32xf32, #tpu.memory_space<vmem>>, vector<1x16x32xf32>
    %375 = vector.shape_cast %374 : vector<1x16x32xf32> to vector<16x32xf32>
    %376 = vector.shape_cast %375 : vector<16x32xf32> to vector<1x16x32xf32>
    %377 = vector.broadcast %376 : vector<1x16x32xf32> to vector<2x16x32xf32>
    %378 = arith.addf %373, %377 : vector<2x16x32xf32>
    %379 = vector.shape_cast %378 : vector<2x16x32xf32> to vector<32x32xf32>
    %c0_175 = arith.constant 0 : index
    %c0_176 = arith.constant 0 : index
    %380 = vector.load %arg36[%c0_175, %c0_176] : memref<32x32xf32, #tpu.memory_space<vmem>>, vector<32x32xf32>
    tpu.vector_store %arg36[%c0_175, %c0_176], %379 {strides = array<i32>} : memref<32x32xf32, #tpu.memory_space<vmem>>, vector<32x32xf32>,
    return
  }
  func.func @transform_0(%arg0: i32) -> (i32, i32) {
    %c0_i32 = arith.constant 0 : i32
    %c0_i32_0 = arith.constant 0 : i32
    %c0_i32_1 = arith.constant 0 : i32
    return %c0_i32, %c0_i32_0 : i32, i32
  }
  func.func @transform_1(%arg0: i32) -> (i32, i32) {
    %c0_i32 = arith.constant 0 : i32
    %c0_i32_0 = arith.constant 0 : i32
    %c0_i32_1 = arith.constant 0 : i32
    return %c0_i32, %c0_i32_0 : i32, i32
  }
  func.func @transform_2(%arg0: i32) -> (i32, i32, i32) {
    %c0_i32 = arith.constant 0 : i32
    %c0_i32_0 = arith.constant 0 : i32
    %c0_i32_1 = arith.constant 0 : i32
    return %arg0, %c0_i32, %c0_i32_0 : i32, i32, i32
  }
  func.func @transform_3(%arg0: i32) -> (i32, i32, i32) {
    %c0_i32 = arith.constant 0 : i32
    %c0_i32_0 = arith.constant 0 : i32
    %c0_i32_1 = arith.constant 0 : i32
    return %arg0, %c0_i32, %c0_i32_0 : i32, i32, i32
  }
  func.func @transform_4(%arg0: i32) -> (i32, i32, i32) {
    %c0_i32 = arith.constant 0 : i32
    %c0_i32_0 = arith.constant 0 : i32
    %c0_i32_1 = arith.constant 0 : i32
    return %arg0, %c0_i32, %c0_i32_0 : i32, i32, i32
  }
  func.func @transform_5(%arg0: i32) -> (i32, i32, i32) {
    %c0_i32 = arith.constant 0 : i32
    %c0_i32_0 = arith.constant 0 : i32
    %c0_i32_1 = arith.constant 0 : i32
    return %arg0, %c0_i32, %c0_i32_0 : i32, i32, i32
  }
  func.func @transform_6(%arg0: i32) -> (i32, i32, i32) {
    %c0_i32 = arith.constant 0 : i32
    %c0_i32_0 = arith.constant 0 : i32
    %c0_i32_1 = arith.constant 0 : i32
    return %arg0, %c0_i32, %c0_i32_0 : i32, i32, i32
  }
  func.func @transform_7(%arg0: i32) -> (i32, i32, i32) {
    %c0_i32 = arith.constant 0 : i32
    %c0_i32_0 = arith.constant 0 : i32
    %c0_i32_1 = arith.constant 0 : i32
    return %arg0, %c0_i32, %c0_i32_0 : i32, i32, i32
  }
  func.func @transform_8(%arg0: i32) -> (i32, i32, i32) {
    %c0_i32 = arith.constant 0 : i32
    %c0_i32_0 = arith.constant 0 : i32
    %c0_i32_1 = arith.constant 0 : i32
    return %arg0, %c0_i32, %c0_i32_0 : i32, i32, i32
  }
  func.func @transform_9(%arg0: i32) -> (i32, i32, i32) {
    %c0_i32 = arith.constant 0 : i32
    %c0_i32_0 = arith.constant 0 : i32
    %c0_i32_1 = arith.constant 0 : i32
    return %arg0, %c0_i32, %c0_i32_0 : i32, i32, i32
  }
  func.func @transform_10(%arg0: i32) -> (i32, i32, i32) {
    %c0_i32 = arith.constant 0 : i32
    %c0_i32_0 = arith.constant 0 : i32
    %c0_i32_1 = arith.constant 0 : i32
    return %arg0, %c0_i32, %c0_i32_0 : i32, i32, i32
  }
  func.func @transform_11(%arg0: i32) -> (i32, i32, i32) {
    %c0_i32 = arith.constant 0 : i32
    %c0_i32_0 = arith.constant 0 : i32
    %c0_i32_1 = arith.constant 0 : i32
    return %arg0, %c0_i32, %c0_i32_0 : i32, i32, i32
  }
  func.func @transform_12(%arg0: i32) -> (i32, i32, i32) {
    %c0_i32 = arith.constant 0 : i32
    %c0_i32_0 = arith.constant 0 : i32
    %c0_i32_1 = arith.constant 0 : i32
    return %arg0, %c0_i32, %c0_i32_0 : i32, i32, i32
  }
  func.func @transform_13(%arg0: i32) -> (i32, i32, i32) {
    %c0_i32 = arith.constant 0 : i32
    %c0_i32_0 = arith.constant 0 : i32
    %c0_i32_1 = arith.constant 0 : i32
    return %arg0, %c0_i32, %c0_i32_0 : i32, i32, i32
  }
  func.func @transform_14(%arg0: i32) -> (i32, i32, i32) {
    %c0_i32 = arith.constant 0 : i32
    %c0_i32_0 = arith.constant 0 : i32
    %c0_i32_1 = arith.constant 0 : i32
    return %arg0, %c0_i32, %c0_i32_0 : i32, i32, i32
  }
  func.func @transform_15(%arg0: i32) -> (i32, i32, i32) {
    %c0_i32 = arith.constant 0 : i32
    %c0_i32_0 = arith.constant 0 : i32
    %c0_i32_1 = arith.constant 0 : i32
    return %arg0, %c0_i32, %c0_i32_0 : i32, i32, i32
  }
  func.func @transform_16(%arg0: i32) -> (i32, i32, i32) {
    %c0_i32 = arith.constant 0 : i32
    %c0_i32_0 = arith.constant 0 : i32
    %c0_i32_1 = arith.constant 0 : i32
    return %arg0, %c0_i32, %c0_i32_0 : i32, i32, i32
  }
  func.func @transform_17(%arg0: i32) -> (i32, i32, i32) {
    %c0_i32 = arith.constant 0 : i32
    %c0_i32_0 = arith.constant 0 : i32
    %c0_i32_1 = arith.constant 0 : i32
    return %arg0, %c0_i32, %c0_i32_0 : i32, i32, i32
  }
  func.func @transform_18(%arg0: i32) -> (i32, i32, i32) {
    %c0_i32 = arith.constant 0 : i32
    %c0_i32_0 = arith.constant 0 : i32
    %c0_i32_1 = arith.constant 0 : i32
    return %arg0, %c0_i32, %c0_i32_0 : i32, i32, i32
  }
  func.func @transform_19(%arg0: i32) -> (i32, i32, i32) {
    %c0_i32 = arith.constant 0 : i32
    %c0_i32_0 = arith.constant 0 : i32
    %c0_i32_1 = arith.constant 0 : i32
    return %arg0, %c0_i32, %c0_i32_0 : i32, i32, i32
  }
  func.func @transform_20(%arg0: i32) -> (i32, i32, i32) {
    %c0_i32 = arith.constant 0 : i32
    %c0_i32_0 = arith.constant 0 : i32
    %c0_i32_1 = arith.constant 0 : i32
    return %arg0, %c0_i32, %c0_i32_0 : i32, i32, i32
  }
  func.func @transform_21(%arg0: i32) -> (i32, i32, i32) {
    %c0_i32 = arith.constant 0 : i32
    %c0_i32_0 = arith.constant 0 : i32
    %c0_i32_1 = arith.constant 0 : i32
    return %arg0, %c0_i32, %c0_i32_0 : i32, i32, i32
  }
  func.func @transform_22(%arg0: i32) -> (i32, i32, i32) {
    %c0_i32 = arith.constant 0 : i32
    %c0_i32_0 = arith.constant 0 : i32
    %c0_i32_1 = arith.constant 0 : i32
    return %arg0, %c0_i32, %c0_i32_0 : i32, i32, i32
  }
  func.func @transform_23(%arg0: i32) -> (i32, i32, i32) {
    %c0_i32 = arith.constant 0 : i32
    %c0_i32_0 = arith.constant 0 : i32
    %c0_i32_1 = arith.constant 0 : i32
    return %arg0, %c0_i32, %c0_i32_0 : i32, i32, i32
  }
  func.func @transform_24(%arg0: i32) -> (i32, i32, i32) {
    %c0_i32 = arith.constant 0 : i32
    %c0_i32_0 = arith.constant 0 : i32
    %c0_i32_1 = arith.constant 0 : i32
    return %arg0, %c0_i32, %c0_i32_0 : i32, i32, i32
  }
  func.func @transform_25(%arg0: i32) -> (i32, i32, i32) {
    %c0_i32 = arith.constant 0 : i32
    %c0_i32_0 = arith.constant 0 : i32
    %c0_i32_1 = arith.constant 0 : i32
    return %arg0, %c0_i32, %c0_i32_0 : i32, i32, i32
  }
  func.func @transform_26(%arg0: i32) -> (i32, i32, i32) {
    %c0_i32 = arith.constant 0 : i32
    %c0_i32_0 = arith.constant 0 : i32
    %c0_i32_1 = arith.constant 0 : i32
    return %arg0, %c0_i32, %c0_i32_0 : i32, i32, i32
  }
  func.func @transform_27(%arg0: i32) -> (i32, i32, i32) {
    %c0_i32 = arith.constant 0 : i32
    %c0_i32_0 = arith.constant 0 : i32
    %c0_i32_1 = arith.constant 0 : i32
    return %arg0, %c0_i32, %c0_i32_0 : i32, i32, i32
  }
  func.func @transform_28(%arg0: i32) -> (i32, i32, i32) {
    %c0_i32 = arith.constant 0 : i32
    %c0_i32_0 = arith.constant 0 : i32
    %c0_i32_1 = arith.constant 0 : i32
    return %arg0, %c0_i32, %c0_i32_0 : i32, i32, i32
  }
  func.func @transform_29(%arg0: i32) -> (i32, i32, i32) {
    %c0_i32 = arith.constant 0 : i32
    %c0_i32_0 = arith.constant 0 : i32
    %c0_i32_1 = arith.constant 0 : i32
    return %arg0, %c0_i32, %c0_i32_0 : i32, i32, i32
  }
  func.func @transform_30(%arg0: i32) -> (i32, i32, i32) {
    %c0_i32 = arith.constant 0 : i32
    %c0_i32_0 = arith.constant 0 : i32
    %c0_i32_1 = arith.constant 0 : i32
    return %arg0, %c0_i32, %c0_i32_0 : i32, i32, i32
  }
  func.func @transform_31(%arg0: i32) -> (i32, i32, i32) {
    %c0_i32 = arith.constant 0 : i32
    %c0_i32_0 = arith.constant 0 : i32
    %c0_i32_1 = arith.constant 0 : i32
    return %arg0, %c0_i32, %c0_i32_0 : i32, i32, i32
  }
  func.func @transform_32(%arg0: i32) -> (i32, i32, i32) {
    %c0_i32 = arith.constant 0 : i32
    %c0_i32_0 = arith.constant 0 : i32
    %c0_i32_1 = arith.constant 0 : i32
    return %arg0, %c0_i32, %c0_i32_0 : i32, i32, i32
  }
  func.func @transform_33(%arg0: i32) -> (i32, i32, i32) {
    %c0_i32 = arith.constant 0 : i32
    %c0_i32_0 = arith.constant 0 : i32
    %c0_i32_1 = arith.constant 0 : i32
    return %arg0, %c0_i32, %c0_i32_0 : i32, i32, i32
  }
  func.func @transform_34(%arg0: i32) -> (i32, i32) {
    %c0_i32 = arith.constant 0 : i32
    %c0_i32_0 = arith.constant 0 : i32
    %c0_i32_1 = arith.constant 0 : i32
    return %c0_i32, %c0_i32_0 : i32, i32
  }
  func.func @transform_35(%arg0: i32) -> (i32, i32) {
    %c0_i32 = arith.constant 0 : i32
    %c0_i32_0 = arith.constant 0 : i32
    %c0_i32_1 = arith.constant 0 : i32
    return %c0_i32, %c0_i32_0 : i32, i32
  }
}

</mosaic_0001>

<llo_original>
// kernel: tpu_custom_call.1
$region0: #{tpu_custom_call.1}
  #allocation0 [shape = 'u32[]', space=smem, size = 0x4, offset = 0x4, fixed_abs, tag = 'smem constant byte address 0x4 - core index']
  #allocation1 [shape = 'u32[72,128]{1,0:T(1,128)}', space=vmem, size = 0x9000, scoped, tag = 'internal scratch']
  %s0 = inlined_call_operand.smem [shape: u32[36], index: -1, kind: input, shape index: {}]
  %s1 = sld [smem:[%s0]]
  %s2 = scalar_lea.smem %s0, 1
  %s3 = sld [smem:[%s2]]
  %s4 = scalar_lea.smem %s0, 2
  %s5 = sld [smem:[%s4]]
  %s6 = scalar_lea.smem %s0, 3
  %s7 = sld [smem:[%s6]]
  %s8 = scalar_lea.smem %s0, 4
  %s9 = sld [smem:[%s8]]
  %s10 = scalar_lea.smem %s0, 5
  %s11 = sld [smem:[%s10]]
  %s12 = scalar_lea.smem %s0, 6
  %s13 = sld [smem:[%s12]]
  %s14 = scalar_lea.smem %s0, 7
  %s15 = sld [smem:[%s14]]
  %s16 = scalar_lea.smem %s0, 8
  %s17 = sld [smem:[%s16]]
  %s18 = scalar_lea.smem %s0, 9
  %s19 = sld [smem:[%s18]]
  %s20 = scalar_lea.smem %s0, 10
  %s21 = sld [smem:[%s20]]
  %s22 = scalar_lea.smem %s0, 11
  %s23 = sld [smem:[%s22]]
  %s24 = scalar_lea.smem %s0, 12
  %s25 = sld [smem:[%s24]]
  %s26 = scalar_lea.smem %s0, 13
  %s27 = sld [smem:[%s26]]
  %s28 = scalar_lea.smem %s0, 14
  %s29 = sld [smem:[%s28]]
  %s30 = scalar_lea.smem %s0, 15
  %s31 = sld [smem:[%s30]]
  %s32 = scalar_lea.smem %s0, 16
  %s33 = sld [smem:[%s32]]
  %s34 = scalar_lea.smem %s0, 17
  %s35 = sld [smem:[%s34]]
  %s36 = scalar_lea.smem %s0, 18
  %s37 = sld [smem:[%s36]]
  %s38 = scalar_lea.smem %s0, 19
  %s39 = sld [smem:[%s38]]
  %s40 = scalar_lea.smem %s0, 20
  %s41 = sld [smem:[%s40]]
  %s42 = scalar_lea.smem %s0, 21
  %s43 = sld [smem:[%s42]]
  %s44 = scalar_lea.smem %s0, 22
  %s45 = sld [smem:[%s44]]
  %s46 = scalar_lea.smem %s0, 23
  %s47 = sld [smem:[%s46]]
  %s48 = scalar_lea.smem %s0, 24
  %s49 = sld [smem:[%s48]]
  %s50 = scalar_lea.smem %s0, 25
  %s51 = sld [smem:[%s50]]
  %s52 = scalar_lea.smem %s0, 26
  %s53 = sld [smem:[%s52]]
  %s54 = scalar_lea.smem %s0, 27
  %s55 = sld [smem:[%s54]]
  %s56 = scalar_lea.smem %s0, 28
  %s57 = sld [smem:[%s56]]
  %s58 = scalar_lea.smem %s0, 29
  %s59 = sld [smem:[%s58]]
  %s60 = scalar_lea.smem %s0, 30
  %s61 = sld [smem:[%s60]]
  %s62 = scalar_lea.smem %s0, 31
  %s63 = sld [smem:[%s62]]
  %s64 = scalar_lea.smem %s0, 32
  %s65 = sld [smem:[%s64]]
  %s66 = scalar_lea.smem %s0, 33
  %s67 = sld [smem:[%s66]]
  %s68 = scalar_lea.smem %s0, 34
  %s69 = sld [smem:[%s68]]
  %s70 = scalar_lea.smem %s0, 35
  %s71 = sld [smem:[%s70]]
  %72 = xla_tuple %s69, %s71
  %s73 = sld [smem:[#allocation0]]
  $region253: #{tpu_custom_call.1} parent=0
    _
  %s75 = ssub.s32 1, %s73
  %s76 = scalar_select 0, %s75, %s73
  $region1: #{tpu_custom_call.1} parent=0
    #allocation2 [shape = 'u8[8192]{0}', space=vmem, size = 0x2000, scoped, tag = 'input window, operand 0, single buffered']
    #allocation3 [shape = 's32[2]{0}', space=sflag, size = 0x8, scoped, tag = 'scoped memory for tpu_custom_call.1']
    #allocation4 [shape = 's32[2]{0}', space=sflag, size = 0x8, scoped, tag = 'scoped memory for tpu_custom_call.1']
    #allocation5 [shape = 'u8[1024]{0}', space=vmem, size = 0x400, scoped, tag = 'input window, operand 6']
    #allocation6 [shape = 's32[2]{0}', space=sflag, size = 0x8, scoped, tag = 'scoped memory for tpu_custom_call.1']
    #allocation7 [shape = 'u8[1024]{0}', space=vmem, size = 0x400, scoped, tag = 'input window, operand 7']
    #allocation8 [shape = 'u8[1024]{0}', space=vmem, size = 0x400, scoped, tag = 'input window, operand 9']
    #allocation9 [shape = 's32[2]{0}', space=sflag, size = 0x8, scoped, tag = 'scoped memory for tpu_custom_call.1']
    #allocation10 [shape = 'u8[1024]{0}', space=vmem, size = 0x400, scoped, tag = 'input window, operand 13']
    #allocation11 [shape = 'u8[1024]{0}', space=vmem, size = 0x400, scoped, tag = 'input window, operand 14']
    #allocation12 [shape = 's32[2]{0}', space=sflag, size = 0x8, scoped, tag = 'scoped memory for tpu_custom_call.1']
    #allocation13 [shape = 'u8[1024]{0}', space=vmem, size = 0x400, scoped, tag = 'input window, operand 15']
    #allocation14 [shape = 'u8[1024]{0}', space=vmem, size = 0x400, scoped, tag = 'input window, operand 17']
    #allocation15 [shape = 's32[2]{0}', space=sflag, size = 0x8, scoped, tag = 'scoped memory for tpu_custom_call.1']
    #allocation16 [shape = 'u8[8192]{0}', space=vmem, size = 0x2000, scoped, tag = 'input window, operand 18']
    #allocation17 [shape = 'u8[8192]{0}', space=vmem, size = 0x2000, scoped, tag = 'input window, operand 19']
    #allocation18 [shape = 's32[2]{0}', space=sflag, size = 0x8, scoped, tag = 'scoped memory for tpu_custom_call.1']
    #allocation19 [shape = 'u8[16384]{0}', space=vmem, size = 0x4000, scoped, tag = 'input window, operand 20']
    #allocation20 [shape = 'u8[16384]{0}', space=vmem, size = 0x4000, scoped, tag = 'input window, operand 21']
    #allocation21 [shape = 's32[2]{0}', space=sflag, size = 0x8, scoped, tag = 'scoped memory for tpu_custom_call.1']
    #allocation22 [shape = 'u8[16384]{0}', space=vmem, size = 0x4000, scoped, tag = 'input window, operand 22']
    #allocation23 [shape = 'u8[1024]{0}', space=vmem, size = 0x400, scoped, tag = 'input window, operand 23']
    #allocation24 [shape = 's32[2]{0}', space=sflag, size = 0x8, scoped, tag = 'scoped memory for tpu_custom_call.1']
    #allocation25 [shape = 'u8[16384]{0}', space=vmem, size = 0x4000, scoped, tag = 'input window, operand 26']
    #allocation26 [shape = 'u8[8192]{0}', space=vmem, size = 0x2000, scoped, tag = 'input window, operand 31']
    #allocation27 [shape = 's32[2]{0}', space=sflag, size = 0x8, scoped, tag = 'scoped memory for tpu_custom_call.1']
    #allocation28 [shape = 'u8[16384]{0}', space=vmem, size = 0x4000, scoped, tag = 'input window, operand 32']
    #allocation29 [shape = 'u8[16384]{0}', space=vmem, size = 0x4000, scoped, tag = 'input window, operand 33']
    #allocation30 [shape = 's32[2]{0}', space=sflag, size = 0x8, scoped, tag = 'scoped memory for tpu_custom_call.1']
    #allocation31 [shape = 'u8[8192]{0}', space=vmem, size = 0x2000, scoped, tag = 'output window, operand 0, single buffered']
    #allocation32 [shape = 'u8[16384]{0}', space=vmem, size = 0x4000, scoped, tag = 'output window, operand 1, single buffered']
    #allocation33 [shape = 's32[1]{0}', space=sflag, size = 0x4, scoped, tag = 'scoped memory for tpu_custom_call.1']
    %77 = vsyncpa [#allocation3], 0
    %78 = vsyncpa [#allocation6], 0
    %s79 = scalar_lea.sflag [#allocation6], 1
    %80 = vsyncpa %s79, 0
    %81 = vsyncpa [#allocation9], 0
    %s82 = scalar_lea.sflag [#allocation9], 1
    %83 = vsyncpa %s82, 0
    %84 = vsyncpa [#allocation12], 0
    %s85 = scalar_lea.sflag [#allocation12], 1
    %86 = vsyncpa %s85, 0
    %87 = vsyncpa [#allocation15], 0
    %s88 = scalar_lea.sflag [#allocation15], 1
    %89 = vsyncpa %s88, 0
    %90 = vsyncpa [#allocation18], 0
    %s91 = scalar_lea.sflag [#allocation18], 1
    %92 = vsyncpa %s91, 0
    %93 = vsyncpa [#allocation21], 0
    %s94 = scalar_lea.sflag [#allocation21], 1
    %95 = vsyncpa %s94, 0
    %96 = vsyncpa [#allocation24], 0
    %s97 = scalar_lea.sflag [#allocation24], 1
    %98 = vsyncpa %s97, 0
    %99 = vsyncpa [#allocation27], 0
    %s100 = scalar_lea.sflag [#allocation27], 1
    %101 = vsyncpa %s100, 0
    %102 = vsyncpa [#allocation30], 0
    %s103 = scalar_lea.sflag [#allocation30], 1
    %104 = vsyncpa %s103, 0
    %105 = vsyncpa [#allocation4], 0
    %106 = vsyncpa [#allocation33], 0
    loop: start=0, step=1, limit=4
    $region2: #{tpu_custom_call.1} parent=1 // loop_pre_header
      _
    $region3: #{tpu_custom_call.1} parent=1 // loop_header
      %s108 = sphi 0, %s112
      %p109 = scmp.ge.s32.totalorder %s108, 4
      %s116 = sphi 0, %s116
      %s118 = sphi 0, %s116
      %s119 = sphi 0, %s118
      %s133 = sphi 0, %s119
      %s137 = sphi 0, %s137
      %s139 = sphi 0, %s137
      %s140 = sphi 0, %s139
      %s154 = sphi 0, %s140
      %s160 = sphi 0, %s162
      %s163 = sphi 0, %s160
      %s164 = sphi 0, %s163
      %s180 = sphi 0, %s164
      %s186 = sphi 0, %s188
      %s189 = sphi 0, %s186
      %s190 = sphi 0, %s189
      %s206 = sphi 0, %s190
      %s212 = sphi 0, %s214
      %s215 = sphi 0, %s212
      %s216 = sphi 0, %s215
      %s232 = sphi 0, %s216
      %s238 = sphi 0, %s240
      %s241 = sphi 0, %s238
      %s242 = sphi 0, %s241
      %s258 = sphi 0, %s242
      %s264 = sphi 0, %s266
      %s267 = sphi 0, %s264
      %s268 = sphi 0, %s267
      %s284 = sphi 0, %s268
      %s290 = sphi 0, %s292
      %s293 = sphi 0, %s290
      %s294 = sphi 0, %s293
      %s310 = sphi 0, %s294
      %s316 = sphi 0, %s318
      %s319 = sphi 0, %s316
      %s320 = sphi 0, %s319
      %s336 = sphi 0, %s320
      %s342 = sphi 0, %s344
      %s345 = sphi 0, %s342
      %s346 = sphi 0, %s345
      %s362 = sphi 0, %s346
      %s368 = sphi 0, %s370
      %s371 = sphi 0, %s368
      %s372 = sphi 0, %s371
      %s388 = sphi 0, %s372
      %s394 = sphi 0, %s396
      %s397 = sphi 0, %s394
      %s398 = sphi 0, %s397
      %s414 = sphi 0, %s398
      %s420 = sphi 0, %s422
      %s423 = sphi 0, %s420
      %s424 = sphi 0, %s423
      %s440 = sphi 0, %s424
      %s446 = sphi 0, %s448
      %s449 = sphi 0, %s446
      %s450 = sphi 0, %s449
      %s466 = sphi 0, %s450
      %s472 = sphi 0, %s474
      %s475 = sphi 0, %s472
      %s476 = sphi 0, %s475
      %s492 = sphi 0, %s476
      %s498 = sphi 0, %s500
      %s501 = sphi 0, %s498
      %s502 = sphi 0, %s501
      %s518 = sphi 0, %s502
      %s524 = sphi 0, %s526
      %s527 = sphi 0, %s524
      %s528 = sphi 0, %s527
      %s544 = sphi 0, %s528
      %s550 = sphi 0, %s552
      %s553 = sphi 0, %s550
      %s554 = sphi 0, %s553
      %s570 = sphi 0, %s554
      %s576 = sphi 0, %s578
      %s579 = sphi 0, %s576
      %s580 = sphi 0, %s579
      %s596 = sphi 0, %s580
      %s602 = sphi 0, %s604
      %s605 = sphi 0, %s602
      %s606 = sphi 0, %s605
      %s622 = sphi 0, %s606
      %s628 = sphi 0, %s630
      %s631 = sphi 0, %s628
      %s632 = sphi 0, %s631
      %s648 = sphi 0, %s632
      %s654 = sphi 0, %s656
      %s657 = sphi 0, %s654
      %s658 = sphi 0, %s657
      %s674 = sphi 0, %s658
      %s680 = sphi 0, %s682
      %s683 = sphi 0, %s680
      %s684 = sphi 0, %s683
      %s700 = sphi 0, %s684
      %s706 = sphi 0, %s708
      %s709 = sphi 0, %s706
      %s710 = sphi 0, %s709
      %s726 = sphi 0, %s710
      %s732 = sphi 0, %s734
      %s735 = sphi 0, %s732
      %s736 = sphi 0, %s735
      %s752 = sphi 0, %s736
      %s758 = sphi 0, %s760
      %s761 = sphi 0, %s758
      %s762 = sphi 0, %s761
      %s778 = sphi 0, %s762
      %s784 = sphi 0, %s786
      %s787 = sphi 0, %s784
      %s788 = sphi 0, %s787
      %s804 = sphi 0, %s788
      %s810 = sphi 0, %s812
      %s813 = sphi 0, %s810
      %s814 = sphi 0, %s813
      %s830 = sphi 0, %s814
      %s836 = sphi 0, %s838
      %s839 = sphi 0, %s836
      %s840 = sphi 0, %s839
      %s856 = sphi 0, %s840
      %s862 = sphi 0, %s864
      %s865 = sphi 0, %s862
      %s866 = sphi 0, %s865
      %s882 = sphi 0, %s866
      %s888 = sphi 0, %s890
      %s891 = sphi 0, %s888
      %s892 = sphi 0, %s891
      %s908 = sphi 0, %s892
      %s914 = sphi 0, %s916
      %s917 = sphi 0, %s914
      %s918 = sphi 0, %s917
      %s934 = sphi 0, %s918
      %s940 = sphi 0, %s942
      %s943 = sphi 0, %s940
      %s944 = sphi 0, %s943
      %s960 = sphi 0, %s944
      %s966 = sphi 0, %s968
      %s969 = sphi 0, %s966
      %s970 = sphi 0, %s969
      %s986 = sphi 0, %s970
      %s990 = sphi 0, %s990
      %s992 = sphi 0, %s990
      %s993 = sphi 0, %s992
      %s1007 = sphi 0, %s993
      %s1011 = sphi 0, %s1011
      %s1013 = sphi 0, %s1011
      %s1014 = sphi 0, %s1013
      %s1028 = sphi 0, %s1014
    $region4: #{tpu_custom_call.1} parent=1 // loop_header_branch
      %111 = sbr.rel (%p109) target = $region8
    $region5: #{tpu_custom_call.1} parent=1 // loop_body
      %s113 = ssub.s32 %s108, 1
      %s114 = ssub.s32 %s108, 2
      %s115 = sadd.s32 %s108, 1
      %s117 = sadd.s32 %s116, 1
      %p120 = scmp.eq.s32.totalorder %s108, 1
      %p121 = scmp.ne.s32.totalorder %s116, %s118
      %p122 = scmp.eq.s32.totalorder %s108, 0
      %p123 = por %p121, %p122
      %p124 = scmp.ne.s32.totalorder %s116, %s118
      %p125 = scmp.eq.s32.totalorder %s113, 1
      %p126 = por %p124, %p125
      %p127 = scmp.ne.s32.totalorder %s118, %s119
      %p128 = scmp.eq.s32.totalorder %s113, 0
      %p129 = por %p127, %p128
      %p130 = scmp.ne.s32.totalorder %s118, %s119
      %p131 = scmp.eq.s32.totalorder %s114, 1
      %p132 = por %p130, %p131
      %p134 = scmp.ne.s32.totalorder %s119, %s133
      %p135 = scmp.eq.s32.totalorder %s114, 0
      %p136 = por %p134, %p135
      %s138 = sadd.s32 %s137, 1
      %p141 = scmp.eq.s32.totalorder %s108, 1
      %p142 = scmp.ne.s32.totalorder %s137, %s139
      %p143 = scmp.eq.s32.totalorder %s108, 0
      %p144 = por %p142, %p143
      %p145 = scmp.ne.s32.totalorder %s137, %s139
      %p146 = scmp.eq.s32.totalorder %s113, 1
      %p147 = por %p145, %p146
      %p148 = scmp.ne.s32.totalorder %s139, %s140
      %p149 = scmp.eq.s32.totalorder %s113, 0
      %p150 = por %p148, %p149
      %p151 = scmp.ne.s32.totalorder %s139, %s140
      %p152 = scmp.eq.s32.totalorder %s114, 1
      %p153 = por %p151, %p152
      %p155 = scmp.ne.s32.totalorder %s140, %s154
      %p156 = scmp.eq.s32.totalorder %s114, 0
      %p157 = por %p155, %p156
      %s158 = ssub.s32 %s108, %s115
      %p159 = scmp.eq.s32.totalorder %s158, 0
      %s161 = sadd.s32 %s160, 1
      %s162 = scalar_select %p159, %s160, %s161
      %p165 = pneg %p159
      %p166 = scmp.eq.s32.totalorder %s108, 1
      %p167 = por %p165, %p166
      %p168 = scmp.ne.s32.totalorder %s160, %s163
      %p169 = scmp.eq.s32.totalorder %s108, 0
      %p170 = por %p168, %p169
      %p171 = scmp.ne.s32.totalorder %s160, %s163
      %p172 = scmp.eq.s32.totalorder %s113, 1
      %p173 = por %p171, %p172
      %p174 = scmp.ne.s32.totalorder %s163, %s164
      %p175 = scmp.eq.s32.totalorder %s113, 0
      %p176 = por %p174, %p175
      %p177 = scmp.ne.s32.totalorder %s163, %s164
      %p178 = scmp.eq.s32.totalorder %s114, 1
      %p179 = por %p177, %p178
      %p181 = scmp.ne.s32.totalorder %s164, %s180
      %p182 = scmp.eq.s32.totalorder %s114, 0
      %p183 = por %p181, %p182
      %s184 = ssub.s32 %s108, %s115
      %p185 = scmp.eq.s32.totalorder %s184, 0
      %s187 = sadd.s32 %s186, 1
      %s188 = scalar_select %p185, %s186, %s187
      %p191 = pneg %p185
      %p192 = scmp.eq.s32.totalorder %s108, 1
      %p193 = por %p191, %p192
      %p194 = scmp.ne.s32.totalorder %s186, %s189
      %p195 = scmp.eq.s32.totalorder %s108, 0
      %p196 = por %p194, %p195
      %p197 = scmp.ne.s32.totalorder %s186, %s189
      %p198 = scmp.eq.s32.totalorder %s113, 1
      %p199 = por %p197, %p198
      %p200 = scmp.ne.s32.totalorder %s189, %s190
      %p201 = scmp.eq.s32.totalorder %s113, 0
      %p202 = por %p200, %p201
      %p203 = scmp.ne.s32.totalorder %s189, %s190
      %p204 = scmp.eq.s32.totalorder %s114, 1
      %p205 = por %p203, %p204
      %p207 = scmp.ne.s32.totalorder %s190, %s206
      %p208 = scmp.eq.s32.totalorder %s114, 0
      %p209 = por %p207, %p208
      %s210 = ssub.s32 %s108, %s115
      %p211 = scmp.eq.s32.totalorder %s210, 0
      %s213 = sadd.s32 %s212, 1
      %s214 = scalar_select %p211, %s212, %s213
      %p217 = pneg %p211
      %p218 = scmp.eq.s32.totalorder %s108, 1
      %p219 = por %p217, %p218
      %p220 = scmp.ne.s32.totalorder %s212, %s215
      %p221 = scmp.eq.s32.totalorder %s108, 0
      %p222 = por %p220, %p221
      %p223 = scmp.ne.s32.totalorder %s212, %s215
      %p224 = scmp.eq.s32.totalorder %s113, 1
      %p225 = por %p223, %p224
      %p226 = scmp.ne.s32.totalorder %s215, %s216
      %p227 = scmp.eq.s32.totalorder %s113, 0
      %p228 = por %p226, %p227
      %p229 = scmp.ne.s32.totalorder %s215, %s216
      %p230 = scmp.eq.s32.totalorder %s114, 1
      %p231 = por %p229, %p230
      %p233 = scmp.ne.s32.totalorder %s216, %s232
      %p234 = scmp.eq.s32.totalorder %s114, 0
      %p235 = por %p233, %p234
      %s236 = ssub.s32 %s108, %s115
      %p237 = scmp.eq.s32.totalorder %s236, 0
      %s239 = sadd.s32 %s238, 1
      %s240 = scalar_select %p237, %s238, %s239
      %p243 = pneg %p237
      %p244 = scmp.eq.s32.totalorder %s108, 1
      %p245 = por %p243, %p244
      %p246 = scmp.ne.s32.totalorder %s238, %s241
      %p247 = scmp.eq.s32.totalorder %s108, 0
      %p248 = por %p246, %p247
      %p249 = scmp.ne.s32.totalorder %s238, %s241
      %p250 = scmp.eq.s32.totalorder %s113, 1
      %p251 = por %p249, %p250
      %p252 = scmp.ne.s32.totalorder %s241, %s242
      %p253 = scmp.eq.s32.totalorder %s113, 0
      %p254 = por %p252, %p253
      %p255 = scmp.ne.s32.totalorder %s241, %s242
      %p256 = scmp.eq.s32.totalorder %s114, 1
      %p257 = por %p255, %p256
      %p259 = scmp.ne.s32.totalorder %s242, %s258
      %p260 = scmp.eq.s32.totalorder %s114, 0
      %p261 = por %p259, %p260
      %s262 = ssub.s32 %s108, %s115
      %p263 = scmp.eq.s32.totalorder %s262, 0
      %s265 = sadd.s32 %s264, 1
      %s266 = scalar_select %p263, %s264, %s265
      %p269 = pneg %p263
      %p270 = scmp.eq.s32.totalorder %s108, 1
      %p271 = por %p269, %p270
      %p272 = scmp.ne.s32.totalorder %s264, %s267
      %p273 = scmp.eq.s32.totalorder %s108, 0
      %p274 = por %p272, %p273
      %p275 = scmp.ne.s32.totalorder %s264, %s267
      %p276 = scmp.eq.s32.totalorder %s113, 1
      %p277 = por %p275, %p276
      %p278 = scmp.ne.s32.totalorder %s267, %s268
      %p279 = scmp.eq.s32.totalorder %s113, 0
      %p280 = por %p278, %p279
      %p281 = scmp.ne.s32.totalorder %s267, %s268
      %p282 = scmp.eq.s32.totalorder %s114, 1
      %p283 = por %p281, %p282
      %p285 = scmp.ne.s32.totalorder %s268, %s284
      %p286 = scmp.eq.s32.totalorder %s114, 0
      %p287 = por %p285, %p286
      %s288 = ssub.s32 %s108, %s115
      %p289 = scmp.eq.s32.totalorder %s288, 0
      %s291 = sadd.s32 %s290, 1
      %s292 = scalar_select %p289, %s290, %s291
      %p295 = pneg %p289
      %p296 = scmp.eq.s32.totalorder %s108, 1
      %p297 = por %p295, %p296
      %p298 = scmp.ne.s32.totalorder %s290, %s293
      %p299 = scmp.eq.s32.totalorder %s108, 0
      %p300 = por %p298, %p299
      %p301 = scmp.ne.s32.totalorder %s290, %s293
      %p302 = scmp.eq.s32.totalorder %s113, 1
      %p303 = por %p301, %p302
      %p304 = scmp.ne.s32.totalorder %s293, %s294
      %p305 = scmp.eq.s32.totalorder %s113, 0
      %p306 = por %p304, %p305
      %p307 = scmp.ne.s32.totalorder %s293, %s294
      %p308 = scmp.eq.s32.totalorder %s114, 1
      %p309 = por %p307, %p308
      %p311 = scmp.ne.s32.totalorder %s294, %s310
      %p312 = scmp.eq.s32.totalorder %s114, 0
      %p313 = por %p311, %p312
      %s314 = ssub.s32 %s108, %s115
      %p315 = scmp.eq.s32.totalorder %s314, 0
      %s317 = sadd.s32 %s316, 1
      %s318 = scalar_select %p315, %s316, %s317
      %p321 = pneg %p315
      %p322 = scmp.eq.s32.totalorder %s108, 1
      %p323 = por %p321, %p322
      %p324 = scmp.ne.s32.totalorder %s316, %s319
      %p325 = scmp.eq.s32.totalorder %s108, 0
      %p326 = por %p324, %p325
      %p327 = scmp.ne.s32.totalorder %s316, %s319
      %p328 = scmp.eq.s32.totalorder %s113, 1
      %p329 = por %p327, %p328
      %p330 = scmp.ne.s32.totalorder %s319, %s320
      %p331 = scmp.eq.s32.totalorder %s113, 0
      %p332 = por %p330, %p331
      %p333 = scmp.ne.s32.totalorder %s319, %s320
      %p334 = scmp.eq.s32.totalorder %s114, 1
      %p335 = por %p333, %p334
      %p337 = scmp.ne.s32.totalorder %s320, %s336
      %p338 = scmp.eq.s32.totalorder %s114, 0
      %p339 = por %p337, %p338
      %s340 = ssub.s32 %s108, %s115
      %p341 = scmp.eq.s32.totalorder %s340, 0
      %s343 = sadd.s32 %s342, 1
      %s344 = scalar_select %p341, %s342, %s343
      %p347 = pneg %p341
      %p348 = scmp.eq.s32.totalorder %s108, 1
      %p349 = por %p347, %p348
      %p350 = scmp.ne.s32.totalorder %s342, %s345
      %p351 = scmp.eq.s32.totalorder %s108, 0
      %p352 = por %p350, %p351
      %p353 = scmp.ne.s32.totalorder %s342, %s345
      %p354 = scmp.eq.s32.totalorder %s113, 1
      %p355 = por %p353, %p354
      %p356 = scmp.ne.s32.totalorder %s345, %s346
      %p357 = scmp.eq.s32.totalorder %s113, 0
      %p358 = por %p356, %p357
      %p359 = scmp.ne.s32.totalorder %s345, %s346
      %p360 = scmp.eq.s32.totalorder %s114, 1
      %p361 = por %p359, %p360
      %p363 = scmp.ne.s32.totalorder %s346, %s362
      %p364 = scmp.eq.s32.totalorder %s114, 0
      %p365 = por %p363, %p364
      %s366 = ssub.s32 %s108, %s115
      %p367 = scmp.eq.s32.totalorder %s366, 0
      %s369 = sadd.s32 %s368, 1
      %s370 = scalar_select %p367, %s368, %s369
      %p373 = pneg %p367
      %p374 = scmp.eq.s32.totalorder %s108, 1
      %p375 = por %p373, %p374
      %p376 = scmp.ne.s32.totalorder %s368, %s371
      %p377 = scmp.eq.s32.totalorder %s108, 0
      %p378 = por %p376, %p377
      %p379 = scmp.ne.s32.totalorder %s368, %s371
      %p380 = scmp.eq.s32.totalorder %s113, 1
      %p381 = por %p379, %p380
      %p382 = scmp.ne.s32.totalorder %s371, %s372
      %p383 = scmp.eq.s32.totalorder %s113, 0
      %p384 = por %p382, %p383
      %p385 = scmp.ne.s32.totalorder %s371, %s372
      %p386 = scmp.eq.s32.totalorder %s114, 1
      %p387 = por %p385, %p386
      %p389 = scmp.ne.s32.totalorder %s372, %s388
      %p390 = scmp.eq.s32.totalorder %s114, 0
      %p391 = por %p389, %p390
      %s392 = ssub.s32 %s108, %s115
      %p393 = scmp.eq.s32.totalorder %s392, 0
      %s395 = sadd.s32 %s394, 1
      %s396 = scalar_select %p393, %s394, %s395
      %p399 = pneg %p393
      %p400 = scmp.eq.s32.totalorder %s108, 1
      %p401 = por %p399, %p400
      %p402 = scmp.ne.s32.totalorder %s394, %s397
      %p403 = scmp.eq.s32.totalorder %s108, 0
      %p404 = por %p402, %p403
      %p405 = scmp.ne.s32.totalorder %s394, %s397
      %p406 = scmp.eq.s32.totalorder %s113, 1
      %p407 = por %p405, %p406
      %p408 = scmp.ne.s32.totalorder %s397, %s398
      %p409 = scmp.eq.s32.totalorder %s113, 0
      %p410 = por %p408, %p409
      %p411 = scmp.ne.s32.totalorder %s397, %s398
      %p412 = scmp.eq.s32.totalorder %s114, 1
      %p413 = por %p411, %p412
      %p415 = scmp.ne.s32.totalorder %s398, %s414
      %p416 = scmp.eq.s32.totalorder %s114, 0
      %p417 = por %p415, %p416
      %s418 = ssub.s32 %s108, %s115
      %p419 = scmp.eq.s32.totalorder %s418, 0
      %s421 = sadd.s32 %s420, 1
      %s422 = scalar_select %p419, %s420, %s421
      %p425 = pneg %p419
      %p426 = scmp.eq.s32.totalorder %s108, 1
      %p427 = por %p425, %p426
      %p428 = scmp.ne.s32.totalorder %s420, %s423
      %p429 = scmp.eq.s32.totalorder %s108, 0
      %p430 = por %p428, %p429
      %p431 = scmp.ne.s32.totalorder %s420, %s423
      %p432 = scmp.eq.s32.totalorder %s113, 1
      %p433 = por %p431, %p432
      %p434 = scmp.ne.s32.totalorder %s423, %s424
      %p435 = scmp.eq.s32.totalorder %s113, 0
      %p436 = por %p434, %p435
      %p437 = scmp.ne.s32.totalorder %s423, %s424
      %p438 = scmp.eq.s32.totalorder %s114, 1
      %p439 = por %p437, %p438
      %p441 = scmp.ne.s32.totalorder %s424, %s440
      %p442 = scmp.eq.s32.totalorder %s114, 0
      %p443 = por %p441, %p442
      %s444 = ssub.s32 %s108, %s115
      %p445 = scmp.eq.s32.totalorder %s444, 0
      %s447 = sadd.s32 %s446, 1
      %s448 = scalar_select %p445, %s446, %s447
      %p451 = pneg %p445
      %p452 = scmp.eq.s32.totalorder %s108, 1
      %p453 = por %p451, %p452
      %p454 = scmp.ne.s32.totalorder %s446, %s449
      %p455 = scmp.eq.s32.totalorder %s108, 0
      %p456 = por %p454, %p455
      %p457 = scmp.ne.s32.totalorder %s446, %s449
      %p458 = scmp.eq.s32.totalorder %s113, 1
      %p459 = por %p457, %p458
      %p460 = scmp.ne.s32.totalorder %s449, %s450
      %p461 = scmp.eq.s32.totalorder %s113, 0
      %p462 = por %p460, %p461
      %p463 = scmp.ne.s32.totalorder %s449, %s450
      %p464 = scmp.eq.s32.totalorder %s114, 1
      %p465 = por %p463, %p464
      %p467 = scmp.ne.s32.totalorder %s450, %s466
      %p468 = scmp.eq.s32.totalorder %s114, 0
      %p469 = por %p467, %p468
      %s470 = ssub.s32 %s108, %s115
      %p471 = scmp.eq.s32.totalorder %s470, 0
      %s473 = sadd.s32 %s472, 1
      %s474 = scalar_select %p471, %s472, %s473
      %p477 = pneg %p471
      %p478 = scmp.eq.s32.totalorder %s108, 1
      %p479 = por %p477, %p478
      %p480 = scmp.ne.s32.totalorder %s472, %s475
      %p481 = scmp.eq.s32.totalorder %s108, 0
      %p482 = por %p480, %p481
      %p483 = scmp.ne.s32.totalorder %s472, %s475
      %p484 = scmp.eq.s32.totalorder %s113, 1
      %p485 = por %p483, %p484
      %p486 = scmp.ne.s32.totalorder %s475, %s476
      %p487 = scmp.eq.s32.totalorder %s113, 0
      %p488 = por %p486, %p487
      %p489 = scmp.ne.s32.totalorder %s475, %s476
      %p490 = scmp.eq.s32.totalorder %s114, 1
      %p491 = por %p489, %p490
      %p493 = scmp.ne.s32.totalorder %s476, %s492
      %p494 = scmp.eq.s32.totalorder %s114, 0
      %p495 = por %p493, %p494
      %s496 = ssub.s32 %s108, %s115
      %p497 = scmp.eq.s32.totalorder %s496, 0
      %s499 = sadd.s32 %s498, 1
      %s500 = scalar_select %p497, %s498, %s499
      %p503 = pneg %p497
      %p504 = scmp.eq.s32.totalorder %s108, 1
      %p505 = por %p503, %p504
      %p506 = scmp.ne.s32.totalorder %s498, %s501
      %p507 = scmp.eq.s32.totalorder %s108, 0
      %p508 = por %p506, %p507
      %p509 = scmp.ne.s32.totalorder %s498, %s501
      %p510 = scmp.eq.s32.totalorder %s113, 1
      %p511 = por %p509, %p510
      %p512 = scmp.ne.s32.totalorder %s501, %s502
      %p513 = scmp.eq.s32.totalorder %s113, 0
      %p514 = por %p512, %p513
      %p515 = scmp.ne.s32.totalorder %s501, %s502
      %p516 = scmp.eq.s32.totalorder %s114, 1
      %p517 = por %p515, %p516
      %p519 = scmp.ne.s32.totalorder %s502, %s518
      %p520 = scmp.eq.s32.totalorder %s114, 0
      %p521 = por %p519, %p520
      %s522 = ssub.s32 %s108, %s115
      %p523 = scmp.eq.s32.totalorder %s522, 0
      %s525 = sadd.s32 %s524, 1
      %s526 = scalar_select %p523, %s524, %s525
      %p529 = pneg %p523
      %p530 = scmp.eq.s32.totalorder %s108, 1
      %p531 = por %p529, %p530
      %p532 = scmp.ne.s32.totalorder %s524, %s527
      %p533 = scmp.eq.s32.totalorder %s108, 0
      %p534 = por %p532, %p533
      %p535 = scmp.ne.s32.totalorder %s524, %s527
      %p536 = scmp.eq.s32.totalorder %s113, 1
      %p537 = por %p535, %p536
      %p538 = scmp.ne.s32.totalorder %s527, %s528
      %p539 = scmp.eq.s32.totalorder %s113, 0
      %p540 = por %p538, %p539
      %p541 = scmp.ne.s32.totalorder %s527, %s528
      %p542 = scmp.eq.s32.totalorder %s114, 1
      %p543 = por %p541, %p542
      %p545 = scmp.ne.s32.totalorder %s528, %s544
      %p546 = scmp.eq.s32.totalorder %s114, 0
      %p547 = por %p545, %p546
      %s548 = ssub.s32 %s108, %s115
      %p549 = scmp.eq.s32.totalorder %s548, 0
      %s551 = sadd.s32 %s550, 1
      %s552 = scalar_select %p549, %s550, %s551
      %p555 = pneg %p549
      %p556 = scmp.eq.s32.totalorder %s108, 1
      %p557 = por %p555, %p556
      %p558 = scmp.ne.s32.totalorder %s550, %s553
      %p559 = scmp.eq.s32.totalorder %s108, 0
      %p560 = por %p558, %p559
      %p561 = scmp.ne.s32.totalorder %s550, %s553
      %p562 = scmp.eq.s32.totalorder %s113, 1
      %p563 = por %p561, %p562
      %p564 = scmp.ne.s32.totalorder %s553, %s554
      %p565 = scmp.eq.s32.totalorder %s113, 0
      %p566 = por %p564, %p565
      %p567 = scmp.ne.s32.totalorder %s553, %s554
      %p568 = scmp.eq.s32.totalorder %s114, 1
      %p569 = por %p567, %p568
      %p571 = scmp.ne.s32.totalorder %s554, %s570
      %p572 = scmp.eq.s32.totalorder %s114, 0
      %p573 = por %p571, %p572
      %s574 = ssub.s32 %s108, %s115
      %p575 = scmp.eq.s32.totalorder %s574, 0
      %s577 = sadd.s32 %s576, 1
      %s578 = scalar_select %p575, %s576, %s577
      %p581 = pneg %p575
      %p582 = scmp.eq.s32.totalorder %s108, 1
      %p583 = por %p581, %p582
      %p584 = scmp.ne.s32.totalorder %s576, %s579
      %p585 = scmp.eq.s32.totalorder %s108, 0
      %p586 = por %p584, %p585
      %p587 = scmp.ne.s32.totalorder %s576, %s579
      %p588 = scmp.eq.s32.totalorder %s113, 1
      %p589 = por %p587, %p588
      %p590 = scmp.ne.s32.totalorder %s579, %s580
      %p591 = scmp.eq.s32.totalorder %s113, 0
      %p592 = por %p590, %p591
      %p593 = scmp.ne.s32.totalorder %s579, %s580
      %p594 = scmp.eq.s32.totalorder %s114, 1
      %p595 = por %p593, %p594
      %p597 = scmp.ne.s32.totalorder %s580, %s596
      %p598 = scmp.eq.s32.totalorder %s114, 0
      %p599 = por %p597, %p598
      %s600 = ssub.s32 %s108, %s115
      %p601 = scmp.eq.s32.totalorder %s600, 0
      %s603 = sadd.s32 %s602, 1
      %s604 = scalar_select %p601, %s602, %s603
      %p607 = pneg %p601
      %p608 = scmp.eq.s32.totalorder %s108, 1
      %p609 = por %p607, %p608
      %p610 = scmp.ne.s32.totalorder %s602, %s605
      %p611 = scmp.eq.s32.totalorder %s108, 0
      %p612 = por %p610, %p611
      %p613 = scmp.ne.s32.totalorder %s602, %s605
      %p614 = scmp.eq.s32.totalorder %s113, 1
      %p615 = por %p613, %p614
      %p616 = scmp.ne.s32.totalorder %s605, %s606
      %p617 = scmp.eq.s32.totalorder %s113, 0
      %p618 = por %p616, %p617
      %p619 = scmp.ne.s32.totalorder %s605, %s606
      %p620 = scmp.eq.s32.totalorder %s114, 1
      %p621 = por %p619, %p620
      %p623 = scmp.ne.s32.totalorder %s606, %s622
      %p624 = scmp.eq.s32.totalorder %s114, 0
      %p625 = por %p623, %p624
      %s626 = ssub.s32 %s108, %s115
      %p627 = scmp.eq.s32.totalorder %s626, 0
      %s629 = sadd.s32 %s628, 1
      %s630 = scalar_select %p627, %s628, %s629
      %p633 = pneg %p627
      %p634 = scmp.eq.s32.totalorder %s108, 1
      %p635 = por %p633, %p634
      %p636 = scmp.ne.s32.totalorder %s628, %s631
      %p637 = scmp.eq.s32.totalorder %s108, 0
      %p638 = por %p636, %p637
      %p639 = scmp.ne.s32.totalorder %s628, %s631
      %p640 = scmp.eq.s32.totalorder %s113, 1
      %p641 = por %p639, %p640
      %p642 = scmp.ne.s32.totalorder %s631, %s632
      %p643 = scmp.eq.s32.totalorder %s113, 0
      %p644 = por %p642, %p643
      %p645 = scmp.ne.s32.totalorder %s631, %s632
      %p646 = scmp.eq.s32.totalorder %s114, 1
      %p647 = por %p645, %p646
      %p649 = scmp.ne.s32.totalorder %s632, %s648
      %p650 = scmp.eq.s32.totalorder %s114, 0
      %p651 = por %p649, %p650
      %s652 = ssub.s32 %s108, %s115
      %p653 = scmp.eq.s32.totalorder %s652, 0
      %s655 = sadd.s32 %s654, 1
      %s656 = scalar_select %p653, %s654, %s655
      %p659 = pneg %p653
      %p660 = scmp.eq.s32.totalorder %s108, 1
      %p661 = por %p659, %p660
      %p662 = scmp.ne.s32.totalorder %s654, %s657
      %p663 = scmp.eq.s32.totalorder %s108, 0
      %p664 = por %p662, %p663
      %p665 = scmp.ne.s32.totalorder %s654, %s657
      %p666 = scmp.eq.s32.totalorder %s113, 1
      %p667 = por %p665, %p666
      %p668 = scmp.ne.s32.totalorder %s657, %s658
      %p669 = scmp.eq.s32.totalorder %s113, 0
      %p670 = por %p668, %p669
      %p671 = scmp.ne.s32.totalorder %s657, %s658
      %p672 = scmp.eq.s32.totalorder %s114, 1
      %p673 = por %p671, %p672
      %p675 = scmp.ne.s32.totalorder %s658, %s674
      %p676 = scmp.eq.s32.totalorder %s114, 0
      %p677 = por %p675, %p676
      %s678 = ssub.s32 %s108, %s115
      %p679 = scmp.eq.s32.totalorder %s678, 0
      %s681 = sadd.s32 %s680, 1
      %s682 = scalar_select %p679, %s680, %s681
      %p685 = pneg %p679
      %p686 = scmp.eq.s32.totalorder %s108, 1
      %p687 = por %p685, %p686
      %p688 = scmp.ne.s32.totalorder %s680, %s683
      %p689 = scmp.eq.s32.totalorder %s108, 0
      %p690 = por %p688, %p689
      %p691 = scmp.ne.s32.totalorder %s680, %s683
      %p692 = scmp.eq.s32.totalorder %s113, 1
      %p693 = por %p691, %p692
      %p694 = scmp.ne.s32.totalorder %s683, %s684
      %p695 = scmp.eq.s32.totalorder %s113, 0
      %p696 = por %p694, %p695
      %p697 = scmp.ne.s32.totalorder %s683, %s684
      %p698 = scmp.eq.s32.totalorder %s114, 1
      %p699 = por %p697, %p698
      %p701 = scmp.ne.s32.totalorder %s684, %s700
      %p702 = scmp.eq.s32.totalorder %s114, 0
      %p703 = por %p701, %p702
      %s704 = ssub.s32 %s108, %s115
      %p705 = scmp.eq.s32.totalorder %s704, 0
      %s707 = sadd.s32 %s706, 1
      %s708 = scalar_select %p705, %s706, %s707
      %p711 = pneg %p705
      %p712 = scmp.eq.s32.totalorder %s108, 1
      %p713 = por %p711, %p712
      %p714 = scmp.ne.s32.totalorder %s706, %s709
      %p715 = scmp.eq.s32.totalorder %s108, 0
      %p716 = por %p714, %p715
      %p717 = scmp.ne.s32.totalorder %s706, %s709
      %p718 = scmp.eq.s32.totalorder %s113, 1
      %p719 = por %p717, %p718
      %p720 = scmp.ne.s32.totalorder %s709, %s710
      %p721 = scmp.eq.s32.totalorder %s113, 0
      %p722 = por %p720, %p721
      %p723 = scmp.ne.s32.totalorder %s709, %s710
      %p724 = scmp.eq.s32.totalorder %s114, 1
      %p725 = por %p723, %p724
      %p727 = scmp.ne.s32.totalorder %s710, %s726
      %p728 = scmp.eq.s32.totalorder %s114, 0
      %p729 = por %p727, %p728
      %s730 = ssub.s32 %s108, %s115
      %p731 = scmp.eq.s32.totalorder %s730, 0
      %s733 = sadd.s32 %s732, 1
      %s734 = scalar_select %p731, %s732, %s733
      %p737 = pneg %p731
      %p738 = scmp.eq.s32.totalorder %s108, 1
      %p739 = por %p737, %p738
      %p740 = scmp.ne.s32.totalorder %s732, %s735
      %p741 = scmp.eq.s32.totalorder %s108, 0
      %p742 = por %p740, %p741
      %p743 = scmp.ne.s32.totalorder %s732, %s735
      %p744 = scmp.eq.s32.totalorder %s113, 1
      %p745 = por %p743, %p744
      %p746 = scmp.ne.s32.totalorder %s735, %s736
      %p747 = scmp.eq.s32.totalorder %s113, 0
      %p748 = por %p746, %p747
      %p749 = scmp.ne.s32.totalorder %s735, %s736
      %p750 = scmp.eq.s32.totalorder %s114, 1
      %p751 = por %p749, %p750
      %p753 = scmp.ne.s32.totalorder %s736, %s752
      %p754 = scmp.eq.s32.totalorder %s114, 0
      %p755 = por %p753, %p754
      %s756 = ssub.s32 %s108, %s115
      %p757 = scmp.eq.s32.totalorder %s756, 0
      %s759 = sadd.s32 %s758, 1
      %s760 = scalar_select %p757, %s758, %s759
      %p763 = pneg %p757
      %p764 = scmp.eq.s32.totalorder %s108, 1
      %p765 = por %p763, %p764
      %p766 = scmp.ne.s32.totalorder %s758, %s761
      %p767 = scmp.eq.s32.totalorder %s108, 0
      %p768 = por %p766, %p767
      %p769 = scmp.ne.s32.totalorder %s758, %s761
      %p770 = scmp.eq.s32.totalorder %s113, 1
      %p771 = por %p769, %p770
      %p772 = scmp.ne.s32.totalorder %s761, %s762
      %p773 = scmp.eq.s32.totalorder %s113, 0
      %p774 = por %p772, %p773
      %p775 = scmp.ne.s32.totalorder %s761, %s762
      %p776 = scmp.eq.s32.totalorder %s114, 1
      %p777 = por %p775, %p776
      %p779 = scmp.ne.s32.totalorder %s762, %s778
      %p780 = scmp.eq.s32.totalorder %s114, 0
      %p781 = por %p779, %p780
      %s782 = ssub.s32 %s108, %s115
      %p783 = scmp.eq.s32.totalorder %s782, 0
      %s785 = sadd.s32 %s784, 1
      %s786 = scalar_select %p783, %s784, %s785
      %p789 = pneg %p783
      %p790 = scmp.eq.s32.totalorder %s108, 1
      %p791 = por %p789, %p790
      %p792 = scmp.ne.s32.totalorder %s784, %s787
      %p793 = scmp.eq.s32.totalorder %s108, 0
      %p794 = por %p792, %p793
      %p795 = scmp.ne.s32.totalorder %s784, %s787
      %p796 = scmp.eq.s32.totalorder %s113, 1
      %p797 = por %p795, %p796
      %p798 = scmp.ne.s32.totalorder %s787, %s788
      %p799 = scmp.eq.s32.totalorder %s113, 0
      %p800 = por %p798, %p799
      %p801 = scmp.ne.s32.totalorder %s787, %s788
      %p802 = scmp.eq.s32.totalorder %s114, 1
      %p803 = por %p801, %p802
      %p805 = scmp.ne.s32.totalorder %s788, %s804
      %p806 = scmp.eq.s32.totalorder %s114, 0
      %p807 = por %p805, %p806
      %s808 = ssub.s32 %s108, %s115
      %p809 = scmp.eq.s32.totalorder %s808, 0
      %s811 = sadd.s32 %s810, 1
      %s812 = scalar_select %p809, %s810, %s811
      %p815 = pneg %p809
      %p816 = scmp.eq.s32.totalorder %s108, 1
      %p817 = por %p815, %p816
      %p818 = scmp.ne.s32.totalorder %s810, %s813
      %p819 = scmp.eq.s32.totalorder %s108, 0
      %p820 = por %p818, %p819
      %p821 = scmp.ne.s32.totalorder %s810, %s813
      %p822 = scmp.eq.s32.totalorder %s113, 1
      %p823 = por %p821, %p822
      %p824 = scmp.ne.s32.totalorder %s813, %s814
      %p825 = scmp.eq.s32.totalorder %s113, 0
      %p826 = por %p824, %p825
      %p827 = scmp.ne.s32.totalorder %s813, %s814
      %p828 = scmp.eq.s32.totalorder %s114, 1
      %p829 = por %p827, %p828
      %p831 = scmp.ne.s32.totalorder %s814, %s830
      %p832 = scmp.eq.s32.totalorder %s114, 0
      %p833 = por %p831, %p832
      %s834 = ssub.s32 %s108, %s115
      %p835 = scmp.eq.s32.totalorder %s834, 0
      %s837 = sadd.s32 %s836, 1
      %s838 = scalar_select %p835, %s836, %s837
      %p841 = pneg %p835
      %p842 = scmp.eq.s32.totalorder %s108, 1
      %p843 = por %p841, %p842
      %p844 = scmp.ne.s32.totalorder %s836, %s839
      %p845 = scmp.eq.s32.totalorder %s108, 0
      %p846 = por %p844, %p845
      %p847 = scmp.ne.s32.totalorder %s836, %s839
      %p848 = scmp.eq.s32.totalorder %s113, 1
      %p849 = por %p847, %p848
      %p850 = scmp.ne.s32.totalorder %s839, %s840
      %p851 = scmp.eq.s32.totalorder %s113, 0
      %p852 = por %p850, %p851
      %p853 = scmp.ne.s32.totalorder %s839, %s840
      %p854 = scmp.eq.s32.totalorder %s114, 1
      %p855 = por %p853, %p854
      %p857 = scmp.ne.s32.totalorder %s840, %s856
      %p858 = scmp.eq.s32.totalorder %s114, 0
      %p859 = por %p857, %p858
      %s860 = ssub.s32 %s108, %s115
      %p861 = scmp.eq.s32.totalorder %s860, 0
      %s863 = sadd.s32 %s862, 1
      %s864 = scalar_select %p861, %s862, %s863
      %p867 = pneg %p861
      %p868 = scmp.eq.s32.totalorder %s108, 1
      %p869 = por %p867, %p868
      %p870 = scmp.ne.s32.totalorder %s862, %s865
      %p871 = scmp.eq.s32.totalorder %s108, 0
      %p872 = por %p870, %p871
      %p873 = scmp.ne.s32.totalorder %s862, %s865
      %p874 = scmp.eq.s32.totalorder %s113, 1
      %p875 = por %p873, %p874
      %p876 = scmp.ne.s32.totalorder %s865, %s866
      %p877 = scmp.eq.s32.totalorder %s113, 0
      %p878 = por %p876, %p877
      %p879 = scmp.ne.s32.totalorder %s865, %s866
      %p880 = scmp.eq.s32.totalorder %s114, 1
      %p881 = por %p879, %p880
      %p883 = scmp.ne.s32.totalorder %s866, %s882
      %p884 = scmp.eq.s32.totalorder %s114, 0
      %p885 = por %p883, %p884
      %s886 = ssub.s32 %s108, %s115
      %p887 = scmp.eq.s32.totalorder %s886, 0
      %s889 = sadd.s32 %s888, 1
      %s890 = scalar_select %p887, %s888, %s889
      %p893 = pneg %p887
      %p894 = scmp.eq.s32.totalorder %s108, 1
      %p895 = por %p893, %p894
      %p896 = scmp.ne.s32.totalorder %s888, %s891
      %p897 = scmp.eq.s32.totalorder %s108, 0
      %p898 = por %p896, %p897
      %p899 = scmp.ne.s32.totalorder %s888, %s891
      %p900 = scmp.eq.s32.totalorder %s113, 1
      %p901 = por %p899, %p900
      %p902 = scmp.ne.s32.totalorder %s891, %s892
      %p903 = scmp.eq.s32.totalorder %s113, 0
      %p904 = por %p902, %p903
      %p905 = scmp.ne.s32.totalorder %s891, %s892
      %p906 = scmp.eq.s32.totalorder %s114, 1
      %p907 = por %p905, %p906
      %p909 = scmp.ne.s32.totalorder %s892, %s908
      %p910 = scmp.eq.s32.totalorder %s114, 0
      %p911 = por %p909, %p910
      %s912 = ssub.s32 %s108, %s115
      %p913 = scmp.eq.s32.totalorder %s912, 0
      %s915 = sadd.s32 %s914, 1
      %s916 = scalar_select %p913, %s914, %s915
      %p919 = pneg %p913
      %p920 = scmp.eq.s32.totalorder %s108, 1
      %p921 = por %p919, %p920
      %p922 = scmp.ne.s32.totalorder %s914, %s917
      %p923 = scmp.eq.s32.totalorder %s108, 0
      %p924 = por %p922, %p923
      %p925 = scmp.ne.s32.totalorder %s914, %s917
      %p926 = scmp.eq.s32.totalorder %s113, 1
      %p927 = por %p925, %p926
      %p928 = scmp.ne.s32.totalorder %s917, %s918
      %p929 = scmp.eq.s32.totalorder %s113, 0
      %p930 = por %p928, %p929
      %p931 = scmp.ne.s32.totalorder %s917, %s918
      %p932 = scmp.eq.s32.totalorder %s114, 1
      %p933 = por %p931, %p932
      %p935 = scmp.ne.s32.totalorder %s918, %s934
      %p936 = scmp.eq.s32.totalorder %s114, 0
      %p937 = por %p935, %p936
      %s938 = ssub.s32 %s108, %s115
      %p939 = scmp.eq.s32.totalorder %s938, 0
      %s941 = sadd.s32 %s940, 1
      %s942 = scalar_select %p939, %s940, %s941
      %p945 = pneg %p939
      %p946 = scmp.eq.s32.totalorder %s108, 1
      %p947 = por %p945, %p946
      %p948 = scmp.ne.s32.totalorder %s940, %s943
      %p949 = scmp.eq.s32.totalorder %s108, 0
      %p950 = por %p948, %p949
      %p951 = scmp.ne.s32.totalorder %s940, %s943
      %p952 = scmp.eq.s32.totalorder %s113, 1
      %p953 = por %p951, %p952
      %p954 = scmp.ne.s32.totalorder %s943, %s944
      %p955 = scmp.eq.s32.totalorder %s113, 0
      %p956 = por %p954, %p955
      %p957 = scmp.ne.s32.totalorder %s943, %s944
      %p958 = scmp.eq.s32.totalorder %s114, 1
      %p959 = por %p957, %p958
      %p961 = scmp.ne.s32.totalorder %s944, %s960
      %p962 = scmp.eq.s32.totalorder %s114, 0
      %p963 = por %p961, %p962
      %s964 = ssub.s32 %s108, %s115
      %p965 = scmp.eq.s32.totalorder %s964, 0
      %s967 = sadd.s32 %s966, 1
      %s968 = scalar_select %p965, %s966, %s967
      %p971 = pneg %p965
      %p972 = scmp.eq.s32.totalorder %s108, 1
      %p973 = por %p971, %p972
      %p974 = scmp.ne.s32.totalorder %s966, %s969
      %p975 = scmp.eq.s32.totalorder %s108, 0
      %p976 = por %p974, %p975
      %p977 = scmp.ne.s32.totalorder %s966, %s969
      %p978 = scmp.eq.s32.totalorder %s113, 1
      %p979 = por %p977, %p978
      %p980 = scmp.ne.s32.totalorder %s969, %s970
      %p981 = scmp.eq.s32.totalorder %s113, 0
      %p982 = por %p980, %p981
      %p983 = scmp.ne.s32.totalorder %s969, %s970
      %p984 = scmp.eq.s32.totalorder %s114, 1
      %p985 = por %p983, %p984
      %p987 = scmp.ne.s32.totalorder %s970, %s986
      %p988 = scmp.eq.s32.totalorder %s114, 0
      %p989 = por %p987, %p988
      %s991 = sadd.s32 %s990, 1
      %p994 = scmp.eq.s32.totalorder %s108, 1
      %p995 = scmp.ne.s32.totalorder %s990, %s992
      %p996 = scmp.eq.s32.totalorder %s108, 0
      %p997 = por %p995, %p996
      %p998 = scmp.ne.s32.totalorder %s990, %s992
      %p999 = scmp.eq.s32.totalorder %s113, 1
      %p1000 = por %p998, %p999
      %p1001 = scmp.ne.s32.totalorder %s992, %s993
      %p1002 = scmp.eq.s32.totalorder %s113, 0
      %p1003 = por %p1001, %p1002
      %p1004 = scmp.ne.s32.totalorder %s992, %s993
      %p1005 = scmp.eq.s32.totalorder %s114, 1
      %p1006 = por %p1004, %p1005
      %p1008 = scmp.ne.s32.totalorder %s993, %s1007
      %p1009 = scmp.eq.s32.totalorder %s114, 0
      %p1010 = por %p1008, %p1009
      %s1012 = sadd.s32 %s1011, 1
      %p1015 = scmp.eq.s32.totalorder %s108, 1
      %p1016 = scmp.ne.s32.totalorder %s1011, %s1013
      %p1017 = scmp.eq.s32.totalorder %s108, 0
      %p1018 = por %p1016, %p1017
      %p1019 = scmp.ne.s32.totalorder %s1011, %s1013
      %p1020 = scmp.eq.s32.totalorder %s113, 1
      %p1021 = por %p1019, %p1020
      %p1022 = scmp.ne.s32.totalorder %s1013, %s1014
      %p1023 = scmp.eq.s32.totalorder %s113, 0
      %p1024 = por %p1022, %p1023
      %p1025 = scmp.ne.s32.totalorder %s1013, %s1014
      %p1026 = scmp.eq.s32.totalorder %s114, 1
      %p1027 = por %p1025, %p1026
      %p1029 = scmp.ne.s32.totalorder %s1014, %s1028
      %p1030 = scmp.eq.s32.totalorder %s114, 0
      %p1031 = por %p1029, %p1030
      %p1032 = scmp.le.s32.totalorder 1, %s108
      %p1033 = scmp.lt.s32.totalorder %s108, 3
      %p1034 = pnand %p1032, %p1033
      %p1035 = pneg %p1034
      // Predicated region
      $region9: #{tpu_custom_call.1} parent=5 // pred_check
        _
      $region10: #{tpu_custom_call.1} parent=5 // pred_check_branch
        %1037 = sbr.rel (%p1034) target = $region12
      $region11: #{tpu_custom_call.1} parent=5 // pred_region
        %s1038 = ssub.s32 %s108, 1
        // Predicated region
        $region13: #{tpu_custom_call.1} parent=11 // pred_check
          %p1039 = pneg %p129
        $region14: #{tpu_custom_call.1} parent=11 // pred_check_branch
          %1041 = sbr.rel (%p1039) target = $region16
        $region15: #{tpu_custom_call.1} parent=11 // pred_region
          %1043 = vsyncadd [#allocation3], 0
          %s1044 = sshll.u32 %s1, 4
          %s1045 = int_to_ptr.hbm [resolvable:$true] %s1044
          %s1046 = sshll.u32 [#allocation2], 4
          %s1047 = int_to_ptr.vmem [resolvable:$true] %s1046
          %1052 = dma.hbm_to_vmem [thread:$0]  %s1045, 256, %s1047, [#allocation3], 128, 128, 8
        $region16: #{tpu_custom_call.1} parent=11 // pred_fallthru
          _
        // Predicated region
        $region17: #{tpu_custom_call.1} parent=11 // pred_check
          %p1053 = pneg %p150
        $region18: #{tpu_custom_call.1} parent=11 // pred_check_branch
          %1055 = sbr.rel (%p1053) target = $region20
        $region19: #{tpu_custom_call.1} parent=11 // pred_region
          _
        $region20: #{tpu_custom_call.1} parent=11 // pred_fallthru
          _
      $region12: #{tpu_custom_call.1} parent=5 // pred_fallthru
        _
      %p1056 = scmp.lt.s32.totalorder %s108, 2
      // Predicated region
      $region21: #{tpu_custom_call.1} parent=5 // pred_check
        %p1057 = pneg %p1056
      $region22: #{tpu_custom_call.1} parent=5 // pred_check_branch
        %1059 = sbr.rel (%p1057) target = $region24
      $region23: #{tpu_custom_call.1} parent=5 // pred_region
        // Predicated region
        $region25: #{tpu_custom_call.1} parent=23 // pred_check
          %p1060 = pneg %p170
        $region26: #{tpu_custom_call.1} parent=23 // pred_check_branch
          %1062 = sbr.rel (%p1060) target = $region28
        $region27: #{tpu_custom_call.1} parent=23 // pred_region
          %p1063 = scmp.lt.s32.totalorder %s108, 1
          %s1064 = scalar_select %p1063, %s108, 1
          %s1065 = smul.addr %s1064, 4
          %s1066 = smul.addr %s1065, 4
          %s1067 = scalar_lea.vmem %s5, %s1066
        $region28: #{tpu_custom_call.1} parent=23 // pred_fallthru
          _
        // Predicated region
        $region29: #{tpu_custom_call.1} parent=23 // pred_check
          %p1068 = pneg %p196
        $region30: #{tpu_custom_call.1} parent=23 // pred_check_branch
          %1070 = sbr.rel (%p1068) target = $region32
        $region31: #{tpu_custom_call.1} parent=23 // pred_region
          %p1071 = scmp.lt.s32.totalorder %s108, 1
          %s1072 = scalar_select %p1071, %s108, 1
          %s1073 = smul.addr %s1072, 4
          %s1074 = smul.addr %s1073, 4
          %s1075 = scalar_lea.vmem %s7, %s1074
        $region32: #{tpu_custom_call.1} parent=23 // pred_fallthru
          _
        // Predicated region
        $region33: #{tpu_custom_call.1} parent=23 // pred_check
          %p1076 = pneg %p222
        $region34: #{tpu_custom_call.1} parent=23 // pred_check_branch
          %1078 = sbr.rel (%p1076) target = $region36
        $region35: #{tpu_custom_call.1} parent=23 // pred_region
          %p1079 = scmp.lt.s32.totalorder %s108, 1
          %s1080 = scalar_select %p1079, %s108, 1
          %s1081 = smul.addr %s1080, 4
          %s1082 = smul.addr %s1081, 4
          %s1083 = scalar_lea.vmem %s9, %s1082
        $region36: #{tpu_custom_call.1} parent=23 // pred_fallthru
          _
        // Predicated region
        $region37: #{tpu_custom_call.1} parent=23 // pred_check
          %p1084 = pneg %p248
        $region38: #{tpu_custom_call.1} parent=23 // pred_check_branch
          %1086 = sbr.rel (%p1084) target = $region40
        $region39: #{tpu_custom_call.1} parent=23 // pred_region
          %p1087 = scmp.lt.s32.totalorder %s108, 1
          %s1088 = scalar_select %p1087, %s108, 1
          %s1089 = scalar_lea.vmem %s11, %s1088
        $region40: #{tpu_custom_call.1} parent=23 // pred_fallthru
          _
        // Predicated region
        $region41: #{tpu_custom_call.1} parent=23 // pred_check
          %p1090 = pneg %p274
        $region42: #{tpu_custom_call.1} parent=23 // pred_check_branch
          %1092 = sbr.rel (%p1090) target = $region44
        $region43: #{tpu_custom_call.1} parent=23 // pred_region
          %s1093 = sand.u32 %s108, 1
          %s1094 = scalar_lea.sflag [#allocation6], %s1093
          %s1095 = sand.u32 %s264, 1
          %s1096 = scalar_lea.vmem [#allocation5], %s1095
          %1098 = vsyncadd %s1094, 0
          %s1099 = scalar_lea.hbm %s13, %s108
          %s1101 = sshll.u32 %s1099, 4
          %s1102 = int_to_ptr.hbm [resolvable:$true] %s1101
          %s1103 = sshll.u32 %s1096, 4
          %s1104 = int_to_ptr.vmem [resolvable:$true] %s1103
          %1106 = dma.hbm_to_vmem [thread:$0]  %s1102, 16, %s1104, %s1094
        $region44: #{tpu_custom_call.1} parent=23 // pred_fallthru
          _
        // Predicated region
        $region45: #{tpu_custom_call.1} parent=23 // pred_check
          %p1107 = pneg %p300
        $region46: #{tpu_custom_call.1} parent=23 // pred_check_branch
          %1109 = sbr.rel (%p1107) target = $region48
        $region47: #{tpu_custom_call.1} parent=23 // pred_region
          %s1110 = sand.u32 %s108, 1
          %s1111 = scalar_lea.sflag [#allocation6], %s1110
          %s1112 = sand.u32 %s290, 1
          %s1113 = scalar_lea.vmem [#allocation7], %s1112
          %1115 = vsyncadd %s1111, 0
          %s1116 = scalar_lea.hbm %s15, %s108
          %s1118 = sshll.u32 %s1116, 4
          %s1119 = int_to_ptr.hbm [resolvable:$true] %s1118
          %s1120 = sshll.u32 %s1113, 4
          %s1121 = int_to_ptr.vmem [resolvable:$true] %s1120
          %1123 = dma.hbm_to_vmem [thread:$0]  %s1119, 16, %s1121, %s1111
        $region48: #{tpu_custom_call.1} parent=23 // pred_fallthru
          _
        // Predicated region
        $region49: #{tpu_custom_call.1} parent=23 // pred_check
          %p1124 = pneg %p326
        $region50: #{tpu_custom_call.1} parent=23 // pred_check_branch
          %1126 = sbr.rel (%p1124) target = $region52
        $region51: #{tpu_custom_call.1} parent=23 // pred_region
          %p1127 = scmp.lt.s32.totalorder %s108, 1
          %s1128 = scalar_select %p1127, %s108, 1
          %s1129 = smul.addr %s1128, 4
          %s1130 = smul.addr %s1129, 4
          %s1131 = scalar_lea.vmem %s17, %s1130
        $region52: #{tpu_custom_call.1} parent=23 // pred_fallthru
          _
        // Predicated region
        $region53: #{tpu_custom_call.1} parent=23 // pred_check
          %p1132 = pneg %p352
        $region54: #{tpu_custom_call.1} parent=23 // pred_check_branch
          %1134 = sbr.rel (%p1132) target = $region56
        $region55: #{tpu_custom_call.1} parent=23 // pred_region
          %s1135 = sand.u32 %s108, 1
          %s1136 = scalar_lea.sflag [#allocation9], %s1135
          %s1137 = sand.u32 %s342, 1
          %s1138 = scalar_lea.vmem [#allocation8], %s1137
          %1140 = vsyncadd %s1136, 0
          %s1141 = scalar_lea.hbm %s19, %s108
          %s1143 = sshll.u32 %s1141, 4
          %s1144 = int_to_ptr.hbm [resolvable:$true] %s1143
          %s1145 = sshll.u32 %s1138, 4
          %s1146 = int_to_ptr.vmem [resolvable:$true] %s1145
          %1148 = dma.hbm_to_vmem [thread:$0]  %s1144, 16, %s1146, %s1136
        $region56: #{tpu_custom_call.1} parent=23 // pred_fallthru
          _
        // Predicated region
        $region57: #{tpu_custom_call.1} parent=23 // pred_check
          %p1149 = pneg %p378
        $region58: #{tpu_custom_call.1} parent=23 // pred_check_branch
          %1151 = sbr.rel (%p1149) target = $region60
        $region59: #{tpu_custom_call.1} parent=23 // pred_region
          %p1152 = scmp.lt.s32.totalorder %s108, 1
          %s1153 = scalar_select %p1152, %s108, 1
          %s1154 = smul.addr %s1153, 4
          %s1155 = smul.addr %s1154, 4
          %s1156 = scalar_lea.vmem %s21, %s1155
        $region60: #{tpu_custom_call.1} parent=23 // pred_fallthru
          _
        // Predicated region
        $region61: #{tpu_custom_call.1} parent=23 // pred_check
          %p1157 = pneg %p404
        $region62: #{tpu_custom_call.1} parent=23 // pred_check_branch
          %1159 = sbr.rel (%p1157) target = $region64
        $region63: #{tpu_custom_call.1} parent=23 // pred_region
          %p1160 = scmp.lt.s32.totalorder %s108, 1
          %s1161 = scalar_select %p1160, %s108, 1
          %s1162 = smul.addr %s1161, 4
          %s1163 = smul.addr %s1162, 4
          %s1164 = scalar_lea.vmem %s23, %s1163
        $region64: #{tpu_custom_call.1} parent=23 // pred_fallthru
          _
        // Predicated region
        $region65: #{tpu_custom_call.1} parent=23 // pred_check
          %p1165 = pneg %p430
        $region66: #{tpu_custom_call.1} parent=23 // pred_check_branch
          %1167 = sbr.rel (%p1165) target = $region68
        $region67: #{tpu_custom_call.1} parent=23 // pred_region
          %p1168 = scmp.lt.s32.totalorder %s108, 1
          %s1169 = scalar_select %p1168, %s108, 1
          %s1170 = smul.addr %s1169, 4
          %s1171 = smul.addr %s1170, 4
          %s1172 = scalar_lea.vmem %s25, %s1171
        $region68: #{tpu_custom_call.1} parent=23 // pred_fallthru
          _
        // Predicated region
        $region69: #{tpu_custom_call.1} parent=23 // pred_check
          %p1173 = pneg %p456
        $region70: #{tpu_custom_call.1} parent=23 // pred_check_branch
          %1175 = sbr.rel (%p1173) target = $region72
        $region71: #{tpu_custom_call.1} parent=23 // pred_region
          %s1176 = sand.u32 %s108, 1
          %s1177 = scalar_lea.sflag [#allocation9], %s1176
          %s1178 = sand.u32 %s446, 1
          %s1179 = scalar_lea.vmem [#allocation10], %s1178
          %1181 = vsyncadd %s1177, 0
          %s1182 = scalar_lea.hbm %s27, %s108
          %s1184 = sshll.u32 %s1182, 4
          %s1185 = int_to_ptr.hbm [resolvable:$true] %s1184
          %s1186 = sshll.u32 %s1179, 4
          %s1187 = int_to_ptr.vmem [resolvable:$true] %s1186
          %1189 = dma.hbm_to_vmem [thread:$0]  %s1185, 16, %s1187, %s1177
        $region72: #{tpu_custom_call.1} parent=23 // pred_fallthru
          _
        // Predicated region
        $region73: #{tpu_custom_call.1} parent=23 // pred_check
          %p1190 = pneg %p482
        $region74: #{tpu_custom_call.1} parent=23 // pred_check_branch
          %1192 = sbr.rel (%p1190) target = $region76
        $region75: #{tpu_custom_call.1} parent=23 // pred_region
          %s1193 = sand.u32 %s108, 1
          %s1194 = scalar_lea.sflag [#allocation12], %s1193
          %s1195 = sand.u32 %s472, 1
          %s1196 = scalar_lea.vmem [#allocation11], %s1195
          %1198 = vsyncadd %s1194, 0
          %s1199 = scalar_lea.hbm %s29, %s108
          %s1201 = sshll.u32 %s1199, 4
          %s1202 = int_to_ptr.hbm [resolvable:$true] %s1201
          %s1203 = sshll.u32 %s1196, 4
          %s1204 = int_to_ptr.vmem [resolvable:$true] %s1203
          %1206 = dma.hbm_to_vmem [thread:$0]  %s1202, 16, %s1204, %s1194
        $region76: #{tpu_custom_call.1} parent=23 // pred_fallthru
          _
        // Predicated region
        $region77: #{tpu_custom_call.1} parent=23 // pred_check
          %p1207 = pneg %p508
        $region78: #{tpu_custom_call.1} parent=23 // pred_check_branch
          %1209 = sbr.rel (%p1207) target = $region80
        $region79: #{tpu_custom_call.1} parent=23 // pred_region
          %s1210 = sand.u32 %s108, 1
          %s1211 = scalar_lea.sflag [#allocation12], %s1210
          %s1212 = sand.u32 %s498, 1
          %s1213 = scalar_lea.vmem [#allocation13], %s1212
          %1215 = vsyncadd %s1211, 0
          %s1216 = scalar_lea.hbm %s31, %s108
          %s1218 = sshll.u32 %s1216, 4
          %s1219 = int_to_ptr.hbm [resolvable:$true] %s1218
          %s1220 = sshll.u32 %s1213, 4
          %s1221 = int_to_ptr.vmem [resolvable:$true] %s1220
          %1223 = dma.hbm_to_vmem [thread:$0]  %s1219, 16, %s1221, %s1211
        $region80: #{tpu_custom_call.1} parent=23 // pred_fallthru
          _
        // Predicated region
        $region81: #{tpu_custom_call.1} parent=23 // pred_check
          %p1224 = pneg %p534
        $region82: #{tpu_custom_call.1} parent=23 // pred_check_branch
          %1226 = sbr.rel (%p1224) target = $region84
        $region83: #{tpu_custom_call.1} parent=23 // pred_region
          %p1227 = scmp.lt.s32.totalorder %s108, 1
          %s1228 = scalar_select %p1227, %s108, 1
          %s1229 = smul.addr %s1228, 4
          %s1230 = smul.addr %s1229, 4
          %s1231 = scalar_lea.vmem %s33, %s1230
        $region84: #{tpu_custom_call.1} parent=23 // pred_fallthru
          _
        // Predicated region
        $region85: #{tpu_custom_call.1} parent=23 // pred_check
          %p1232 = pneg %p560
        $region86: #{tpu_custom_call.1} parent=23 // pred_check_branch
          %1234 = sbr.rel (%p1232) target = $region88
        $region87: #{tpu_custom_call.1} parent=23 // pred_region
          %s1235 = sand.u32 %s108, 1
          %s1236 = scalar_lea.sflag [#allocation15], %s1235
          %s1237 = sand.u32 %s550, 1
          %s1238 = scalar_lea.vmem [#allocation14], %s1237
          %1240 = vsyncadd %s1236, 0
          %s1241 = scalar_lea.hbm %s35, %s108
          %s1243 = sshll.u32 %s1241, 4
          %s1244 = int_to_ptr.hbm [resolvable:$true] %s1243
          %s1245 = sshll.u32 %s1238, 4
          %s1246 = int_to_ptr.vmem [resolvable:$true] %s1245
          %1248 = dma.hbm_to_vmem [thread:$0]  %s1244, 16, %s1246, %s1236
        $region88: #{tpu_custom_call.1} parent=23 // pred_fallthru
          _
        // Predicated region
        $region89: #{tpu_custom_call.1} parent=23 // pred_check
          %p1249 = pneg %p586
        $region90: #{tpu_custom_call.1} parent=23 // pred_check_branch
          %1251 = sbr.rel (%p1249) target = $region92
        $region91: #{tpu_custom_call.1} parent=23 // pred_region
          %s1252 = sand.u32 %s108, 1
          %s1253 = scalar_lea.sflag [#allocation15], %s1252
          %s1254 = sand.u32 %s576, 1
          %s1255 = smul.addr %s1254, 8
          %s1256 = scalar_lea.vmem [#allocation16], %s1255
          %1258 = vsyncadd %s1253, 0
          %s1259 = smul.addr %s108, 8
          %s1260 = scalar_lea.hbm %s37, %s1259
          %s1262 = sshll.u32 %s1260, 4
          %s1263 = int_to_ptr.hbm [resolvable:$true] %s1262
          %s1264 = sshll.u32 %s1256, 4
          %s1265 = int_to_ptr.vmem [resolvable:$true] %s1264
          %1267 = dma.hbm_to_vmem [thread:$0]  %s1263, 128, %s1265, %s1253
        $region92: #{tpu_custom_call.1} parent=23 // pred_fallthru
          _
        // Predicated region
        $region93: #{tpu_custom_call.1} parent=23 // pred_check
          %p1268 = pneg %p612
        $region94: #{tpu_custom_call.1} parent=23 // pred_check_branch
          %1270 = sbr.rel (%p1268) target = $region96
        $region95: #{tpu_custom_call.1} parent=23 // pred_region
          %s1271 = sand.u32 %s108, 1
          %s1272 = scalar_lea.sflag [#allocation18], %s1271
          %s1273 = sand.u32 %s602, 1
          %s1274 = smul.addr %s1273, 8
          %s1275 = scalar_lea.vmem [#allocation17], %s1274
          %1277 = vsyncadd %s1272, 0
          %s1278 = smul.addr %s108, 8
          %s1279 = scalar_lea.hbm %s39, %s1278
          %s1281 = sshll.u32 %s1279, 4
          %s1282 = int_to_ptr.hbm [resolvable:$true] %s1281
          %s1283 = sshll.u32 %s1275, 4
          %s1284 = int_to_ptr.vmem [resolvable:$true] %s1283
          %1286 = dma.hbm_to_vmem [thread:$0]  %s1282, 128, %s1284, %s1272
        $region96: #{tpu_custom_call.1} parent=23 // pred_fallthru
          _
        // Predicated region
        $region97: #{tpu_custom_call.1} parent=23 // pred_check
          %p1287 = pneg %p638
        $region98: #{tpu_custom_call.1} parent=23 // pred_check_branch
          %1289 = sbr.rel (%p1287) target = $region100
        $region99: #{tpu_custom_call.1} parent=23 // pred_region
          %s1290 = sand.u32 %s108, 1
          %s1291 = scalar_lea.sflag [#allocation18], %s1290
          %s1292 = sand.u32 %s628, 1
          %s1293 = smul.addr %s1292, 16
          %s1294 = scalar_lea.vmem [#allocation19], %s1293
          %1296 = vsyncadd %s1291, 0
          %s1297 = smul.addr %s108, 2
          %s1298 = smul.addr %s1297, 8
          %s1299 = scalar_lea.hbm %s41, %s1298
          %s1300 = sshll.u32 %s1299, 4
          %s1301 = int_to_ptr.hbm [resolvable:$true] %s1300
          %s1302 = sshll.u32 %s1294, 4
          %s1303 = int_to_ptr.vmem [resolvable:$true] %s1302
          %1308 = dma.hbm_to_vmem [thread:$0]  %s1301, 256, %s1303, %s1291, 128, 128, 8
        $region100: #{tpu_custom_call.1} parent=23 // pred_fallthru
          _
        // Predicated region
        $region101: #{tpu_custom_call.1} parent=23 // pred_check
          %p1309 = pneg %p664
        $region102: #{tpu_custom_call.1} parent=23 // pred_check_branch
          %1311 = sbr.rel (%p1309) target = $region104
        $region103: #{tpu_custom_call.1} parent=23 // pred_region
          %s1312 = sand.u32 %s108, 1
          %s1313 = scalar_lea.sflag [#allocation21], %s1312
          %s1314 = sand.u32 %s654, 1
          %s1315 = smul.addr %s1314, 16
          %s1316 = scalar_lea.vmem [#allocation20], %s1315
          %1318 = vsyncadd %s1313, 0
          %s1319 = smul.addr %s108, 2
          %s1320 = smul.addr %s1319, 8
          %s1321 = scalar_lea.hbm %s43, %s1320
          %s1322 = sshll.u32 %s1321, 4
          %s1323 = int_to_ptr.hbm [resolvable:$true] %s1322
          %s1324 = sshll.u32 %s1316, 4
          %s1325 = int_to_ptr.vmem [resolvable:$true] %s1324
          %1330 = dma.hbm_to_vmem [thread:$0]  %s1323, 256, %s1325, %s1313, 128, 128, 8
        $region104: #{tpu_custom_call.1} parent=23 // pred_fallthru
          _
        // Predicated region
        $region105: #{tpu_custom_call.1} parent=23 // pred_check
          %p1331 = pneg %p690
        $region106: #{tpu_custom_call.1} parent=23 // pred_check_branch
          %1333 = sbr.rel (%p1331) target = $region108
        $region107: #{tpu_custom_call.1} parent=23 // pred_region
          %s1334 = sand.u32 %s108, 1
          %s1335 = scalar_lea.sflag [#allocation21], %s1334
          %s1336 = sand.u32 %s680, 1
          %s1337 = smul.addr %s1336, 16
          %s1338 = scalar_lea.vmem [#allocation22], %s1337
          %1340 = vsyncadd %s1335, 0
          %s1341 = smul.addr %s108, 4
          %s1342 = smul.addr %s1341, 4
          %s1343 = scalar_lea.hbm %s45, %s1342
          %s1344 = sshll.u32 %s1343, 4
          %s1345 = int_to_ptr.hbm [resolvable:$true] %s1344
          %s1346 = sshll.u32 %s1338, 4
          %s1347 = int_to_ptr.vmem [resolvable:$true] %s1346
          %1352 = dma.hbm_to_vmem [thread:$0]  %s1345, 256, %s1347, %s1335, 64, 64, 4
        $region108: #{tpu_custom_call.1} parent=23 // pred_fallthru
          _
        // Predicated region
        $region109: #{tpu_custom_call.1} parent=23 // pred_check
          %p1353 = pneg %p716
        $region110: #{tpu_custom_call.1} parent=23 // pred_check_branch
          %1355 = sbr.rel (%p1353) target = $region112
        $region111: #{tpu_custom_call.1} parent=23 // pred_region
          %s1356 = sand.u32 %s108, 1
          %s1357 = scalar_lea.sflag [#allocation24], %s1356
          %s1358 = sand.u32 %s706, 1
          %s1359 = scalar_lea.vmem [#allocation23], %s1358
          %1361 = vsyncadd %s1357, 0
          %s1362 = scalar_lea.hbm %s47, %s108
          %s1364 = sshll.u32 %s1362, 4
          %s1365 = int_to_ptr.hbm [resolvable:$true] %s1364
          %s1366 = sshll.u32 %s1359, 4
          %s1367 = int_to_ptr.vmem [resolvable:$true] %s1366
          %1369 = dma.hbm_to_vmem [thread:$0]  %s1365, 16, %s1367, %s1357
        $region112: #{tpu_custom_call.1} parent=23 // pred_fallthru
          _
        // Predicated region
        $region113: #{tpu_custom_call.1} parent=23 // pred_check
          %p1370 = pneg %p742
        $region114: #{tpu_custom_call.1} parent=23 // pred_check_branch
          %1372 = sbr.rel (%p1370) target = $region116
        $region115: #{tpu_custom_call.1} parent=23 // pred_region
          %p1373 = scmp.lt.s32.totalorder %s108, 1
          %s1374 = scalar_select %p1373, %s108, 1
          %s1375 = smul.addr %s1374, 16
          %s1376 = smul.addr %s1375, 4
          %s1377 = scalar_lea.vmem %s49, %s1376
        $region116: #{tpu_custom_call.1} parent=23 // pred_fallthru
          _
        // Predicated region
        $region117: #{tpu_custom_call.1} parent=23 // pred_check
          %p1378 = pneg %p768
        $region118: #{tpu_custom_call.1} parent=23 // pred_check_branch
          %1380 = sbr.rel (%p1378) target = $region120
        $region119: #{tpu_custom_call.1} parent=23 // pred_region
          %p1381 = scmp.lt.s32.totalorder %s108, 1
          %s1382 = scalar_select %p1381, %s108, 1
          %s1383 = scalar_lea.vmem %s51, %s1382
        $region120: #{tpu_custom_call.1} parent=23 // pred_fallthru
          _
        // Predicated region
        $region121: #{tpu_custom_call.1} parent=23 // pred_check
          %p1384 = pneg %p794
        $region122: #{tpu_custom_call.1} parent=23 // pred_check_branch
          %1386 = sbr.rel (%p1384) target = $region124
        $region123: #{tpu_custom_call.1} parent=23 // pred_region
          %s1387 = sand.u32 %s108, 1
          %s1388 = scalar_lea.sflag [#allocation24], %s1387
          %s1389 = sand.u32 %s784, 1
          %s1390 = smul.addr %s1389, 16
          %s1391 = scalar_lea.vmem [#allocation25], %s1390
          %1393 = vsyncadd %s1388, 0
          %s1394 = smul.addr %s108, 4
          %s1395 = smul.addr %s1394, 4
          %s1396 = scalar_lea.hbm %s53, %s1395
          %s1397 = sshll.u32 %s1396, 4
          %s1398 = int_to_ptr.hbm [resolvable:$true] %s1397
          %s1399 = sshll.u32 %s1391, 4
          %s1400 = int_to_ptr.vmem [resolvable:$true] %s1399
          %1405 = dma.hbm_to_vmem [thread:$0]  %s1398, 256, %s1400, %s1388, 64, 64, 4
        $region124: #{tpu_custom_call.1} parent=23 // pred_fallthru
          _
        // Predicated region
        $region125: #{tpu_custom_call.1} parent=23 // pred_check
          %p1406 = pneg %p820
        $region126: #{tpu_custom_call.1} parent=23 // pred_check_branch
          %1408 = sbr.rel (%p1406) target = $region128
        $region127: #{tpu_custom_call.1} parent=23 // pred_region
          %p1409 = scmp.lt.s32.totalorder %s108, 1
          %s1410 = scalar_select %p1409, %s108, 1
          %s1411 = scalar_lea.vmem %s55, %s1410
        $region128: #{tpu_custom_call.1} parent=23 // pred_fallthru
          _
        // Predicated region
        $region129: #{tpu_custom_call.1} parent=23 // pred_check
          %p1412 = pneg %p846
        $region130: #{tpu_custom_call.1} parent=23 // pred_check_branch
          %1414 = sbr.rel (%p1412) target = $region132
        $region131: #{tpu_custom_call.1} parent=23 // pred_region
          %p1415 = scmp.lt.s32.totalorder %s108, 1
          %s1416 = scalar_select %p1415, %s108, 1
          %s1417 = smul.addr %s1416, 16
          %s1418 = smul.addr %s1417, 4
          %s1419 = scalar_lea.vmem %s57, %s1418
        $region132: #{tpu_custom_call.1} parent=23 // pred_fallthru
          _
        // Predicated region
        $region133: #{tpu_custom_call.1} parent=23 // pred_check
          %p1420 = pneg %p872
        $region134: #{tpu_custom_call.1} parent=23 // pred_check_branch
          %1422 = sbr.rel (%p1420) target = $region136
        $region135: #{tpu_custom_call.1} parent=23 // pred_region
          %p1423 = scmp.lt.s32.totalorder %s108, 1
          %s1424 = scalar_select %p1423, %s108, 1
          %s1425 = scalar_lea.vmem %s59, %s1424
        $region136: #{tpu_custom_call.1} parent=23 // pred_fallthru
          _
        // Predicated region
        $region137: #{tpu_custom_call.1} parent=23 // pred_check
          %p1426 = pneg %p898
        $region138: #{tpu_custom_call.1} parent=23 // pred_check_branch
          %1428 = sbr.rel (%p1426) target = $region140
        $region139: #{tpu_custom_call.1} parent=23 // pred_region
          %p1429 = scmp.lt.s32.totalorder %s108, 1
          %s1430 = scalar_select %p1429, %s108, 1
          %s1431 = smul.addr %s1430, 8
          %s1432 = scalar_lea.vmem %s61, %s1431
        $region140: #{tpu_custom_call.1} parent=23 // pred_fallthru
          _
        // Predicated region
        $region141: #{tpu_custom_call.1} parent=23 // pred_check
          %p1433 = pneg %p924
        $region142: #{tpu_custom_call.1} parent=23 // pred_check_branch
          %1435 = sbr.rel (%p1433) target = $region144
        $region143: #{tpu_custom_call.1} parent=23 // pred_region
          %s1436 = sand.u32 %s108, 1
          %s1437 = scalar_lea.sflag [#allocation27], %s1436
          %s1438 = sand.u32 %s914, 1
          %s1439 = smul.addr %s1438, 8
          %s1440 = scalar_lea.vmem [#allocation26], %s1439
          %1442 = vsyncadd %s1437, 0
          %s1443 = smul.addr %s108, 8
          %s1444 = scalar_lea.hbm %s63, %s1443
          %s1446 = sshll.u32 %s1444, 4
          %s1447 = int_to_ptr.hbm [resolvable:$true] %s1446
          %s1448 = sshll.u32 %s1440, 4
          %s1449 = int_to_ptr.vmem [resolvable:$true] %s1448
          %1451 = dma.hbm_to_vmem [thread:$0]  %s1447, 128, %s1449, %s1437
        $region144: #{tpu_custom_call.1} parent=23 // pred_fallthru
          _
        // Predicated region
        $region145: #{tpu_custom_call.1} parent=23 // pred_check
          %p1452 = pneg %p950
        $region146: #{tpu_custom_call.1} parent=23 // pred_check_branch
          %1454 = sbr.rel (%p1452) target = $region148
        $region147: #{tpu_custom_call.1} parent=23 // pred_region
          %s1455 = sand.u32 %s108, 1
          %s1456 = scalar_lea.sflag [#allocation27], %s1455
          %s1457 = sand.u32 %s940, 1
          %s1458 = smul.addr %s1457, 16
          %s1459 = scalar_lea.vmem [#allocation28], %s1458
          %1461 = vsyncadd %s1456, 0
          %s1462 = smul.addr %s108, 2
          %s1463 = smul.addr %s1462, 8
          %s1464 = scalar_lea.hbm %s65, %s1463
          %s1465 = sshll.u32 %s1464, 4
          %s1466 = int_to_ptr.hbm [resolvable:$true] %s1465
          %s1467 = sshll.u32 %s1459, 4
          %s1468 = int_to_ptr.vmem [resolvable:$true] %s1467
          %1473 = dma.hbm_to_vmem [thread:$0]  %s1466, 256, %s1468, %s1456, 128, 128, 8
        $region148: #{tpu_custom_call.1} parent=23 // pred_fallthru
          _
        // Predicated region
        $region149: #{tpu_custom_call.1} parent=23 // pred_check
          %p1474 = pneg %p976
        $region150: #{tpu_custom_call.1} parent=23 // pred_check_branch
          %1476 = sbr.rel (%p1474) target = $region152
        $region151: #{tpu_custom_call.1} parent=23 // pred_region
          %s1477 = sand.u32 %s966, 1
          %s1478 = scalar_lea.sflag [#allocation30], %s1477
          %s1479 = sand.u32 %s966, 1
          %s1480 = smul.addr %s1479, 16
          %s1481 = scalar_lea.vmem [#allocation29], %s1480
          %1483 = vsyncadd %s1478, 0
          %s1484 = smul.addr %s108, 2
          %s1485 = smul.addr %s1484, 8
          %s1486 = scalar_lea.hbm %s67, %s1485
          %s1487 = sshll.u32 %s1486, 4
          %s1488 = int_to_ptr.hbm [resolvable:$true] %s1487
          %s1489 = sshll.u32 %s1481, 4
          %s1490 = int_to_ptr.vmem [resolvable:$true] %s1489
          %1495 = dma.hbm_to_vmem [thread:$0]  %s1488, 256, %s1490, %s1478, 128, 128, 8
        $region152: #{tpu_custom_call.1} parent=23 // pred_fallthru
          _
      $region24: #{tpu_custom_call.1} parent=5 // pred_fallthru
        _
      %p1496 = scmp.le.s32.totalorder 1, %s108
      %p1497 = scmp.lt.s32.totalorder %s108, 3
      %p1498 = pnand %p1496, %p1497
      %p1499 = pneg %p1498
      // Predicated region
      $region153: #{tpu_custom_call.1} parent=5 // pred_check
        _
      $region154: #{tpu_custom_call.1} parent=5 // pred_check_branch
        %1501 = sbr.rel (%p1498) target = $region156
      $region155: #{tpu_custom_call.1} parent=5 // pred_region
        %s1502 = ssub.s32 %s108, 1
        // Predicated region
        $region157: #{tpu_custom_call.1} parent=155 // pred_check
          %p1503 = pneg %p129
        $region158: #{tpu_custom_call.1} parent=155 // pred_check_branch
          %1505 = sbr.rel (%p1503) target = $region160
        $region159: #{tpu_custom_call.1} parent=155 // pred_region
          %1507 = dma.done [#allocation3], 256
        $region160: #{tpu_custom_call.1} parent=155 // pred_fallthru
          _
        %s1508 = sand.u32 %s113, 1
        %s1509 = scalar_lea.sflag [#allocation6], %s1508
        %s1510 = sand.u32 %s267, 1
        %s1511 = scalar_lea.vmem [#allocation5], %s1510
        // Predicated region
        $region161: #{tpu_custom_call.1} parent=155 // pred_check
          %p1512 = pneg %p280
        $region162: #{tpu_custom_call.1} parent=155 // pred_check_branch
          %1514 = sbr.rel (%p1512) target = $region164
        $region163: #{tpu_custom_call.1} parent=155 // pred_region
          %1516 = dma.done %s1509, 16
        $region164: #{tpu_custom_call.1} parent=155 // pred_fallthru
          _
        %s1517 = sand.u32 %s113, 1
        %s1518 = scalar_lea.sflag [#allocation6], %s1517
        %s1519 = sand.u32 %s293, 1
        %s1520 = scalar_lea.vmem [#allocation7], %s1519
        // Predicated region
        $region165: #{tpu_custom_call.1} parent=155 // pred_check
          %p1521 = pneg %p306
        $region166: #{tpu_custom_call.1} parent=155 // pred_check_branch
          %1523 = sbr.rel (%p1521) target = $region168
        $region167: #{tpu_custom_call.1} parent=155 // pred_region
          %1525 = dma.done %s1518, 16
        $region168: #{tpu_custom_call.1} parent=155 // pred_fallthru
          _
        %s1526 = sand.u32 %s113, 1
        %s1527 = scalar_lea.sflag [#allocation9], %s1526
        %s1528 = sand.u32 %s345, 1
        %s1529 = scalar_lea.vmem [#allocation8], %s1528
        // Predicated region
        $region169: #{tpu_custom_call.1} parent=155 // pred_check
          %p1530 = pneg %p358
        $region170: #{tpu_custom_call.1} parent=155 // pred_check_branch
          %1532 = sbr.rel (%p1530) target = $region172
        $region171: #{tpu_custom_call.1} parent=155 // pred_region
          %1534 = dma.done %s1527, 16
        $region172: #{tpu_custom_call.1} parent=155 // pred_fallthru
          _
        %s1535 = sand.u32 %s113, 1
        %s1536 = scalar_lea.sflag [#allocation9], %s1535
        %s1537 = sand.u32 %s449, 1
        %s1538 = scalar_lea.vmem [#allocation10], %s1537
        // Predicated region
        $region173: #{tpu_custom_call.1} parent=155 // pred_check
          %p1539 = pneg %p462
        $region174: #{tpu_custom_call.1} parent=155 // pred_check_branch
          %1541 = sbr.rel (%p1539) target = $region176
        $region175: #{tpu_custom_call.1} parent=155 // pred_region
          %1543 = dma.done %s1536, 16
        $region176: #{tpu_custom_call.1} parent=155 // pred_fallthru
          _
        %s1544 = sand.u32 %s113, 1
        %s1545 = scalar_lea.sflag [#allocation12], %s1544
        %s1546 = sand.u32 %s475, 1
        %s1547 = scalar_lea.vmem [#allocation11], %s1546
        // Predicated region
        $region177: #{tpu_custom_call.1} parent=155 // pred_check
          %p1548 = pneg %p488
        $region178: #{tpu_custom_call.1} parent=155 // pred_check_branch
          %1550 = sbr.rel (%p1548) target = $region180
        $region179: #{tpu_custom_call.1} parent=155 // pred_region
          %1552 = dma.done %s1545, 16
        $region180: #{tpu_custom_call.1} parent=155 // pred_fallthru
          _
        %s1553 = sand.u32 %s113, 1
        %s1554 = scalar_lea.sflag [#allocation12], %s1553
        %s1555 = sand.u32 %s501, 1
        %s1556 = scalar_lea.vmem [#allocation13], %s1555
        // Predicated region
        $region181: #{tpu_custom_call.1} parent=155 // pred_check
          %p1557 = pneg %p514
        $region182: #{tpu_custom_call.1} parent=155 // pred_check_branch
          %1559 = sbr.rel (%p1557) target = $region184
        $region183: #{tpu_custom_call.1} parent=155 // pred_region
          %1561 = dma.done %s1554, 16
        $region184: #{tpu_custom_call.1} parent=155 // pred_fallthru
          _
        %s1562 = sand.u32 %s113, 1
        %s1563 = scalar_lea.sflag [#allocation15], %s1562
        %s1564 = sand.u32 %s553, 1
        %s1565 = scalar_lea.vmem [#allocation14], %s1564
        // Predicated region
        $region185: #{tpu_custom_call.1} parent=155 // pred_check
          %p1566 = pneg %p566
        $region186: #{tpu_custom_call.1} parent=155 // pred_check_branch
          %1568 = sbr.rel (%p1566) target = $region188
        $region187: #{tpu_custom_call.1} parent=155 // pred_region
          %1570 = dma.done %s1563, 16
        $region188: #{tpu_custom_call.1} parent=155 // pred_fallthru
          _
        %s1571 = sand.u32 %s113, 1
        %s1572 = scalar_lea.sflag [#allocation15], %s1571
        %s1573 = sand.u32 %s579, 1
        %s1574 = smul.addr %s1573, 8
        %s1575 = scalar_lea.vmem [#allocation16], %s1574
        // Predicated region
        $region189: #{tpu_custom_call.1} parent=155 // pred_check
          %p1576 = pneg %p592
        $region190: #{tpu_custom_call.1} parent=155 // pred_check_branch
          %1578 = sbr.rel (%p1576) target = $region192
        $region191: #{tpu_custom_call.1} parent=155 // pred_region
          %1580 = dma.done %s1572, 128
        $region192: #{tpu_custom_call.1} parent=155 // pred_fallthru
          _
        %s1581 = sand.u32 %s113, 1
        %s1582 = scalar_lea.sflag [#allocation18], %s1581
        %s1583 = sand.u32 %s605, 1
        %s1584 = smul.addr %s1583, 8
        %s1585 = scalar_lea.vmem [#allocation17], %s1584
        // Predicated region
        $region193: #{tpu_custom_call.1} parent=155 // pred_check
          %p1586 = pneg %p618
        $region194: #{tpu_custom_call.1} parent=155 // pred_check_branch
          %1588 = sbr.rel (%p1586) target = $region196
        $region195: #{tpu_custom_call.1} parent=155 // pred_region
          %1590 = dma.done %s1582, 128
        $region196: #{tpu_custom_call.1} parent=155 // pred_fallthru
          _
        %s1591 = sand.u32 %s113, 1
        %s1592 = scalar_lea.sflag [#allocation18], %s1591
        %s1593 = sand.u32 %s631, 1
        %s1594 = smul.addr %s1593, 16
        %s1595 = scalar_lea.vmem [#allocation19], %s1594
        // Predicated region
        $region197: #{tpu_custom_call.1} parent=155 // pred_check
          %p1596 = pneg %p644
        $region198: #{tpu_custom_call.1} parent=155 // pred_check_branch
          %1598 = sbr.rel (%p1596) target = $region200
        $region199: #{tpu_custom_call.1} parent=155 // pred_region
          %1600 = dma.done %s1592, 256
        $region200: #{tpu_custom_call.1} parent=155 // pred_fallthru
          _
        %s1601 = sand.u32 %s113, 1
        %s1602 = scalar_lea.sflag [#allocation21], %s1601
        %s1603 = sand.u32 %s657, 1
        %s1604 = smul.addr %s1603, 16
        %s1605 = scalar_lea.vmem [#allocation20], %s1604
        // Predicated region
        $region201: #{tpu_custom_call.1} parent=155 // pred_check
          %p1606 = pneg %p670
        $region202: #{tpu_custom_call.1} parent=155 // pred_check_branch
          %1608 = sbr.rel (%p1606) target = $region204
        $region203: #{tpu_custom_call.1} parent=155 // pred_region
          %1610 = dma.done %s1602, 256
        $region204: #{tpu_custom_call.1} parent=155 // pred_fallthru
          _
        %s1611 = sand.u32 %s113, 1
        %s1612 = scalar_lea.sflag [#allocation21], %s1611
        %s1613 = sand.u32 %s683, 1
        %s1614 = smul.addr %s1613, 16
        %s1615 = scalar_lea.vmem [#allocation22], %s1614
        // Predicated region
        $region205: #{tpu_custom_call.1} parent=155 // pred_check
          %p1616 = pneg %p696
        $region206: #{tpu_custom_call.1} parent=155 // pred_check_branch
          %1618 = sbr.rel (%p1616) target = $region208
        $region207: #{tpu_custom_call.1} parent=155 // pred_region
          %1620 = dma.done %s1612, 256
        $region208: #{tpu_custom_call.1} parent=155 // pred_fallthru
          _
        %s1621 = sand.u32 %s113, 1
        %s1622 = scalar_lea.sflag [#allocation24], %s1621
        %s1623 = sand.u32 %s709, 1
        %s1624 = scalar_lea.vmem [#allocation23], %s1623
        // Predicated region
        $region209: #{tpu_custom_call.1} parent=155 // pred_check
          %p1625 = pneg %p722
        $region210: #{tpu_custom_call.1} parent=155 // pred_check_branch
          %1627 = sbr.rel (%p1625) target = $region212
        $region211: #{tpu_custom_call.1} parent=155 // pred_region
          %1629 = dma.done %s1622, 16
        $region212: #{tpu_custom_call.1} parent=155 // pred_fallthru
          _
        %s1630 = sand.u32 %s113, 1
        %s1631 = scalar_lea.sflag [#allocation24], %s1630
        %s1632 = sand.u32 %s787, 1
        %s1633 = smul.addr %s1632, 16
        %s1634 = scalar_lea.vmem [#allocation25], %s1633
        // Predicated region
        $region213: #{tpu_custom_call.1} parent=155 // pred_check
          %p1635 = pneg %p800
        $region214: #{tpu_custom_call.1} parent=155 // pred_check_branch
          %1637 = sbr.rel (%p1635) target = $region216
        $region215: #{tpu_custom_call.1} parent=155 // pred_region
          %1639 = dma.done %s1631, 256
        $region216: #{tpu_custom_call.1} parent=155 // pred_fallthru
          _
        %s1640 = sand.u32 %s113, 1
        %s1641 = scalar_lea.sflag [#allocation27], %s1640
        %s1642 = sand.u32 %s917, 1
        %s1643 = smul.addr %s1642, 8
        %s1644 = scalar_lea.vmem [#allocation26], %s1643
        // Predicated region
        $region217: #{tpu_custom_call.1} parent=155 // pred_check
          %p1645 = pneg %p930
        $region218: #{tpu_custom_call.1} parent=155 // pred_check_branch
          %1647 = sbr.rel (%p1645) target = $region220
        $region219: #{tpu_custom_call.1} parent=155 // pred_region
          %1649 = dma.done %s1641, 128
        $region220: #{tpu_custom_call.1} parent=155 // pred_fallthru
          _
        %s1650 = sand.u32 %s113, 1
        %s1651 = scalar_lea.sflag [#allocation27], %s1650
        %s1652 = sand.u32 %s943, 1
        %s1653 = smul.addr %s1652, 16
        %s1654 = scalar_lea.vmem [#allocation28], %s1653
        // Predicated region
        $region221: #{tpu_custom_call.1} parent=155 // pred_check
          %p1655 = pneg %p956
        $region222: #{tpu_custom_call.1} parent=155 // pred_check_branch
          %1657 = sbr.rel (%p1655) target = $region224
        $region223: #{tpu_custom_call.1} parent=155 // pred_region
          %1659 = dma.done %s1651, 256
        $region224: #{tpu_custom_call.1} parent=155 // pred_fallthru
          _
        %s1660 = sand.u32 %s969, 1
        %s1661 = scalar_lea.sflag [#allocation30], %s1660
        %s1662 = sand.u32 %s969, 1
        %s1663 = smul.addr %s1662, 16
        %s1664 = scalar_lea.vmem [#allocation29], %s1663
        // Predicated region
        $region225: #{tpu_custom_call.1} parent=155 // pred_check
          %p1665 = pneg %p982
        $region226: #{tpu_custom_call.1} parent=155 // pred_check_branch
          %1667 = sbr.rel (%p1665) target = $region228
        $region227: #{tpu_custom_call.1} parent=155 // pred_region
          %1669 = dma.done %s1661, 256
        $region228: #{tpu_custom_call.1} parent=155 // pred_fallthru
          _
        %p1670 = pneg %p129
        %p1671 = pneg %p126
        %p1672 = pneg %p150
        %p1673 = pneg %p147
        %p1674 = scmp.lt.s32.totalorder %s113, 1
        %s1675 = scalar_select %p1674, %s113, 1
        %s1676 = smul.addr %s1675, 4
        %s1677 = smul.addr %s1676, 4
        %s1678 = scalar_lea.vmem %s5, %s1677
        %p1679 = pneg %p176
        %p1680 = pneg %p173
        %p1681 = scmp.lt.s32.totalorder %s113, 1
        %s1682 = scalar_select %p1681, %s113, 1
        %s1683 = smul.addr %s1682, 4
        %s1684 = smul.addr %s1683, 4
        %s1685 = scalar_lea.vmem %s7, %s1684
        %p1686 = pneg %p202
        %p1687 = pneg %p199
        %p1688 = scmp.lt.s32.totalorder %s113, 1
        %s1689 = scalar_select %p1688, %s113, 1
        %s1690 = smul.addr %s1689, 4
        %s1691 = smul.addr %s1690, 4
        %s1692 = scalar_lea.vmem %s9, %s1691
        %p1693 = pneg %p228
        %p1694 = pneg %p225
        %p1695 = scmp.lt.s32.totalorder %s113, 1
        %s1696 = scalar_select %p1695, %s113, 1
        %s1697 = scalar_lea.vmem %s11, %s1696
        %p1698 = pneg %p254
        %p1699 = pneg %p251
        %s1700 = sand.u32 %s113, 1
        %s1701 = scalar_lea.sflag [#allocation6], %s1700
        %s1702 = sand.u32 %s267, 1
        %s1703 = scalar_lea.vmem [#allocation5], %s1702
        %p1704 = pneg %p280
        %p1705 = pneg %p277
        %s1706 = sand.u32 %s113, 1
        %s1707 = scalar_lea.sflag [#allocation6], %s1706
        %s1708 = sand.u32 %s293, 1
        %s1709 = scalar_lea.vmem [#allocation7], %s1708
        %p1710 = pneg %p306
        %p1711 = pneg %p303
        %p1712 = scmp.lt.s32.totalorder %s113, 1
        %s1713 = scalar_select %p1712, %s113, 1
        %s1714 = smul.addr %s1713, 4
        %s1715 = smul.addr %s1714, 4
        %s1716 = scalar_lea.vmem %s17, %s1715
        %p1717 = pneg %p332
        %p1718 = pneg %p329
        %s1719 = sand.u32 %s113, 1
        %s1720 = scalar_lea.sflag [#allocation9], %s1719
        %s1721 = sand.u32 %s345, 1
        %s1722 = scalar_lea.vmem [#allocation8], %s1721
        %p1723 = pneg %p358
        %p1724 = pneg %p355
        %p1725 = scmp.lt.s32.totalorder %s113, 1
        %s1726 = scalar_select %p1725, %s113, 1
        %s1727 = smul.addr %s1726, 4
        %s1728 = smul.addr %s1727, 4
        %s1729 = scalar_lea.vmem %s21, %s1728
        %p1730 = pneg %p384
        %p1731 = pneg %p381
        %p1732 = scmp.lt.s32.totalorder %s113, 1
        %s1733 = scalar_select %p1732, %s113, 1
        %s1734 = smul.addr %s1733, 4
        %s1735 = smul.addr %s1734, 4
        %s1736 = scalar_lea.vmem %s23, %s1735
        %p1737 = pneg %p410
        %p1738 = pneg %p407
        %p1739 = scmp.lt.s32.totalorder %s113, 1
        %s1740 = scalar_select %p1739, %s113, 1
        %s1741 = smul.addr %s1740, 4
        %s1742 = smul.addr %s1741, 4
        %s1743 = scalar_lea.vmem %s25, %s1742
        %p1744 = pneg %p436
        %p1745 = pneg %p433
        %s1746 = sand.u32 %s113, 1
        %s1747 = scalar_lea.sflag [#allocation9], %s1746
        %s1748 = sand.u32 %s449, 1
        %s1749 = scalar_lea.vmem [#allocation10], %s1748
        %p1750 = pneg %p462
        %p1751 = pneg %p459
        %s1752 = sand.u32 %s113, 1
        %s1753 = scalar_lea.sflag [#allocation12], %s1752
        %s1754 = sand.u32 %s475, 1
        %s1755 = scalar_lea.vmem [#allocation11], %s1754
        %p1756 = pneg %p488
        %p1757 = pneg %p485
        %s1758 = sand.u32 %s113, 1
        %s1759 = scalar_lea.sflag [#allocation12], %s1758
        %s1760 = sand.u32 %s501, 1
        %s1761 = scalar_lea.vmem [#allocation13], %s1760
        %p1762 = pneg %p514
        %p1763 = pneg %p511
        %p1764 = scmp.lt.s32.totalorder %s113, 1
        %s1765 = scalar_select %p1764, %s113, 1
        %s1766 = smul.addr %s1765, 4
        %s1767 = smul.addr %s1766, 4
        %s1768 = scalar_lea.vmem %s33, %s1767
        %p1769 = pneg %p540
        %p1770 = pneg %p537
        %s1771 = sand.u32 %s113, 1
        %s1772 = scalar_lea.sflag [#allocation15], %s1771
        %s1773 = sand.u32 %s553, 1
        %s1774 = scalar_lea.vmem [#allocation14], %s1773
        %p1775 = pneg %p566
        %p1776 = pneg %p563
        %s1777 = sand.u32 %s113, 1
        %s1778 = scalar_lea.sflag [#allocation15], %s1777
        %s1779 = sand.u32 %s579, 1
        %s1780 = smul.addr %s1779, 8
        %s1781 = scalar_lea.vmem [#allocation16], %s1780
        %p1782 = pneg %p592
        %p1783 = pneg %p589
        %s1784 = sand.u32 %s113, 1
        %s1785 = scalar_lea.sflag [#allocation18], %s1784
        %s1786 = sand.u32 %s605, 1
        %s1787 = smul.addr %s1786, 8
        %s1788 = scalar_lea.vmem [#allocation17], %s1787
        %p1789 = pneg %p618
        %p1790 = pneg %p615
        %s1791 = sand.u32 %s113, 1
        %s1792 = scalar_lea.sflag [#allocation18], %s1791
        %s1793 = sand.u32 %s631, 1
        %s1794 = smul.addr %s1793, 16
        %s1795 = scalar_lea.vmem [#allocation19], %s1794
        %p1796 = pneg %p644
        %p1797 = pneg %p641
        %s1798 = sand.u32 %s113, 1
        %s1799 = scalar_lea.sflag [#allocation21], %s1798
        %s1800 = sand.u32 %s657, 1
        %s1801 = smul.addr %s1800, 16
        %s1802 = scalar_lea.vmem [#allocation20], %s1801
        %p1803 = pneg %p670
        %p1804 = pneg %p667
        %s1805 = sand.u32 %s113, 1
        %s1806 = scalar_lea.sflag [#allocation21], %s1805
        %s1807 = sand.u32 %s683, 1
        %s1808 = smul.addr %s1807, 16
        %s1809 = scalar_lea.vmem [#allocation22], %s1808
        %p1810 = pneg %p696
        %p1811 = pneg %p693
        %s1812 = sand.u32 %s113, 1
        %s1813 = scalar_lea.sflag [#allocation24], %s1812
        %s1814 = sand.u32 %s709, 1
        %s1815 = scalar_lea.vmem [#allocation23], %s1814
        %p1816 = pneg %p722
        %p1817 = pneg %p719
        %p1818 = scmp.lt.s32.totalorder %s113, 1
        %s1819 = scalar_select %p1818, %s113, 1
        %s1820 = smul.addr %s1819, 16
        %s1821 = smul.addr %s1820, 4
        %s1822 = scalar_lea.vmem %s49, %s1821
        %p1823 = pneg %p748
        %p1824 = pneg %p745
        %p1825 = scmp.lt.s32.totalorder %s113, 1
        %s1826 = scalar_select %p1825, %s113, 1
        %s1827 = scalar_lea.vmem %s51, %s1826
        %p1828 = pneg %p774
        %p1829 = pneg %p771
        %s1830 = sand.u32 %s113, 1
        %s1831 = scalar_lea.sflag [#allocation24], %s1830
        %s1832 = sand.u32 %s787, 1
        %s1833 = smul.addr %s1832, 16
        %s1834 = scalar_lea.vmem [#allocation25], %s1833
        %p1835 = pneg %p800
        %p1836 = pneg %p797
        %p1837 = scmp.lt.s32.totalorder %s113, 1
        %s1838 = scalar_select %p1837, %s113, 1
        %s1839 = scalar_lea.vmem %s55, %s1838
        %p1840 = pneg %p826
        %p1841 = pneg %p823
        %p1842 = scmp.lt.s32.totalorder %s113, 1
        %s1843 = scalar_select %p1842, %s113, 1
        %s1844 = smul.addr %s1843, 16
        %s1845 = smul.addr %s1844, 4
        %s1846 = scalar_lea.vmem %s57, %s1845
        %p1847 = pneg %p852
        %p1848 = pneg %p849
        %p1849 = scmp.lt.s32.totalorder %s113, 1
        %s1850 = scalar_select %p1849, %s113, 1
        %s1851 = scalar_lea.vmem %s59, %s1850
        %p1852 = pneg %p878
        %p1853 = pneg %p875
        %p1854 = scmp.lt.s32.totalorder %s113, 1
        %s1855 = scalar_select %p1854, %s113, 1
        %s1856 = smul.addr %s1855, 8
        %s1857 = scalar_lea.vmem %s61, %s1856
        %p1858 = pneg %p904
        %p1859 = pneg %p901
        %s1860 = sand.u32 %s113, 1
        %s1861 = scalar_lea.sflag [#allocation27], %s1860
        %s1862 = sand.u32 %s917, 1
        %s1863 = smul.addr %s1862, 8
        %s1864 = scalar_lea.vmem [#allocation26], %s1863
        %p1865 = pneg %p930
        %p1866 = pneg %p927
        %s1867 = sand.u32 %s113, 1
        %s1868 = scalar_lea.sflag [#allocation27], %s1867
        %s1869 = sand.u32 %s943, 1
        %s1870 = smul.addr %s1869, 16
        %s1871 = scalar_lea.vmem [#allocation28], %s1870
        %p1872 = pneg %p956
        %p1873 = pneg %p953
        %s1874 = sand.u32 %s969, 1
        %s1875 = scalar_lea.sflag [#allocation30], %s1874
        %s1876 = sand.u32 %s969, 1
        %s1877 = smul.addr %s1876, 16
        %s1878 = scalar_lea.vmem [#allocation29], %s1877
        %p1879 = pneg %p982
        %p1880 = pneg %p979
        %p1881 = pneg %p1003
        %p1882 = pneg %p1000
        %p1883 = pneg %p1024
        %p1884 = pneg %p1021
        %p1885 = scmp.lt.s32.totalorder %s113, 1
        %s1886 = scalar_select %p1885, %s113, 1
        %s1887 = smul.addr %s1886, 4
        %s1888 = smul.addr %s1887, 4
        %s1889 = scalar_lea.vmem %s5, %s1888
        %p1890 = scmp.lt.s32.totalorder %s113, 1
        %s1891 = scalar_select %p1890, %s113, 1
        %s1892 = smul.addr %s1891, 4
        %s1893 = smul.addr %s1892, 4
        %s1894 = scalar_lea.vmem %s7, %s1893
        %p1895 = scmp.lt.s32.totalorder %s113, 1
        %s1896 = scalar_select %p1895, %s113, 1
        %s1897 = smul.addr %s1896, 4
        %s1898 = smul.addr %s1897, 4
        %s1899 = scalar_lea.vmem %s9, %s1898
        %p1900 = scmp.lt.s32.totalorder %s113, 1
        %s1901 = scalar_select %p1900, %s113, 1
        %s1902 = scalar_lea.vmem %s11, %s1901
        %p1903 = scmp.lt.s32.totalorder %s113, 1
        %s1904 = scalar_select %p1903, %s113, 1
        %s1905 = smul.addr %s1904, 4
        %s1906 = smul.addr %s1905, 4
        %s1907 = scalar_lea.vmem %s17, %s1906
        %p1908 = scmp.lt.s32.totalorder %s113, 1
        %s1909 = scalar_select %p1908, %s113, 1
        %s1910 = smul.addr %s1909, 4
        %s1911 = smul.addr %s1910, 4
        %s1912 = scalar_lea.vmem %s21, %s1911
        %p1913 = scmp.lt.s32.totalorder %s113, 1
        %s1914 = scalar_select %p1913, %s113, 1
        %s1915 = smul.addr %s1914, 4
        %s1916 = smul.addr %s1915, 4
        %s1917 = scalar_lea.vmem %s23, %s1916
        %p1918 = scmp.lt.s32.totalorder %s113, 1
        %s1919 = scalar_select %p1918, %s113, 1
        %s1920 = smul.addr %s1919, 4
        %s1921 = smul.addr %s1920, 4
        %s1922 = scalar_lea.vmem %s25, %s1921
        %p1923 = scmp.lt.s32.totalorder %s113, 1
        %s1924 = scalar_select %p1923, %s113, 1
        %s1925 = smul.addr %s1924, 4
        %s1926 = smul.addr %s1925, 4
        %s1927 = scalar_lea.vmem %s33, %s1926
        %p1928 = scmp.lt.s32.totalorder %s113, 1
        %s1929 = scalar_select %p1928, %s113, 1
        %s1930 = smul.addr %s1929, 16
        %s1931 = smul.addr %s1930, 4
        %s1932 = scalar_lea.vmem %s49, %s1931
        %p1933 = scmp.lt.s32.totalorder %s113, 1
        %s1934 = scalar_select %p1933, %s113, 1
        %s1935 = scalar_lea.vmem %s51, %s1934
        %p1936 = scmp.lt.s32.totalorder %s113, 1
        %s1937 = scalar_select %p1936, %s113, 1
        %s1938 = scalar_lea.vmem %s55, %s1937
        %p1939 = scmp.lt.s32.totalorder %s113, 1
        %s1940 = scalar_select %p1939, %s113, 1
        %s1941 = smul.addr %s1940, 16
        %s1942 = smul.addr %s1941, 4
        %s1943 = scalar_lea.vmem %s57, %s1942
        %p1944 = scmp.lt.s32.totalorder %s113, 1
        %s1945 = scalar_select %p1944, %s113, 1
        %s1946 = scalar_lea.vmem %s59, %s1945
        %p1947 = scmp.lt.s32.totalorder %s113, 1
        %s1948 = scalar_select %p1947, %s113, 1
        %s1949 = smul.addr %s1948, 8
        %s1950 = scalar_lea.vmem %s61, %s1949
        %p1952 = scmp.eq.s32.totalorder %s113, 0
        // Predicated region
        $region229: #{tpu_custom_call.1} parent=155 // pred_check
          %p1953 = pneg %p1952
        $region230: #{tpu_custom_call.1} parent=155 // pred_check_branch
          %1955 = sbr.rel (%p1953) target = $region232
        $region231: #{tpu_custom_call.1} parent=155 // pred_region
          %v1956 = vld [vmem:[#allocation2] sm:$0xff]
          %v1957 = vld [vmem:[#allocation2 + $0x8] sm:$0xff]
          %vm1958 = vcmask 261120
          %1959 = vst.msk [vmem:[#allocation31] sm:$0xff] %vm1958, %v1956
          %1960 = vst.msk [vmem:[#allocation31 + $0x8] sm:$0xff] %vm1958, %v1957
          %v1961 = vld [vmem:[%s3] sm:$0xff]
          %v1962 = vld [vmem:[%s3 + $0x8] sm:$0xff]
          %v1963 = vld [vmem:[%s3 + $0x10] sm:$0xff]
          %v1964 = vld [vmem:[%s3 + $0x18] sm:$0xff]
          %1965 = vst.msk [vmem:[#allocation32] sm:$0xff] %vm1958, %v1961
          %1966 = vst.msk [vmem:[#allocation32 + $0x8] sm:$0xff] %vm1958, %v1962
          %1967 = vst.msk [vmem:[#allocation32 + $0x10] sm:$0xff] %vm1958, %v1963
          %1968 = vst.msk [vmem:[#allocation32 + $0x18] sm:$0xff] %vm1958, %v1964
        $region232: #{tpu_custom_call.1} parent=155 // pred_fallthru
          _
        %v1969 = vld [vmem:[#allocation31] sm:$0xff]
        %v1970 = vld [vmem:[#allocation31 + $0x8] sm:$0xff]
        %v1971 = vld [vmem:[#allocation32] sm:$0xff]
        %v1972 = vld [vmem:[#allocation32 + $0x8] sm:$0xff]
        %v1973 = vld [vmem:[#allocation32 + $0x10] sm:$0xff]
        %v1974 = vld [vmem:[#allocation32 + $0x18] sm:$0xff]
        %v1975 = vpack.c.bf16 %v1970, %v1969
        %v1976 = vpack.c.bf16 %v1972, %v1971
        %v1977 = vpack.c.bf16 %v1974, %v1973
        %v1978 = vld [vmem:[%s1889] sm:$0xf]
        %v1979 = vld [vmem:[%s1889 + $0x4] sm:$0xf]
        %v1980 = vld [vmem:[%s1889 + $0x8] sm:$0xf]
        %v1981 = vld [vmem:[%s1889 + $0xc] sm:$0xf]
        %v1982 = vld [vmem:[%s1902] sm:$0x1]
        %v1984 = vperm.slane %v1982, 0
        %v1990 = vunpack.c.l.b16 %v1978
        %v1991 = vunpack.c.l.b16 %v1979
        %v1992 = vunpack.c.l.b16 %v1980
        %v1993 = vunpack.c.l.b16 %v1981
        %v1994 = vpack.c.b16 %v1991, %v1990
        %v1995 = vpack.c.b16 %v1993, %v1992
        %vm1998 = vcmask 261120
        %v2000 = vsel %vm1998, %v1975, 0
        %2002 = vmatpush.bf16.msra.mxu0 0
        %2003 = vmatpush.bf16.msra.mxu0 0
        %2004 = vmatpush.bf16.msra.mxu0 0
        %2005 = vmatpush.bf16.msra.mxu0 0
        %2006 = vmatpush.bf16.msra.mxu0 0
        %2007 = vmatpush.bf16.msra.mxu0 0
        %2008 = vmatpush.bf16.msra.mxu0 %v1995
        %2009 = vmatpush.bf16.msra.mxu0 %v1994
        %2010 = vmatmul.bf16.gmra.mxu0 %v2000
        %v2011 = vpop.f32.mrf.mxu0
        %v2012 = vadd.f32 %v1984, %v2011
        %v2013 = vpop.f32.mrf.mxu0
        %v2014 = vadd.f32 %v1984, %v2013
        %2015 = vdwg.mxu0
        %v2016 = vld [vmem:[%s1894] sm:$0xf]
        %v2017 = vld [vmem:[%s1894 + $0x4] sm:$0xf]
        %v2018 = vld [vmem:[%s1894 + $0x8] sm:$0xf]
        %v2019 = vld [vmem:[%s1894 + $0xc] sm:$0xf]
        %v2020 = vld [vmem:[%s1511] sm:$0x1]
        %v2022 = vperm.slane %v2020, 0
        %v2028 = vunpack.c.l.b16 %v2016
        %v2029 = vunpack.c.l.b16 %v2017
        %v2030 = vunpack.c.l.b16 %v2018
        %v2031 = vunpack.c.l.b16 %v2019
        %v2032 = vpack.c.b16 %v2029, %v2028
        %v2033 = vpack.c.b16 %v2031, %v2030
        %v2037 = vsel %vm1998, %v1976, 0
        %v2040 = vsel %vm1998, %v1977, 0
        %2042 = vmatpush.bf16.msra.mxu0 0
        %2043 = vmatpush.bf16.msra.mxu0 0
        %2044 = vmatpush.bf16.msra.mxu0 0
        %2045 = vmatpush.bf16.msra.mxu0 0
        %2046 = vmatpush.bf16.msra.mxu0 0
        %2047 = vmatpush.bf16.msra.mxu0 0
        %2048 = vmatpush.bf16.msra.mxu0 %v2033
        %2049 = vmatpush.bf16.msra.mxu0 %v2032
        %2050 = vmatmul.bf16.gmra.mxu0 %v2037
        %v2051 = vpop.f32.mrf.mxu0
        %v2052 = vadd.f32 %v2022, %v2051
        %v2053 = vpop.f32.mrf.mxu0
        %v2054 = vadd.f32 %v2022, %v2053
        %2055 = vmatmul.bf16.gmra.mxu0 %v2040
        %v2056 = vpop.f32.mrf.mxu0
        %v2057 = vadd.f32 %v2022, %v2056
        %v2058 = vpop.f32.mrf.mxu0
        %v2059 = vadd.f32 %v2022, %v2058
        %2060 = vdwg.mxu0
        %v2061 = vld [vmem:[%s1899] sm:$0xf]
        %v2062 = vld [vmem:[%s1899 + $0x4] sm:$0xf]
        %v2063 = vld [vmem:[%s1899 + $0x8] sm:$0xf]
        %v2064 = vld [vmem:[%s1899 + $0xc] sm:$0xf]
        %v2065 = vld [vmem:[%s1520] sm:$0x1]
        %v2067 = vperm.slane %v2065, 0
        %v2073 = vunpack.c.l.b16 %v2061
        %v2074 = vunpack.c.l.b16 %v2062
        %v2075 = vunpack.c.l.b16 %v2063
        %v2076 = vunpack.c.l.b16 %v2064
        %v2077 = vpack.c.b16 %v2074, %v2073
        %v2078 = vpack.c.b16 %v2076, %v2075
        %2081 = vmatpush.bf16.msra.mxu0 0
        %2082 = vmatpush.bf16.msra.mxu0 0
        %2083 = vmatpush.bf16.msra.mxu0 0
        %2084 = vmatpush.bf16.msra.mxu0 0
        %2085 = vmatpush.bf16.msra.mxu0 0
        %2086 = vmatpush.bf16.msra.mxu0 0
        %2087 = vmatpush.bf16.msra.mxu0 %v2078
        %2088 = vmatpush.bf16.msra.mxu0 %v2077
        %2089 = vmatmul.bf16.gmra.mxu0 %v2037
        %v2090 = vpop.f32.mrf.mxu0
        %v2091 = vadd.f32 %v2067, %v2090
        %v2092 = vpop.f32.mrf.mxu0
        %v2093 = vadd.f32 %v2067, %v2092
        %2094 = vmatmul.bf16.gmra.mxu0 %v2040
        %v2095 = vpop.f32.mrf.mxu0
        %v2096 = vadd.f32 %v2067, %v2095
        %v2097 = vpop.f32.mrf.mxu0
        %v2098 = vadd.f32 %v2067, %v2097
        %2099 = vdwg.mxu0
        %v2100 = vpack.c.bf16 %v2012, %v2012
        %v2101 = vpack.c.bf16 %v2014, %v2014
        %v2102 = vpack.c.bf16 %v2052, %v2052
        %v2103 = vpack.c.bf16 %v2054, %v2054
        %v2104 = vpack.c.bf16 %v2057, %v2057
        %v2105 = vpack.c.bf16 %v2059, %v2059
        %v2106 = vpack.c.bf16 %v2091, %v2091
        %v2107 = vpack.c.bf16 %v2093, %v2093
        %v2108 = vpack.c.bf16 %v2096, %v2096
        %v2109 = vpack.c.bf16 %v2098, %v2098
        %v2112 = vunpack.c.l.b16 %v2102
        %v2113 = vunpack.c.l.b16 %v2103
        %v2114 = vpack.c.b16 %v2113, %v2112
        %vm2115 = vcmask 64512
        %v2117 = vsel %vm2115, %v2100, 0
        %v2120 = vsel %vm2115, %v2114, 0
        %2122 = vmatpush.bf16.xpose.msra.mxu0 0
        %2123 = vmatpush.bf16.xpose.msra.mxu0 0
        %2124 = vmatpush.bf16.xpose.msra.mxu0 0
        %2125 = vmatpush.bf16.xpose.msra.mxu0 0
        %2126 = vmatpush.bf16.xpose.msra.mxu0 0
        %2127 = vmatpush.bf16.xpose.msra.mxu0 0
        %2128 = vmatpush.bf16.xpose.msra.mxu0 0
        %2129 = vmatpush.bf16.xpose.msra.mxu0 %v2120
        %2130 = vmatmul.bf16.gmra.mxu0 %v2117
        %v2131 = vpop.f32.mrf.mxu0
        %v2132 = vadd.f32 0.0, %v2131
        %v2133 = vpop.f32.mrf.mxu0
        %2134 = vdwg.mxu0
        %v2137 = vunpack.c.l.b16 %v2104
        %v2138 = vunpack.c.l.b16 %v2105
        %v2139 = vpack.c.b16 %v2138, %v2137
        %v2141 = vsel %vm2115, %v2101, 0
        %v2144 = vsel %vm2115, %v2139, 0
        %2146 = vmatpush.bf16.xpose.msra.mxu0 0
        %2147 = vmatpush.bf16.xpose.msra.mxu0 0
        %2148 = vmatpush.bf16.xpose.msra.mxu0 0
        %2149 = vmatpush.bf16.xpose.msra.mxu0 0
        %2150 = vmatpush.bf16.xpose.msra.mxu0 0
        %2151 = vmatpush.bf16.xpose.msra.mxu0 0
        %2152 = vmatpush.bf16.xpose.msra.mxu0 0
        %2153 = vmatpush.bf16.xpose.msra.mxu0 %v2144
        %2154 = vmatmul.bf16.gmra.mxu0 %v2141
        %v2155 = vpop.f32.mrf.mxu0
        %v2156 = vadd.f32 0.0, %v2155
        %v2157 = vpop.f32.mrf.mxu0
        %2158 = vdwg.mxu0
        %vm2159 = vcmask 130048
        %v2160 = vsel %vm2159, %v2132, -inf
        %2161 = vmax.xlane.f32.xlu0 %v2160
        %v2162 = vpop.xlane.xlu0 %2161
        %v2163 = vsel %vm2159, %v2156, -inf
        %2164 = vmax.xlane.f32.xlu0 %v2163
        %v2165 = vpop.xlane.xlu0 %2164
        %v2166 = vsub.f32 %v2132, %v2162
        %v2167 = vsub.f32 %v2156, %v2165
        %v2168 = vmul.f32 %v2166, 1.442695
        %v2169 = vpow.pop %v2168
        %v2170 = vmul.f32 %v2167, 1.442695
        %v2171 = vpow.pop %v2170
        %v2172 = vsel %vm2159, %v2169, 0.0
        %2173 = vadd.xlane.f32.xlu0 %v2172
        %v2174 = vpop.xlane.xlu0 %2173
        %v2175 = vsel %vm2159, %v2171, 0.0
        %2176 = vadd.xlane.f32.xlu0 %v2175
        %v2177 = vpop.xlane.xlu0 %2176
        %v2178 = vrcp.pop %v2174
        %v2179 = vmul.f32 %v2174, %v2178
        %v2180 = vsub.f32 1.0, %v2179
        %v2181 = vmul.f32 %v2178, %v2180
        %v2182 = vadd.f32 %v2178, %v2181
        %vm2183 = vweird.f32 %v2174
        %vm2184 = vweird.f32 %v2178
        %vm2185 = vmor %vm2183, %vm2184
        %v2186 = vsel %vm2185, %v2178, %v2182
        %v2187 = vand.u32 2147483647, %v2174
        %vm2188 = vcmp.eq.f32.partialorder %v2187, 8.507059e+37
        %v2189 = vand.u32 %v2174, 2147483648
        %v2190 = vor.u32 1.1754944e-38, %v2189
        %v2191 = vsel %vm2188, %v2190, %v2186
        %v2192 = vrcp.pop %v2177
        %v2193 = vmul.f32 %v2177, %v2192
        %v2194 = vsub.f32 1.0, %v2193
        %v2195 = vmul.f32 %v2192, %v2194
        %v2196 = vadd.f32 %v2192, %v2195
        %vm2197 = vweird.f32 %v2177
        %vm2198 = vweird.f32 %v2192
        %vm2199 = vmor %vm2197, %vm2198
        %v2200 = vsel %vm2199, %v2192, %v2196
        %v2201 = vand.u32 2147483647, %v2177
        %vm2202 = vcmp.eq.f32.partialorder %v2201, 8.507059e+37
        %v2203 = vand.u32 %v2177, 2147483648
        %v2204 = vor.u32 1.1754944e-38, %v2203
        %v2205 = vsel %vm2202, %v2204, %v2200
        %v2206 = vmul.f32 %v2169, %v2191
        %v2207 = vmul.f32 %v2171, %v2205
        %v2208 = vpack.c.bf16 %v2206, %v2206
        %v2209 = vpack.c.bf16 %v2207, %v2207
        %v2212 = vunpack.c.l.b16 %v2106
        %v2213 = vunpack.c.l.b16 %v2107
        %v2214 = vpack.c.b16 %v2213, %v2212
        %v2217 = vsel %vm2159, %v2208, 0
        %2219 = vmatpush.bf16.msra.mxu0 0
        %2220 = vmatpush.bf16.msra.mxu0 0
        %2221 = vmatpush.bf16.msra.mxu0 0
        %2222 = vmatpush.bf16.msra.mxu0 0
        %2223 = vmatpush.bf16.msra.mxu0 0
        %2224 = vmatpush.bf16.msra.mxu0 0
        %2225 = vmatpush.bf16.msra.mxu0 0
        %2226 = vmatpush.bf16.msra.mxu0 %v2214
        %2227 = vmatmul.bf16.gmra.mxu0 %v2217
        %v2228 = vpop.f32.mrf.mxu0
        %v2229 = vadd.f32 0.0, %v2228
        %v2230 = vpop.f32.mrf.mxu0
        %2231 = vdwg.mxu0
        %v2234 = vunpack.c.l.b16 %v2108
        %v2235 = vunpack.c.l.b16 %v2109
        %v2236 = vpack.c.b16 %v2235, %v2234
        %v2239 = vsel %vm2159, %v2209, 0
        %2241 = vmatpush.bf16.msra.mxu0 0
        %2242 = vmatpush.bf16.msra.mxu0 0
        %2243 = vmatpush.bf16.msra.mxu0 0
        %2244 = vmatpush.bf16.msra.mxu0 0
        %2245 = vmatpush.bf16.msra.mxu0 0
        %2246 = vmatpush.bf16.msra.mxu0 0
        %2247 = vmatpush.bf16.msra.mxu0 0
        %2248 = vmatpush.bf16.msra.mxu0 %v2236
        %2249 = vmatmul.bf16.gmra.mxu0 %v2239
        %v2250 = vpop.f32.mrf.mxu0
        %v2251 = vadd.f32 0.0, %v2250
        %v2252 = vpop.f32.mrf.mxu0
        %2253 = vdwg.mxu0
        %v2255 = vunpack.c.l.b16 %v2100
        %v2256 = vpack.c.b16 %v2255, %v2255
        %2257 = vrot.lane.b32.xlu0 %v2256, 120
        %v2258 = vpop.permute.xlu0 %2257
        %2259 = vrot.lane.b32.xlu0 %v2114, 120
        %v2260 = vpop.permute.xlu0 %2259
        %v2262 = vsel %vm2115, %v2258, 0
        %v2265 = vsel %vm2115, %v2260, 0
        %2267 = vmatpush.bf16.xpose.msra.mxu0 0
        %2268 = vmatpush.bf16.xpose.msra.mxu0 0
        %2269 = vmatpush.bf16.xpose.msra.mxu0 0
        %2270 = vmatpush.bf16.xpose.msra.mxu0 0
        %2271 = vmatpush.bf16.xpose.msra.mxu0 0
        %2272 = vmatpush.bf16.xpose.msra.mxu0 0
        %2273 = vmatpush.bf16.xpose.msra.mxu0 0
        %2274 = vmatpush.bf16.xpose.msra.mxu0 %v2265
        %2275 = vmatmul.bf16.gmra.mxu0 %v2262
        %v2276 = vpop.f32.mrf.mxu0
        %v2277 = vadd.f32 0.0, %v2276
        %v2278 = vpop.f32.mrf.mxu0
        %2279 = vdwg.mxu0
        %v2281 = vunpack.c.l.b16 %v2101
        %v2282 = vpack.c.b16 %v2281, %v2281
        %2283 = vrot.lane.b32.xlu0 %v2282, 120
        %v2284 = vpop.permute.xlu0 %2283
        %2285 = vrot.lane.b32.xlu0 %v2139, 120
        %v2286 = vpop.permute.xlu0 %2285
        %v2288 = vsel %vm2115, %v2284, 0
        %v2291 = vsel %vm2115, %v2286, 0
        %2293 = vmatpush.bf16.xpose.msra.mxu0 0
        %2294 = vmatpush.bf16.xpose.msra.mxu0 0
        %2295 = vmatpush.bf16.xpose.msra.mxu0 0
        %2296 = vmatpush.bf16.xpose.msra.mxu0 0
        %2297 = vmatpush.bf16.xpose.msra.mxu0 0
        %2298 = vmatpush.bf16.xpose.msra.mxu0 0
        %2299 = vmatpush.bf16.xpose.msra.mxu0 0
        %2300 = vmatpush.bf16.xpose.msra.mxu0 %v2291
        %2301 = vmatmul.bf16.gmra.mxu0 %v2288
        %v2302 = vpop.f32.mrf.mxu0
        %v2303 = vadd.f32 0.0, %v2302
        %v2304 = vpop.f32.mrf.mxu0
        %2305 = vdwg.mxu0
        %v2306 = vsel %vm2159, %v2277, -inf
        %2307 = vmax.xlane.f32.xlu0 %v2306
        %v2308 = vpop.xlane.xlu0 %2307
        %v2309 = vsel %vm2159, %v2303, -inf
        %2310 = vmax.xlane.f32.xlu0 %v2309
        %v2311 = vpop.xlane.xlu0 %2310
        %v2312 = vsub.f32 %v2277, %v2308
        %v2313 = vsub.f32 %v2303, %v2311
        %v2314 = vmul.f32 %v2312, 1.442695
        %v2315 = vpow.pop %v2314
        %v2316 = vmul.f32 %v2313, 1.442695
        %v2317 = vpow.pop %v2316
        %v2318 = vsel %vm2159, %v2315, 0.0
        %2319 = vadd.xlane.f32.xlu0 %v2318
        %v2320 = vpop.xlane.xlu0 %2319
        %v2321 = vsel %vm2159, %v2317, 0.0
        %2322 = vadd.xlane.f32.xlu0 %v2321
        %v2323 = vpop.xlane.xlu0 %2322
        %v2324 = vrcp.pop %v2320
        %v2325 = vmul.f32 %v2320, %v2324
        %v2326 = vsub.f32 1.0, %v2325
        %v2327 = vmul.f32 %v2324, %v2326
        %v2328 = vadd.f32 %v2324, %v2327
        %vm2329 = vweird.f32 %v2320
        %vm2330 = vweird.f32 %v2324
        %vm2331 = vmor %vm2329, %vm2330
        %v2332 = vsel %vm2331, %v2324, %v2328
        %v2333 = vand.u32 2147483647, %v2320
        %vm2334 = vcmp.eq.f32.partialorder %v2333, 8.507059e+37
        %v2335 = vand.u32 %v2320, 2147483648
        %v2336 = vor.u32 1.1754944e-38, %v2335
        %v2337 = vsel %vm2334, %v2336, %v2332
        %v2338 = vrcp.pop %v2323
        %v2339 = vmul.f32 %v2323, %v2338
        %v2340 = vsub.f32 1.0, %v2339
        %v2341 = vmul.f32 %v2338, %v2340
        %v2342 = vadd.f32 %v2338, %v2341
        %vm2343 = vweird.f32 %v2323
        %vm2344 = vweird.f32 %v2338
        %vm2345 = vmor %vm2343, %vm2344
        %v2346 = vsel %vm2345, %v2338, %v2342
        %v2347 = vand.u32 2147483647, %v2323
        %vm2348 = vcmp.eq.f32.partialorder %v2347, 8.507059e+37
        %v2349 = vand.u32 %v2323, 2147483648
        %v2350 = vor.u32 1.1754944e-38, %v2349
        %v2351 = vsel %vm2348, %v2350, %v2346
        %v2352 = vmul.f32 %v2315, %v2337
        %v2353 = vmul.f32 %v2317, %v2351
        %v2354 = vpack.c.bf16 %v2352, %v2352
        %v2355 = vpack.c.bf16 %v2353, %v2353
        %2356 = vrot.lane.b32.xlu0 %v2214, 120
        %v2357 = vpop.permute.xlu0 %2356
        %v2360 = vsel %vm2159, %v2354, 0
        %2362 = vmatpush.bf16.msra.mxu0 0
        %2363 = vmatpush.bf16.msra.mxu0 0
        %2364 = vmatpush.bf16.msra.mxu0 0
        %2365 = vmatpush.bf16.msra.mxu0 0
        %2366 = vmatpush.bf16.msra.mxu0 0
        %2367 = vmatpush.bf16.msra.mxu0 0
        %2368 = vmatpush.bf16.msra.mxu0 0
        %2369 = vmatpush.bf16.msra.mxu0 %v2357
        %2370 = vmatmul.bf16.gmra.mxu0 %v2360
        %v2371 = vpop.f32.mrf.mxu0
        %v2372 = vadd.f32 0.0, %v2371
        %v2373 = vpop.f32.mrf.mxu0
        %2374 = vdwg.mxu0
        %2375 = vrot.lane.b32.xlu0 %v2236, 120
        %v2376 = vpop.permute.xlu0 %2375
        %v2379 = vsel %vm2159, %v2355, 0
        %2381 = vmatpush.bf16.msra.mxu0 0
        %2382 = vmatpush.bf16.msra.mxu0 0
        %2383 = vmatpush.bf16.msra.mxu0 0
        %2384 = vmatpush.bf16.msra.mxu0 0
        %2385 = vmatpush.bf16.msra.mxu0 0
        %2386 = vmatpush.bf16.msra.mxu0 0
        %2387 = vmatpush.bf16.msra.mxu0 0
        %2388 = vmatpush.bf16.msra.mxu0 %v2376
        %2389 = vmatmul.bf16.gmra.mxu0 %v2379
        %v2390 = vpop.f32.mrf.mxu0
        %v2391 = vadd.f32 0.0, %v2390
        %v2392 = vpop.f32.mrf.mxu0
        %2393 = vdwg.mxu0
        %2394 = vrot.lane.b32.xlu0 %v2256, 112
        %v2395 = vpop.permute.xlu0 %2394
        %2396 = vrot.lane.b32.xlu0 %v2114, 112
        %v2397 = vpop.permute.xlu0 %2396
        %v2399 = vsel %vm2115, %v2395, 0
        %v2402 = vsel %vm2115, %v2397, 0
        %2404 = vmatpush.bf16.xpose.msra.mxu0 0
        %2405 = vmatpush.bf16.xpose.msra.mxu0 0
        %2406 = vmatpush.bf16.xpose.msra.mxu0 0
        %2407 = vmatpush.bf16.xpose.msra.mxu0 0
        %2408 = vmatpush.bf16.xpose.msra.mxu0 0
        %2409 = vmatpush.bf16.xpose.msra.mxu0 0
        %2410 = vmatpush.bf16.xpose.msra.mxu0 0
        %2411 = vmatpush.bf16.xpose.msra.mxu0 %v2402
        %2412 = vmatmul.bf16.gmra.mxu0 %v2399
        %v2413 = vpop.f32.mrf.mxu0
        %v2414 = vadd.f32 0.0, %v2413
        %v2415 = vpop.f32.mrf.mxu0
        %2416 = vdwg.mxu0
        %2417 = vrot.lane.b32.xlu0 %v2282, 112
        %v2418 = vpop.permute.xlu0 %2417
        %2419 = vrot.lane.b32.xlu0 %v2139, 112
        %v2420 = vpop.permute.xlu0 %2419
        %v2422 = vsel %vm2115, %v2418, 0
        %v2425 = vsel %vm2115, %v2420, 0
        %2427 = vmatpush.bf16.xpose.msra.mxu0 0
        %2428 = vmatpush.bf16.xpose.msra.mxu0 0
        %2429 = vmatpush.bf16.xpose.msra.mxu0 0
        %2430 = vmatpush.bf16.xpose.msra.mxu0 0
        %2431 = vmatpush.bf16.xpose.msra.mxu0 0
        %2432 = vmatpush.bf16.xpose.msra.mxu0 0
        %2433 = vmatpush.bf16.xpose.msra.mxu0 0
        %2434 = vmatpush.bf16.xpose.msra.mxu0 %v2425
        %2435 = vmatmul.bf16.gmra.mxu0 %v2422
        %v2436 = vpop.f32.mrf.mxu0
        %v2437 = vadd.f32 0.0, %v2436
        %v2438 = vpop.f32.mrf.mxu0
        %2439 = vdwg.mxu0
        %v2440 = vsel %vm2159, %v2414, -inf
        %2441 = vmax.xlane.f32.xlu0 %v2440
        %v2442 = vpop.xlane.xlu0 %2441
        %v2443 = vsel %vm2159, %v2437, -inf
        %2444 = vmax.xlane.f32.xlu0 %v2443
        %v2445 = vpop.xlane.xlu0 %2444
        %v2446 = vsub.f32 %v2414, %v2442
        %v2447 = vsub.f32 %v2437, %v2445
        %v2448 = vmul.f32 %v2446, 1.442695
        %v2449 = vpow.pop %v2448
        %v2450 = vmul.f32 %v2447, 1.442695
        %v2451 = vpow.pop %v2450
        %v2452 = vsel %vm2159, %v2449, 0.0
        %2453 = vadd.xlane.f32.xlu0 %v2452
        %v2454 = vpop.xlane.xlu0 %2453
        %v2455 = vsel %vm2159, %v2451, 0.0
        %2456 = vadd.xlane.f32.xlu0 %v2455
        %v2457 = vpop.xlane.xlu0 %2456
        %v2458 = vrcp.pop %v2454
        %v2459 = vmul.f32 %v2454, %v2458
        %v2460 = vsub.f32 1.0, %v2459
        %v2461 = vmul.f32 %v2458, %v2460
        %v2462 = vadd.f32 %v2458, %v2461
        %vm2463 = vweird.f32 %v2454
        %vm2464 = vweird.f32 %v2458
        %vm2465 = vmor %vm2463, %vm2464
        %v2466 = vsel %vm2465, %v2458, %v2462
        %v2467 = vand.u32 2147483647, %v2454
        %vm2468 = vcmp.eq.f32.partialorder %v2467, 8.507059e+37
        %v2469 = vand.u32 %v2454, 2147483648
        %v2470 = vor.u32 1.1754944e-38, %v2469
        %v2471 = vsel %vm2468, %v2470, %v2466
        %v2472 = vrcp.pop %v2457
        %v2473 = vmul.f32 %v2457, %v2472
        %v2474 = vsub.f32 1.0, %v2473
        %v2475 = vmul.f32 %v2472, %v2474
        %v2476 = vadd.f32 %v2472, %v2475
        %vm2477 = vweird.f32 %v2457
        %vm2478 = vweird.f32 %v2472
        %vm2479 = vmor %vm2477, %vm2478
        %v2480 = vsel %vm2479, %v2472, %v2476
        %v2481 = vand.u32 2147483647, %v2457
        %vm2482 = vcmp.eq.f32.partialorder %v2481, 8.507059e+37
        %v2483 = vand.u32 %v2457, 2147483648
        %v2484 = vor.u32 1.1754944e-38, %v2483
        %v2485 = vsel %vm2482, %v2484, %v2480
        %v2486 = vmul.f32 %v2449, %v2471
        %v2487 = vmul.f32 %v2451, %v2485
        %v2488 = vpack.c.bf16 %v2486, %v2486
        %v2489 = vpack.c.bf16 %v2487, %v2487
        %2490 = vrot.lane.b32.xlu0 %v2214, 112
        %v2491 = vpop.permute.xlu0 %2490
        %v2494 = vsel %vm2159, %v2488, 0
        %2496 = vmatpush.bf16.msra.mxu0 0
        %2497 = vmatpush.bf16.msra.mxu0 0
        %2498 = vmatpush.bf16.msra.mxu0 0
        %2499 = vmatpush.bf16.msra.mxu0 0
        %2500 = vmatpush.bf16.msra.mxu0 0
        %2501 = vmatpush.bf16.msra.mxu0 0
        %2502 = vmatpush.bf16.msra.mxu0 0
        %2503 = vmatpush.bf16.msra.mxu0 %v2491
        %2504 = vmatmul.bf16.gmra.mxu0 %v2494
        %v2505 = vpop.f32.mrf.mxu0
        %v2506 = vadd.f32 0.0, %v2505
        %v2507 = vpop.f32.mrf.mxu0
        %2508 = vdwg.mxu0
        %2509 = vrot.lane.b32.xlu0 %v2236, 112
        %v2510 = vpop.permute.xlu0 %2509
        %v2513 = vsel %vm2159, %v2489, 0
        %2515 = vmatpush.bf16.msra.mxu0 0
        %2516 = vmatpush.bf16.msra.mxu0 0
        %2517 = vmatpush.bf16.msra.mxu0 0
        %2518 = vmatpush.bf16.msra.mxu0 0
        %2519 = vmatpush.bf16.msra.mxu0 0
        %2520 = vmatpush.bf16.msra.mxu0 0
        %2521 = vmatpush.bf16.msra.mxu0 0
        %2522 = vmatpush.bf16.msra.mxu0 %v2510
        %2523 = vmatmul.bf16.gmra.mxu0 %v2513
        %v2524 = vpop.f32.mrf.mxu0
        %v2525 = vadd.f32 0.0, %v2524
        %v2526 = vpop.f32.mrf.mxu0
        %2527 = vdwg.mxu0
        %2528 = vrot.lane.b32.xlu0 %v2256, 104
        %v2529 = vpop.permute.xlu0 %2528
        %2530 = vrot.lane.b32.xlu0 %v2114, 104
        %v2531 = vpop.permute.xlu0 %2530
        %v2533 = vsel %vm2115, %v2529, 0
        %v2536 = vsel %vm2115, %v2531, 0
        %2538 = vmatpush.bf16.xpose.msra.mxu0 0
        %2539 = vmatpush.bf16.xpose.msra.mxu0 0
        %2540 = vmatpush.bf16.xpose.msra.mxu0 0
        %2541 = vmatpush.bf16.xpose.msra.mxu0 0
        %2542 = vmatpush.bf16.xpose.msra.mxu0 0
        %2543 = vmatpush.bf16.xpose.msra.mxu0 0
        %2544 = vmatpush.bf16.xpose.msra.mxu0 0
        %2545 = vmatpush.bf16.xpose.msra.mxu0 %v2536
        %2546 = vmatmul.bf16.gmra.mxu0 %v2533
        %v2547 = vpop.f32.mrf.mxu0
        %v2548 = vadd.f32 0.0, %v2547
        %v2549 = vpop.f32.mrf.mxu0
        %2550 = vdwg.mxu0
        %2551 = vrot.lane.b32.xlu0 %v2282, 104
        %v2552 = vpop.permute.xlu0 %2551
        %2553 = vrot.lane.b32.xlu0 %v2139, 104
        %v2554 = vpop.permute.xlu0 %2553
        %v2556 = vsel %vm2115, %v2552, 0
        %v2559 = vsel %vm2115, %v2554, 0
        %2561 = vmatpush.bf16.xpose.msra.mxu0 0
        %2562 = vmatpush.bf16.xpose.msra.mxu0 0
        %2563 = vmatpush.bf16.xpose.msra.mxu0 0
        %2564 = vmatpush.bf16.xpose.msra.mxu0 0
        %2565 = vmatpush.bf16.xpose.msra.mxu0 0
        %2566 = vmatpush.bf16.xpose.msra.mxu0 0
        %2567 = vmatpush.bf16.xpose.msra.mxu0 0
        %2568 = vmatpush.bf16.xpose.msra.mxu0 %v2559
        %2569 = vmatmul.bf16.gmra.mxu0 %v2556
        %v2570 = vpop.f32.mrf.mxu0
        %v2571 = vadd.f32 0.0, %v2570
        %v2572 = vpop.f32.mrf.mxu0
        %2573 = vdwg.mxu0
        %v2574 = vsel %vm2159, %v2548, -inf
        %2575 = vmax.xlane.f32.xlu0 %v2574
        %v2576 = vpop.xlane.xlu0 %2575
        %v2577 = vsel %vm2159, %v2571, -inf
        %2578 = vmax.xlane.f32.xlu0 %v2577
        %v2579 = vpop.xlane.xlu0 %2578
        %v2580 = vsub.f32 %v2548, %v2576
        %v2581 = vsub.f32 %v2571, %v2579
        %v2582 = vmul.f32 %v2580, 1.442695
        %v2583 = vpow.pop %v2582
        %v2584 = vmul.f32 %v2581, 1.442695
        %v2585 = vpow.pop %v2584
        %v2586 = vsel %vm2159, %v2583, 0.0
        %2587 = vadd.xlane.f32.xlu0 %v2586
        %v2588 = vpop.xlane.xlu0 %2587
        %v2589 = vsel %vm2159, %v2585, 0.0
        %2590 = vadd.xlane.f32.xlu0 %v2589
        %v2591 = vpop.xlane.xlu0 %2590
        %v2592 = vrcp.pop %v2588
        %v2593 = vmul.f32 %v2588, %v2592
        %v2594 = vsub.f32 1.0, %v2593
        %v2595 = vmul.f32 %v2592, %v2594
        %v2596 = vadd.f32 %v2592, %v2595
        %vm2597 = vweird.f32 %v2588
        %vm2598 = vweird.f32 %v2592
        %vm2599 = vmor %vm2597, %vm2598
        %v2600 = vsel %vm2599, %v2592, %v2596
        %v2601 = vand.u32 2147483647, %v2588
        %vm2602 = vcmp.eq.f32.partialorder %v2601, 8.507059e+37
        %v2603 = vand.u32 %v2588, 2147483648
        %v2604 = vor.u32 1.1754944e-38, %v2603
        %v2605 = vsel %vm2602, %v2604, %v2600
        %v2606 = vrcp.pop %v2591
        %v2607 = vmul.f32 %v2591, %v2606
        %v2608 = vsub.f32 1.0, %v2607
        %v2609 = vmul.f32 %v2606, %v2608
        %v2610 = vadd.f32 %v2606, %v2609
        %vm2611 = vweird.f32 %v2591
        %vm2612 = vweird.f32 %v2606
        %vm2613 = vmor %vm2611, %vm2612
        %v2614 = vsel %vm2613, %v2606, %v2610
        %v2615 = vand.u32 2147483647, %v2591
        %vm2616 = vcmp.eq.f32.partialorder %v2615, 8.507059e+37
        %v2617 = vand.u32 %v2591, 2147483648
        %v2618 = vor.u32 1.1754944e-38, %v2617
        %v2619 = vsel %vm2616, %v2618, %v2614
        %v2620 = vmul.f32 %v2583, %v2605
        %v2621 = vmul.f32 %v2585, %v2619
        %v2622 = vpack.c.bf16 %v2620, %v2620
        %v2623 = vpack.c.bf16 %v2621, %v2621
        %2624 = vrot.lane.b32.xlu0 %v2214, 104
        %v2625 = vpop.permute.xlu0 %2624
        %v2628 = vsel %vm2159, %v2622, 0
        %2630 = vmatpush.bf16.msra.mxu0 0
        %2631 = vmatpush.bf16.msra.mxu0 0
        %2632 = vmatpush.bf16.msra.mxu0 0
        %2633 = vmatpush.bf16.msra.mxu0 0
        %2634 = vmatpush.bf16.msra.mxu0 0
        %2635 = vmatpush.bf16.msra.mxu0 0
        %2636 = vmatpush.bf16.msra.mxu0 0
        %2637 = vmatpush.bf16.msra.mxu0 %v2625
        %2638 = vmatmul.bf16.gmra.mxu0 %v2628
        %v2639 = vpop.f32.mrf.mxu0
        %v2640 = vadd.f32 0.0, %v2639
        %v2641 = vpop.f32.mrf.mxu0
        %2642 = vdwg.mxu0
        %2643 = vrot.lane.b32.xlu0 %v2236, 104
        %v2644 = vpop.permute.xlu0 %2643
        %v2647 = vsel %vm2159, %v2623, 0
        %2649 = vmatpush.bf16.msra.mxu0 0
        %2650 = vmatpush.bf16.msra.mxu0 0
        %2651 = vmatpush.bf16.msra.mxu0 0
        %2652 = vmatpush.bf16.msra.mxu0 0
        %2653 = vmatpush.bf16.msra.mxu0 0
        %2654 = vmatpush.bf16.msra.mxu0 0
        %2655 = vmatpush.bf16.msra.mxu0 0
        %2656 = vmatpush.bf16.msra.mxu0 %v2644
        %2657 = vmatmul.bf16.gmra.mxu0 %v2647
        %v2658 = vpop.f32.mrf.mxu0
        %v2659 = vadd.f32 0.0, %v2658
        %v2660 = vpop.f32.mrf.mxu0
        %2661 = vdwg.mxu0
        %2664 = vrot.lane.b32.xlu0 %v2372, 8
        %v2665 = vpop.permute.xlu0 %2664
        %2666 = vrot.lane.b32.xlu0 %v2391, 8
        %v2667 = vpop.permute.xlu0 %2666
        %2672 = vrot.lane.b32.xlu0 %v2506, 16
        %v2673 = vpop.permute.xlu0 %2672
        %2674 = vrot.lane.b32.xlu0 %v2525, 16
        %v2675 = vpop.permute.xlu0 %2674
        %2680 = vrot.lane.b32.xlu0 %v2640, 24
        %v2681 = vpop.permute.xlu0 %2680
        %2682 = vrot.lane.b32.xlu0 %v2659, 24
        %v2683 = vpop.permute.xlu0 %2682
        %v2686 = vsel %vm2115, %v2229, %v2665
        %v2687 = vsel %vm2115, %v2251, %v2667
        %v2688 = vsel %vm2159, %v2686, %v2673
        %v2689 = vsel %vm2159, %v2687, %v2675
        %vm2690 = vcmask 195584
        %v2691 = vsel %vm2690, %v2688, %v2681
        %v2692 = vsel %vm2690, %v2689, %v2683
        %v2693 = vpack.c.bf16 %v2692, %v2691
        %v2694 = vld [vmem:[%s1907] sm:$0xf]
        %v2695 = vld [vmem:[%s1907 + $0x4] sm:$0xf]
        %v2696 = vld [vmem:[%s1907 + $0x8] sm:$0xf]
        %v2697 = vld [vmem:[%s1907 + $0xc] sm:$0xf]
        %v2698 = vld [vmem:[%s1529] sm:$0x1]
        %v2700 = vperm.slane %v2698, 0
        %v2706 = vunpack.c.l.b16 %v2694
        %v2707 = vunpack.c.l.b16 %v2695
        %v2708 = vunpack.c.l.b16 %v2696
        %v2709 = vunpack.c.l.b16 %v2697
        %v2710 = vpack.c.b16 %v2707, %v2706
        %v2711 = vpack.c.b16 %v2709, %v2708
        %v2715 = vsel %vm1998, %v2693, 0
        %2717 = vmatpush.bf16.msra.mxu0 0
        %2718 = vmatpush.bf16.msra.mxu0 0
        %2719 = vmatpush.bf16.msra.mxu0 0
        %2720 = vmatpush.bf16.msra.mxu0 0
        %2721 = vmatpush.bf16.msra.mxu0 0
        %2722 = vmatpush.bf16.msra.mxu0 0
        %2723 = vmatpush.bf16.msra.mxu0 %v2711
        %2724 = vmatpush.bf16.msra.mxu0 %v2710
        %2725 = vmatmul.bf16.gmra.mxu0 %v2715
        %v2726 = vpop.f32.mrf.mxu0
        %v2727 = vadd.f32 %v2700, %v2726
        %v2728 = vpop.f32.mrf.mxu0
        %v2729 = vadd.f32 %v2700, %v2728
        %2730 = vdwg.mxu0
        %v2731 = vld [vmem:[%s1912] sm:$0xf]
        %v2732 = vld [vmem:[%s1912 + $0x4] sm:$0xf]
        %v2733 = vld [vmem:[%s1912 + $0x8] sm:$0xf]
        %v2734 = vld [vmem:[%s1912 + $0xc] sm:$0xf]
        %v2735 = vld [vmem:[%s1538] sm:$0x1]
        %v2737 = vperm.slane %v2735, 0
        %v2743 = vunpack.c.l.b16 %v2731
        %v2744 = vunpack.c.l.b16 %v2732
        %v2745 = vunpack.c.l.b16 %v2733
        %v2746 = vunpack.c.l.b16 %v2734
        %v2747 = vpack.c.b16 %v2744, %v2743
        %v2748 = vpack.c.b16 %v2746, %v2745
        %2751 = vmatpush.bf16.msra.mxu0 0
        %2752 = vmatpush.bf16.msra.mxu0 0
        %2753 = vmatpush.bf16.msra.mxu0 0
        %2754 = vmatpush.bf16.msra.mxu0 0
        %2755 = vmatpush.bf16.msra.mxu0 0
        %2756 = vmatpush.bf16.msra.mxu0 0
        %2757 = vmatpush.bf16.msra.mxu0 %v2748
        %2758 = vmatpush.bf16.msra.mxu0 %v2747
        %2759 = vmatmul.bf16.gmra.mxu0 %v2037
        %v2760 = vpop.f32.mrf.mxu0
        %v2761 = vadd.f32 %v2737, %v2760
        %v2762 = vpop.f32.mrf.mxu0
        %v2763 = vadd.f32 %v2737, %v2762
        %2764 = vmatmul.bf16.gmra.mxu0 %v2040
        %v2765 = vpop.f32.mrf.mxu0
        %v2766 = vadd.f32 %v2737, %v2765
        %v2767 = vpop.f32.mrf.mxu0
        %v2768 = vadd.f32 %v2737, %v2767
        %2769 = vdwg.mxu0
        %v2770 = vld [vmem:[%s1917] sm:$0xf]
        %v2771 = vld [vmem:[%s1917 + $0x4] sm:$0xf]
        %v2772 = vld [vmem:[%s1917 + $0x8] sm:$0xf]
        %v2773 = vld [vmem:[%s1917 + $0xc] sm:$0xf]
        %v2774 = vld [vmem:[%s1547] sm:$0x1]
        %v2776 = vperm.slane %v2774, 0
        %v2782 = vunpack.c.l.b16 %v2770
        %v2783 = vunpack.c.l.b16 %v2771
        %v2784 = vunpack.c.l.b16 %v2772
        %v2785 = vunpack.c.l.b16 %v2773
        %v2786 = vpack.c.b16 %v2783, %v2782
        %v2787 = vpack.c.b16 %v2785, %v2784
        %2790 = vmatpush.bf16.msra.mxu0 0
        %2791 = vmatpush.bf16.msra.mxu0 0
        %2792 = vmatpush.bf16.msra.mxu0 0
        %2793 = vmatpush.bf16.msra.mxu0 0
        %2794 = vmatpush.bf16.msra.mxu0 0
        %2795 = vmatpush.bf16.msra.mxu0 0
        %2796 = vmatpush.bf16.msra.mxu0 %v2787
        %2797 = vmatpush.bf16.msra.mxu0 %v2786
        %2798 = vmatmul.bf16.gmra.mxu0 %v2000
        %v2799 = vpop.f32.mrf.mxu0
        %v2800 = vadd.f32 %v2776, %v2799
        %v2801 = vpop.f32.mrf.mxu0
        %v2802 = vadd.f32 %v2776, %v2801
        %2803 = vdwg.mxu0
        %v2804 = vld [vmem:[%s1922] sm:$0xf]
        %v2805 = vld [vmem:[%s1922 + $0x4] sm:$0xf]
        %v2806 = vld [vmem:[%s1922 + $0x8] sm:$0xf]
        %v2807 = vld [vmem:[%s1922 + $0xc] sm:$0xf]
        %v2808 = vld [vmem:[%s1556] sm:$0x1]
        %v2810 = vperm.slane %v2808, 0
        %v2816 = vunpack.c.l.b16 %v2804
        %v2817 = vunpack.c.l.b16 %v2805
        %v2818 = vunpack.c.l.b16 %v2806
        %v2819 = vunpack.c.l.b16 %v2807
        %v2820 = vpack.c.b16 %v2817, %v2816
        %v2821 = vpack.c.b16 %v2819, %v2818
        %2824 = vmatpush.bf16.msra.mxu0 0
        %2825 = vmatpush.bf16.msra.mxu0 0
        %2826 = vmatpush.bf16.msra.mxu0 0
        %2827 = vmatpush.bf16.msra.mxu0 0
        %2828 = vmatpush.bf16.msra.mxu0 0
        %2829 = vmatpush.bf16.msra.mxu0 0
        %2830 = vmatpush.bf16.msra.mxu0 %v2821
        %2831 = vmatpush.bf16.msra.mxu0 %v2820
        %2832 = vmatmul.bf16.gmra.mxu0 %v2000
        %v2833 = vpop.f32.mrf.mxu0
        %v2834 = vadd.f32 %v2810, %v2833
        %v2835 = vpop.f32.mrf.mxu0
        %v2836 = vadd.f32 %v2810, %v2835
        %2837 = vdwg.mxu0
        %v2838 = vpack.c.bf16 %v2761, %v2761
        %v2839 = vpack.c.bf16 %v2763, %v2763
        %v2840 = vpack.c.bf16 %v2766, %v2766
        %v2841 = vpack.c.bf16 %v2768, %v2768
        %v2842 = vpack.c.bf16 %v2800, %v2800
        %v2843 = vpack.c.bf16 %v2802, %v2802
        %v2844 = vpack.c.bf16 %v2834, %v2834
        %v2845 = vpack.c.bf16 %v2836, %v2836
        %v2848 = vunpack.c.l.b16 %v2838
        %v2849 = vunpack.c.l.b16 %v2839
        %v2850 = vpack.c.b16 %v2849, %v2848
        %v2852 = vsel %vm2115, %v2850, 0
        %v2855 = vsel %vm2115, %v2842, 0
        %2857 = vmatpush.bf16.xpose.msra.mxu0 0
        %2858 = vmatpush.bf16.xpose.msra.mxu0 0
        %2859 = vmatpush.bf16.xpose.msra.mxu0 0
        %2860 = vmatpush.bf16.xpose.msra.mxu0 0
        %2861 = vmatpush.bf16.xpose.msra.mxu0 0
        %2862 = vmatpush.bf16.xpose.msra.mxu0 0
        %2863 = vmatpush.bf16.xpose.msra.mxu0 0
        %2864 = vmatpush.bf16.xpose.msra.mxu0 %v2855
        %2865 = vmatmul.bf16.gmra.mxu0 %v2852
        %v2866 = vpop.f32.mrf.mxu0
        %v2867 = vadd.f32 0.0, %v2866
        %v2868 = vpop.f32.mrf.mxu0
        %v2869 = vadd.f32 0.0, %v2868
        %2870 = vdwg.mxu0
        %v2873 = vunpack.c.l.b16 %v2840
        %v2874 = vunpack.c.l.b16 %v2841
        %v2875 = vpack.c.b16 %v2874, %v2873
        %v2877 = vsel %vm2115, %v2875, 0
        %v2880 = vsel %vm2115, %v2843, 0
        %2882 = vmatpush.bf16.xpose.msra.mxu0 0
        %2883 = vmatpush.bf16.xpose.msra.mxu0 0
        %2884 = vmatpush.bf16.xpose.msra.mxu0 0
        %2885 = vmatpush.bf16.xpose.msra.mxu0 0
        %2886 = vmatpush.bf16.xpose.msra.mxu0 0
        %2887 = vmatpush.bf16.xpose.msra.mxu0 0
        %2888 = vmatpush.bf16.xpose.msra.mxu0 0
        %2889 = vmatpush.bf16.xpose.msra.mxu0 %v2880
        %2890 = vmatmul.bf16.gmra.mxu0 %v2877
        %v2891 = vpop.f32.mrf.mxu0
        %v2892 = vadd.f32 0.0, %v2891
        %v2893 = vpop.f32.mrf.mxu0
        %v2894 = vadd.f32 0.0, %v2893
        %2895 = vdwg.mxu0
        %v2896 = vsel %vm2115, %v2867, -inf
        %2897 = vmax.xlane.f32.xlu0 %v2896
        %v2898 = vpop.xlane.xlu0 %2897
        %v2899 = vsel %vm2115, %v2869, -inf
        %2900 = vmax.xlane.f32.xlu0 %v2899
        %v2901 = vpop.xlane.xlu0 %2900
        %v2902 = vsel %vm2115, %v2892, -inf
        %2903 = vmax.xlane.f32.xlu0 %v2902
        %v2904 = vpop.xlane.xlu0 %2903
        %v2905 = vsel %vm2115, %v2894, -inf
        %2906 = vmax.xlane.f32.xlu0 %v2905
        %v2907 = vpop.xlane.xlu0 %2906
        %v2908 = vsub.f32 %v2867, %v2898
        %v2909 = vsub.f32 %v2869, %v2901
        %v2910 = vsub.f32 %v2892, %v2904
        %v2911 = vsub.f32 %v2894, %v2907
        %v2912 = vmul.f32 %v2908, 1.442695
        %v2913 = vpow.pop %v2912
        %v2914 = vmul.f32 %v2909, 1.442695
        %v2915 = vpow.pop %v2914
        %v2916 = vmul.f32 %v2910, 1.442695
        %v2917 = vpow.pop %v2916
        %v2918 = vmul.f32 %v2911, 1.442695
        %v2919 = vpow.pop %v2918
        %v2920 = vsel %vm2115, %v2913, 0.0
        %2921 = vadd.xlane.f32.xlu0 %v2920
        %v2922 = vpop.xlane.xlu0 %2921
        %v2923 = vsel %vm2115, %v2915, 0.0
        %2924 = vadd.xlane.f32.xlu0 %v2923
        %v2925 = vpop.xlane.xlu0 %2924
        %v2926 = vsel %vm2115, %v2917, 0.0
        %2927 = vadd.xlane.f32.xlu0 %v2926
        %v2928 = vpop.xlane.xlu0 %2927
        %v2929 = vsel %vm2115, %v2919, 0.0
        %2930 = vadd.xlane.f32.xlu0 %v2929
        %v2931 = vpop.xlane.xlu0 %2930
        %v2932 = vrcp.pop %v2922
        %v2933 = vmul.f32 %v2922, %v2932
        %v2934 = vsub.f32 1.0, %v2933
        %v2935 = vmul.f32 %v2932, %v2934
        %v2936 = vadd.f32 %v2932, %v2935
        %vm2937 = vweird.f32 %v2922
        %vm2938 = vweird.f32 %v2932
        %vm2939 = vmor %vm2937, %vm2938
        %v2940 = vsel %vm2939, %v2932, %v2936
        %v2941 = vand.u32 2147483647, %v2922
        %vm2942 = vcmp.eq.f32.partialorder %v2941, 8.507059e+37
        %v2943 = vand.u32 %v2922, 2147483648
        %v2944 = vor.u32 1.1754944e-38, %v2943
        %v2945 = vsel %vm2942, %v2944, %v2940
        %v2946 = vrcp.pop %v2925
        %v2947 = vmul.f32 %v2925, %v2946
        %v2948 = vsub.f32 1.0, %v2947
        %v2949 = vmul.f32 %v2946, %v2948
        %v2950 = vadd.f32 %v2946, %v2949
        %vm2951 = vweird.f32 %v2925
        %vm2952 = vweird.f32 %v2946
        %vm2953 = vmor %vm2951, %vm2952
        %v2954 = vsel %vm2953, %v2946, %v2950
        %v2955 = vand.u32 2147483647, %v2925
        %vm2956 = vcmp.eq.f32.partialorder %v2955, 8.507059e+37
        %v2957 = vand.u32 %v2925, 2147483648
        %v2958 = vor.u32 1.1754944e-38, %v2957
        %v2959 = vsel %vm2956, %v2958, %v2954
        %v2960 = vrcp.pop %v2928
        %v2961 = vmul.f32 %v2928, %v2960
        %v2962 = vsub.f32 1.0, %v2961
        %v2963 = vmul.f32 %v2960, %v2962
        %v2964 = vadd.f32 %v2960, %v2963
        %vm2965 = vweird.f32 %v2928
        %vm2966 = vweird.f32 %v2960
        %vm2967 = vmor %vm2965, %vm2966
        %v2968 = vsel %vm2967, %v2960, %v2964
        %v2969 = vand.u32 2147483647, %v2928
        %vm2970 = vcmp.eq.f32.partialorder %v2969, 8.507059e+37
        %v2971 = vand.u32 %v2928, 2147483648
        %v2972 = vor.u32 1.1754944e-38, %v2971
        %v2973 = vsel %vm2970, %v2972, %v2968
        %v2974 = vrcp.pop %v2931
        %v2975 = vmul.f32 %v2931, %v2974
        %v2976 = vsub.f32 1.0, %v2975
        %v2977 = vmul.f32 %v2974, %v2976
        %v2978 = vadd.f32 %v2974, %v2977
        %vm2979 = vweird.f32 %v2931
        %vm2980 = vweird.f32 %v2974
        %vm2981 = vmor %vm2979, %vm2980
        %v2982 = vsel %vm2981, %v2974, %v2978
        %v2983 = vand.u32 2147483647, %v2931
        %vm2984 = vcmp.eq.f32.partialorder %v2983, 8.507059e+37
        %v2985 = vand.u32 %v2931, 2147483648
        %v2986 = vor.u32 1.1754944e-38, %v2985
        %v2987 = vsel %vm2984, %v2986, %v2982
        %v2988 = vmul.f32 %v2913, %v2945
        %v2989 = vmul.f32 %v2915, %v2959
        %v2990 = vmul.f32 %v2917, %v2973
        %v2991 = vmul.f32 %v2919, %v2987
        %v2992 = vpack.c.bf16 %v2988, %v2988
        %v2993 = vpack.c.bf16 %v2989, %v2989
        %v2994 = vpack.c.bf16 %v2990, %v2990
        %v2995 = vpack.c.bf16 %v2991, %v2991
        %v2998 = vunpack.c.l.b16 %v2992
        %v2999 = vunpack.c.l.b16 %v2993
        %v3000 = vpack.c.b16 %v2999, %v2998
        %v3002 = vsel %vm2115, %v3000, 0
        %vm3004 = vcmask 1043456
        %v3006 = vsel %vm3004, %v2844, 0
        %3008 = vmatpush.bf16.msra.mxu0 0
        %3009 = vmatpush.bf16.msra.mxu0 0
        %3010 = vmatpush.bf16.msra.mxu0 0
        %3011 = vmatpush.bf16.msra.mxu0 0
        %3012 = vmatpush.bf16.msra.mxu0 0
        %3013 = vmatpush.bf16.msra.mxu0 0
        %3014 = vmatpush.bf16.msra.mxu0 0
        %3015 = vmatpush.bf16.msra.mxu0 %v3006
        %3016 = vmatmul.bf16.gmra.mxu0 %v3002
        %v3017 = vpop.f32.mrf.mxu0
        %v3018 = vadd.f32 0.0, %v3017
        %v3019 = vpop.f32.mrf.mxu0
        %v3020 = vadd.f32 0.0, %v3019
        %3021 = vdwg.mxu0
        %v3024 = vunpack.c.l.b16 %v2994
        %v3025 = vunpack.c.l.b16 %v2995
        %v3026 = vpack.c.b16 %v3025, %v3024
        %v3028 = vsel %vm2115, %v3026, 0
        %v3031 = vsel %vm3004, %v2845, 0
        %3033 = vmatpush.bf16.msra.mxu0 0
        %3034 = vmatpush.bf16.msra.mxu0 0
        %3035 = vmatpush.bf16.msra.mxu0 0
        %3036 = vmatpush.bf16.msra.mxu0 0
        %3037 = vmatpush.bf16.msra.mxu0 0
        %3038 = vmatpush.bf16.msra.mxu0 0
        %3039 = vmatpush.bf16.msra.mxu0 0
        %3040 = vmatpush.bf16.msra.mxu0 %v3031
        %3041 = vmatmul.bf16.gmra.mxu0 %v3028
        %v3042 = vpop.f32.mrf.mxu0
        %v3043 = vadd.f32 0.0, %v3042
        %v3044 = vpop.f32.mrf.mxu0
        %v3045 = vadd.f32 0.0, %v3044
        %3046 = vdwg.mxu0
        %3047 = vrot.lane.b32.xlu0 %v2850, 120
        %v3048 = vpop.permute.xlu0 %3047
        %v3050 = vunpack.c.l.b16 %v2842
        %v3051 = vpack.c.b16 %v3050, %v3050
        %3052 = vrot.lane.b32.xlu0 %v3051, 120
        %v3053 = vpop.permute.xlu0 %3052
        %v3055 = vsel %vm2115, %v3048, 0
        %v3058 = vsel %vm2115, %v3053, 0
        %3060 = vmatpush.bf16.xpose.msra.mxu0 0
        %3061 = vmatpush.bf16.xpose.msra.mxu0 0
        %3062 = vmatpush.bf16.xpose.msra.mxu0 0
        %3063 = vmatpush.bf16.xpose.msra.mxu0 0
        %3064 = vmatpush.bf16.xpose.msra.mxu0 0
        %3065 = vmatpush.bf16.xpose.msra.mxu0 0
        %3066 = vmatpush.bf16.xpose.msra.mxu0 0
        %3067 = vmatpush.bf16.xpose.msra.mxu0 %v3058
        %3068 = vmatmul.bf16.gmra.mxu0 %v3055
        %v3069 = vpop.f32.mrf.mxu0
        %v3070 = vadd.f32 0.0, %v3069
        %v3071 = vpop.f32.mrf.mxu0
        %v3072 = vadd.f32 0.0, %v3071
        %3073 = vdwg.mxu0
        %3074 = vrot.lane.b32.xlu0 %v2875, 120
        %v3075 = vpop.permute.xlu0 %3074
        %v3077 = vunpack.c.l.b16 %v2843
        %v3078 = vpack.c.b16 %v3077, %v3077
        %3079 = vrot.lane.b32.xlu0 %v3078, 120
        %v3080 = vpop.permute.xlu0 %3079
        %v3082 = vsel %vm2115, %v3075, 0
        %v3085 = vsel %vm2115, %v3080, 0
        %3087 = vmatpush.bf16.xpose.msra.mxu0 0
        %3088 = vmatpush.bf16.xpose.msra.mxu0 0
        %3089 = vmatpush.bf16.xpose.msra.mxu0 0
        %3090 = vmatpush.bf16.xpose.msra.mxu0 0
        %3091 = vmatpush.bf16.xpose.msra.mxu0 0
        %3092 = vmatpush.bf16.xpose.msra.mxu0 0
        %3093 = vmatpush.bf16.xpose.msra.mxu0 0
        %3094 = vmatpush.bf16.xpose.msra.mxu0 %v3085
        %3095 = vmatmul.bf16.gmra.mxu0 %v3082
        %v3096 = vpop.f32.mrf.mxu0
        %v3097 = vadd.f32 0.0, %v3096
        %v3098 = vpop.f32.mrf.mxu0
        %v3099 = vadd.f32 0.0, %v3098
        %3100 = vdwg.mxu0
        %v3101 = vsel %vm2115, %v3070, -inf
        %3102 = vmax.xlane.f32.xlu0 %v3101
        %v3103 = vpop.xlane.xlu0 %3102
        %v3104 = vsel %vm2115, %v3072, -inf
        %3105 = vmax.xlane.f32.xlu0 %v3104
        %v3106 = vpop.xlane.xlu0 %3105
        %v3107 = vsel %vm2115, %v3097, -inf
        %3108 = vmax.xlane.f32.xlu0 %v3107
        %v3109 = vpop.xlane.xlu0 %3108
        %v3110 = vsel %vm2115, %v3099, -inf
        %3111 = vmax.xlane.f32.xlu0 %v3110
        %v3112 = vpop.xlane.xlu0 %3111
        %v3113 = vsub.f32 %v3070, %v3103
        %v3114 = vsub.f32 %v3072, %v3106
        %v3115 = vsub.f32 %v3097, %v3109
        %v3116 = vsub.f32 %v3099, %v3112
        %v3117 = vmul.f32 %v3113, 1.442695
        %v3118 = vpow.pop %v3117
        %v3119 = vmul.f32 %v3114, 1.442695
        %v3120 = vpow.pop %v3119
        %v3121 = vmul.f32 %v3115, 1.442695
        %v3122 = vpow.pop %v3121
        %v3123 = vmul.f32 %v3116, 1.442695
        %v3124 = vpow.pop %v3123
        %v3125 = vsel %vm2115, %v3118, 0.0
        %3126 = vadd.xlane.f32.xlu0 %v3125
        %v3127 = vpop.xlane.xlu0 %3126
        %v3128 = vsel %vm2115, %v3120, 0.0
        %3129 = vadd.xlane.f32.xlu0 %v3128
        %v3130 = vpop.xlane.xlu0 %3129
        %v3131 = vsel %vm2115, %v3122, 0.0
        %3132 = vadd.xlane.f32.xlu0 %v3131
        %v3133 = vpop.xlane.xlu0 %3132
        %v3134 = vsel %vm2115, %v3124, 0.0
        %3135 = vadd.xlane.f32.xlu0 %v3134
        %v3136 = vpop.xlane.xlu0 %3135
        %v3137 = vrcp.pop %v3127
        %v3138 = vmul.f32 %v3127, %v3137
        %v3139 = vsub.f32 1.0, %v3138
        %v3140 = vmul.f32 %v3137, %v3139
        %v3141 = vadd.f32 %v3137, %v3140
        %vm3142 = vweird.f32 %v3127
        %vm3143 = vweird.f32 %v3137
        %vm3144 = vmor %vm3142, %vm3143
        %v3145 = vsel %vm3144, %v3137, %v3141
        %v3146 = vand.u32 2147483647, %v3127
        %vm3147 = vcmp.eq.f32.partialorder %v3146, 8.507059e+37
        %v3148 = vand.u32 %v3127, 2147483648
        %v3149 = vor.u32 1.1754944e-38, %v3148
        %v3150 = vsel %vm3147, %v3149, %v3145
        %v3151 = vrcp.pop %v3130
        %v3152 = vmul.f32 %v3130, %v3151
        %v3153 = vsub.f32 1.0, %v3152
        %v3154 = vmul.f32 %v3151, %v3153
        %v3155 = vadd.f32 %v3151, %v3154
        %vm3156 = vweird.f32 %v3130
        %vm3157 = vweird.f32 %v3151
        %vm3158 = vmor %vm3156, %vm3157
        %v3159 = vsel %vm3158, %v3151, %v3155
        %v3160 = vand.u32 2147483647, %v3130
        %vm3161 = vcmp.eq.f32.partialorder %v3160, 8.507059e+37
        %v3162 = vand.u32 %v3130, 2147483648
        %v3163 = vor.u32 1.1754944e-38, %v3162
        %v3164 = vsel %vm3161, %v3163, %v3159
        %v3165 = vrcp.pop %v3133
        %v3166 = vmul.f32 %v3133, %v3165
        %v3167 = vsub.f32 1.0, %v3166
        %v3168 = vmul.f32 %v3165, %v3167
        %v3169 = vadd.f32 %v3165, %v3168
        %vm3170 = vweird.f32 %v3133
        %vm3171 = vweird.f32 %v3165
        %vm3172 = vmor %vm3170, %vm3171
        %v3173 = vsel %vm3172, %v3165, %v3169
        %v3174 = vand.u32 2147483647, %v3133
        %vm3175 = vcmp.eq.f32.partialorder %v3174, 8.507059e+37
        %v3176 = vand.u32 %v3133, 2147483648
        %v3177 = vor.u32 1.1754944e-38, %v3176
        %v3178 = vsel %vm3175, %v3177, %v3173
        %v3179 = vrcp.pop %v3136
        %v3180 = vmul.f32 %v3136, %v3179
        %v3181 = vsub.f32 1.0, %v3180
        %v3182 = vmul.f32 %v3179, %v3181
        %v3183 = vadd.f32 %v3179, %v3182
        %vm3184 = vweird.f32 %v3136
        %vm3185 = vweird.f32 %v3179
        %vm3186 = vmor %vm3184, %vm3185
        %v3187 = vsel %vm3186, %v3179, %v3183
        %v3188 = vand.u32 2147483647, %v3136
        %vm3189 = vcmp.eq.f32.partialorder %v3188, 8.507059e+37
        %v3190 = vand.u32 %v3136, 2147483648
        %v3191 = vor.u32 1.1754944e-38, %v3190
        %v3192 = vsel %vm3189, %v3191, %v3187
        %v3193 = vmul.f32 %v3118, %v3150
        %v3194 = vmul.f32 %v3120, %v3164
        %v3195 = vmul.f32 %v3122, %v3178
        %v3196 = vmul.f32 %v3124, %v3192
        %v3197 = vpack.c.bf16 %v3193, %v3193
        %v3198 = vpack.c.bf16 %v3194, %v3194
        %v3199 = vpack.c.bf16 %v3195, %v3195
        %v3200 = vpack.c.bf16 %v3196, %v3196
        %v3203 = vunpack.c.l.b16 %v3197
        %v3204 = vunpack.c.l.b16 %v3198
        %v3205 = vpack.c.b16 %v3204, %v3203
        %v3207 = vunpack.c.l.b16 %v2844
        %v3208 = vpack.c.b16 %v3207, %v3207
        %3209 = vrot.lane.b32.xlu0 %v3208, 120
        %v3210 = vpop.permute.xlu0 %3209
        %v3212 = vsel %vm2115, %v3205, 0
        %v3215 = vsel %vm3004, %v3210, 0
        %3217 = vmatpush.bf16.msra.mxu0 0
        %3218 = vmatpush.bf16.msra.mxu0 0
        %3219 = vmatpush.bf16.msra.mxu0 0
        %3220 = vmatpush.bf16.msra.mxu0 0
        %3221 = vmatpush.bf16.msra.mxu0 0
        %3222 = vmatpush.bf16.msra.mxu0 0
        %3223 = vmatpush.bf16.msra.mxu0 0
        %3224 = vmatpush.bf16.msra.mxu0 %v3215
        %3225 = vmatmul.bf16.gmra.mxu0 %v3212
        %v3226 = vpop.f32.mrf.mxu0
        %v3227 = vadd.f32 0.0, %v3226
        %v3228 = vpop.f32.mrf.mxu0
        %v3229 = vadd.f32 0.0, %v3228
        %3230 = vdwg.mxu0
        %v3233 = vunpack.c.l.b16 %v3199
        %v3234 = vunpack.c.l.b16 %v3200
        %v3235 = vpack.c.b16 %v3234, %v3233
        %v3237 = vunpack.c.l.b16 %v2845
        %v3238 = vpack.c.b16 %v3237, %v3237
        %3239 = vrot.lane.b32.xlu0 %v3238, 120
        %v3240 = vpop.permute.xlu0 %3239
        %v3242 = vsel %vm2115, %v3235, 0
        %v3245 = vsel %vm3004, %v3240, 0
        %3247 = vmatpush.bf16.msra.mxu0 0
        %3248 = vmatpush.bf16.msra.mxu0 0
        %3249 = vmatpush.bf16.msra.mxu0 0
        %3250 = vmatpush.bf16.msra.mxu0 0
        %3251 = vmatpush.bf16.msra.mxu0 0
        %3252 = vmatpush.bf16.msra.mxu0 0
        %3253 = vmatpush.bf16.msra.mxu0 0
        %3254 = vmatpush.bf16.msra.mxu0 %v3245
        %3255 = vmatmul.bf16.gmra.mxu0 %v3242
        %v3256 = vpop.f32.mrf.mxu0
        %v3257 = vadd.f32 0.0, %v3256
        %v3258 = vpop.f32.mrf.mxu0
        %v3259 = vadd.f32 0.0, %v3258
        %3260 = vdwg.mxu0
        %3261 = vrot.lane.b32.xlu0 %v2850, 112
        %v3262 = vpop.permute.xlu0 %3261
        %3263 = vrot.lane.b32.xlu0 %v3051, 112
        %v3264 = vpop.permute.xlu0 %3263
        %v3266 = vsel %vm2115, %v3262, 0
        %v3269 = vsel %vm2115, %v3264, 0
        %3271 = vmatpush.bf16.xpose.msra.mxu0 0
        %3272 = vmatpush.bf16.xpose.msra.mxu0 0
        %3273 = vmatpush.bf16.xpose.msra.mxu0 0
        %3274 = vmatpush.bf16.xpose.msra.mxu0 0
        %3275 = vmatpush.bf16.xpose.msra.mxu0 0
        %3276 = vmatpush.bf16.xpose.msra.mxu0 0
        %3277 = vmatpush.bf16.xpose.msra.mxu0 0
        %3278 = vmatpush.bf16.xpose.msra.mxu0 %v3269
        %3279 = vmatmul.bf16.gmra.mxu0 %v3266
        %v3280 = vpop.f32.mrf.mxu0
        %v3281 = vadd.f32 0.0, %v3280
        %v3282 = vpop.f32.mrf.mxu0
        %v3283 = vadd.f32 0.0, %v3282
        %3284 = vdwg.mxu0
        %3285 = vrot.lane.b32.xlu0 %v2875, 112
        %v3286 = vpop.permute.xlu0 %3285
        %3287 = vrot.lane.b32.xlu0 %v3078, 112
        %v3288 = vpop.permute.xlu0 %3287
        %v3290 = vsel %vm2115, %v3286, 0
        %v3293 = vsel %vm2115, %v3288, 0
        %3295 = vmatpush.bf16.xpose.msra.mxu0 0
        %3296 = vmatpush.bf16.xpose.msra.mxu0 0
        %3297 = vmatpush.bf16.xpose.msra.mxu0 0
        %3298 = vmatpush.bf16.xpose.msra.mxu0 0
        %3299 = vmatpush.bf16.xpose.msra.mxu0 0
        %3300 = vmatpush.bf16.xpose.msra.mxu0 0
        %3301 = vmatpush.bf16.xpose.msra.mxu0 0
        %3302 = vmatpush.bf16.xpose.msra.mxu0 %v3293
        %3303 = vmatmul.bf16.gmra.mxu0 %v3290
        %v3304 = vpop.f32.mrf.mxu0
        %v3305 = vadd.f32 0.0, %v3304
        %v3306 = vpop.f32.mrf.mxu0
        %v3307 = vadd.f32 0.0, %v3306
        %3308 = vdwg.mxu0
        %v3309 = vsel %vm2115, %v3281, -inf
        %3310 = vmax.xlane.f32.xlu0 %v3309
        %v3311 = vpop.xlane.xlu0 %3310
        %v3312 = vsel %vm2115, %v3283, -inf
        %3313 = vmax.xlane.f32.xlu0 %v3312
        %v3314 = vpop.xlane.xlu0 %3313
        %v3315 = vsel %vm2115, %v3305, -inf
        %3316 = vmax.xlane.f32.xlu0 %v3315
        %v3317 = vpop.xlane.xlu0 %3316
        %v3318 = vsel %vm2115, %v3307, -inf
        %3319 = vmax.xlane.f32.xlu0 %v3318
        %v3320 = vpop.xlane.xlu0 %3319
        %v3321 = vsub.f32 %v3281, %v3311
        %v3322 = vsub.f32 %v3283, %v3314
        %v3323 = vsub.f32 %v3305, %v3317
        %v3324 = vsub.f32 %v3307, %v3320
        %v3325 = vmul.f32 %v3321, 1.442695
        %v3326 = vpow.pop %v3325
        %v3327 = vmul.f32 %v3322, 1.442695
        %v3328 = vpow.pop %v3327
        %v3329 = vmul.f32 %v3323, 1.442695
        %v3330 = vpow.pop %v3329
        %v3331 = vmul.f32 %v3324, 1.442695
        %v3332 = vpow.pop %v3331
        %v3333 = vsel %vm2115, %v3326, 0.0
        %3334 = vadd.xlane.f32.xlu0 %v3333
        %v3335 = vpop.xlane.xlu0 %3334
        %v3336 = vsel %vm2115, %v3328, 0.0
        %3337 = vadd.xlane.f32.xlu0 %v3336
        %v3338 = vpop.xlane.xlu0 %3337
        %v3339 = vsel %vm2115, %v3330, 0.0
        %3340 = vadd.xlane.f32.xlu0 %v3339
        %v3341 = vpop.xlane.xlu0 %3340
        %v3342 = vsel %vm2115, %v3332, 0.0
        %3343 = vadd.xlane.f32.xlu0 %v3342
        %v3344 = vpop.xlane.xlu0 %3343
        %v3345 = vrcp.pop %v3335
        %v3346 = vmul.f32 %v3335, %v3345
        %v3347 = vsub.f32 1.0, %v3346
        %v3348 = vmul.f32 %v3345, %v3347
        %v3349 = vadd.f32 %v3345, %v3348
        %vm3350 = vweird.f32 %v3335
        %vm3351 = vweird.f32 %v3345
        %vm3352 = vmor %vm3350, %vm3351
        %v3353 = vsel %vm3352, %v3345, %v3349
        %v3354 = vand.u32 2147483647, %v3335
        %vm3355 = vcmp.eq.f32.partialorder %v3354, 8.507059e+37
        %v3356 = vand.u32 %v3335, 2147483648
        %v3357 = vor.u32 1.1754944e-38, %v3356
        %v3358 = vsel %vm3355, %v3357, %v3353
        %v3359 = vrcp.pop %v3338
        %v3360 = vmul.f32 %v3338, %v3359
        %v3361 = vsub.f32 1.0, %v3360
        %v3362 = vmul.f32 %v3359, %v3361
        %v3363 = vadd.f32 %v3359, %v3362
        %vm3364 = vweird.f32 %v3338
        %vm3365 = vweird.f32 %v3359
        %vm3366 = vmor %vm3364, %vm3365
        %v3367 = vsel %vm3366, %v3359, %v3363
        %v3368 = vand.u32 2147483647, %v3338
        %vm3369 = vcmp.eq.f32.partialorder %v3368, 8.507059e+37
        %v3370 = vand.u32 %v3338, 2147483648
        %v3371 = vor.u32 1.1754944e-38, %v3370
        %v3372 = vsel %vm3369, %v3371, %v3367
        %v3373 = vrcp.pop %v3341
        %v3374 = vmul.f32 %v3341, %v3373
        %v3375 = vsub.f32 1.0, %v3374
        %v3376 = vmul.f32 %v3373, %v3375
        %v3377 = vadd.f32 %v3373, %v3376
        %vm3378 = vweird.f32 %v3341
        %vm3379 = vweird.f32 %v3373
        %vm3380 = vmor %vm3378, %vm3379
        %v3381 = vsel %vm3380, %v3373, %v3377
        %v3382 = vand.u32 2147483647, %v3341
        %vm3383 = vcmp.eq.f32.partialorder %v3382, 8.507059e+37
        %v3384 = vand.u32 %v3341, 2147483648
        %v3385 = vor.u32 1.1754944e-38, %v3384
        %v3386 = vsel %vm3383, %v3385, %v3381
        %v3387 = vrcp.pop %v3344
        %v3388 = vmul.f32 %v3344, %v3387
        %v3389 = vsub.f32 1.0, %v3388
        %v3390 = vmul.f32 %v3387, %v3389
        %v3391 = vadd.f32 %v3387, %v3390
        %vm3392 = vweird.f32 %v3344
        %vm3393 = vweird.f32 %v3387
        %vm3394 = vmor %vm3392, %vm3393
        %v3395 = vsel %vm3394, %v3387, %v3391
        %v3396 = vand.u32 2147483647, %v3344
        %vm3397 = vcmp.eq.f32.partialorder %v3396, 8.507059e+37
        %v3398 = vand.u32 %v3344, 2147483648
        %v3399 = vor.u32 1.1754944e-38, %v3398
        %v3400 = vsel %vm3397, %v3399, %v3395
        %v3401 = vmul.f32 %v3326, %v3358
        %v3402 = vmul.f32 %v3328, %v3372
        %v3403 = vmul.f32 %v3330, %v3386
        %v3404 = vmul.f32 %v3332, %v3400
        %v3405 = vpack.c.bf16 %v3401, %v3401
        %v3406 = vpack.c.bf16 %v3402, %v3402
        %v3407 = vpack.c.bf16 %v3403, %v3403
        %v3408 = vpack.c.bf16 %v3404, %v3404
        %v3411 = vunpack.c.l.b16 %v3405
        %v3412 = vunpack.c.l.b16 %v3406
        %v3413 = vpack.c.b16 %v3412, %v3411
        %3414 = vrot.lane.b32.xlu0 %v3208, 112
        %v3415 = vpop.permute.xlu0 %3414
        %v3417 = vsel %vm2115, %v3413, 0
        %v3420 = vsel %vm3004, %v3415, 0
        %3422 = vmatpush.bf16.msra.mxu0 0
        %3423 = vmatpush.bf16.msra.mxu0 0
        %3424 = vmatpush.bf16.msra.mxu0 0
        %3425 = vmatpush.bf16.msra.mxu0 0
        %3426 = vmatpush.bf16.msra.mxu0 0
        %3427 = vmatpush.bf16.msra.mxu0 0
        %3428 = vmatpush.bf16.msra.mxu0 0
        %3429 = vmatpush.bf16.msra.mxu0 %v3420
        %3430 = vmatmul.bf16.gmra.mxu0 %v3417
        %v3431 = vpop.f32.mrf.mxu0
        %v3432 = vadd.f32 0.0, %v3431
        %v3433 = vpop.f32.mrf.mxu0
        %v3434 = vadd.f32 0.0, %v3433
        %3435 = vdwg.mxu0
        %v3438 = vunpack.c.l.b16 %v3407
        %v3439 = vunpack.c.l.b16 %v3408
        %v3440 = vpack.c.b16 %v3439, %v3438
        %3441 = vrot.lane.b32.xlu0 %v3238, 112
        %v3442 = vpop.permute.xlu0 %3441
        %v3444 = vsel %vm2115, %v3440, 0
        %v3447 = vsel %vm3004, %v3442, 0
        %3449 = vmatpush.bf16.msra.mxu0 0
        %3450 = vmatpush.bf16.msra.mxu0 0
        %3451 = vmatpush.bf16.msra.mxu0 0
        %3452 = vmatpush.bf16.msra.mxu0 0
        %3453 = vmatpush.bf16.msra.mxu0 0
        %3454 = vmatpush.bf16.msra.mxu0 0
        %3455 = vmatpush.bf16.msra.mxu0 0
        %3456 = vmatpush.bf16.msra.mxu0 %v3447
        %3457 = vmatmul.bf16.gmra.mxu0 %v3444
        %v3458 = vpop.f32.mrf.mxu0
        %v3459 = vadd.f32 0.0, %v3458
        %v3460 = vpop.f32.mrf.mxu0
        %v3461 = vadd.f32 0.0, %v3460
        %3462 = vdwg.mxu0
        %3463 = vrot.lane.b32.xlu0 %v2850, 104
        %v3464 = vpop.permute.xlu0 %3463
        %3465 = vrot.lane.b32.xlu0 %v3051, 104
        %v3466 = vpop.permute.xlu0 %3465
        %v3468 = vsel %vm2115, %v3464, 0
        %v3471 = vsel %vm2115, %v3466, 0
        %3473 = vmatpush.bf16.xpose.msra.mxu0 0
        %3474 = vmatpush.bf16.xpose.msra.mxu0 0
        %3475 = vmatpush.bf16.xpose.msra.mxu0 0
        %3476 = vmatpush.bf16.xpose.msra.mxu0 0
        %3477 = vmatpush.bf16.xpose.msra.mxu0 0
        %3478 = vmatpush.bf16.xpose.msra.mxu0 0
        %3479 = vmatpush.bf16.xpose.msra.mxu0 0
        %3480 = vmatpush.bf16.xpose.msra.mxu0 %v3471
        %3481 = vmatmul.bf16.gmra.mxu0 %v3468
        %v3482 = vpop.f32.mrf.mxu0
        %v3483 = vadd.f32 0.0, %v3482
        %v3484 = vpop.f32.mrf.mxu0
        %v3485 = vadd.f32 0.0, %v3484
        %3486 = vdwg.mxu0
        %3487 = vrot.lane.b32.xlu0 %v2875, 104
        %v3488 = vpop.permute.xlu0 %3487
        %3489 = vrot.lane.b32.xlu0 %v3078, 104
        %v3490 = vpop.permute.xlu0 %3489
        %v3492 = vsel %vm2115, %v3488, 0
        %v3495 = vsel %vm2115, %v3490, 0
        %3497 = vmatpush.bf16.xpose.msra.mxu0 0
        %3498 = vmatpush.bf16.xpose.msra.mxu0 0
        %3499 = vmatpush.bf16.xpose.msra.mxu0 0
        %3500 = vmatpush.bf16.xpose.msra.mxu0 0
        %3501 = vmatpush.bf16.xpose.msra.mxu0 0
        %3502 = vmatpush.bf16.xpose.msra.mxu0 0
        %3503 = vmatpush.bf16.xpose.msra.mxu0 0
        %3504 = vmatpush.bf16.xpose.msra.mxu0 %v3495
        %3505 = vmatmul.bf16.gmra.mxu0 %v3492
        %v3506 = vpop.f32.mrf.mxu0
        %v3507 = vadd.f32 0.0, %v3506
        %v3508 = vpop.f32.mrf.mxu0
        %v3509 = vadd.f32 0.0, %v3508
        %3510 = vdwg.mxu0
        %v3511 = vsel %vm2115, %v3483, -inf
        %3512 = vmax.xlane.f32.xlu0 %v3511
        %v3513 = vpop.xlane.xlu0 %3512
        %v3514 = vsel %vm2115, %v3485, -inf
        %3515 = vmax.xlane.f32.xlu0 %v3514
        %v3516 = vpop.xlane.xlu0 %3515
        %v3517 = vsel %vm2115, %v3507, -inf
        %3518 = vmax.xlane.f32.xlu0 %v3517
        %v3519 = vpop.xlane.xlu0 %3518
        %v3520 = vsel %vm2115, %v3509, -inf
        %3521 = vmax.xlane.f32.xlu0 %v3520
        %v3522 = vpop.xlane.xlu0 %3521
        %v3523 = vsub.f32 %v3483, %v3513
        %v3524 = vsub.f32 %v3485, %v3516
        %v3525 = vsub.f32 %v3507, %v3519
        %v3526 = vsub.f32 %v3509, %v3522
        %v3527 = vmul.f32 %v3523, 1.442695
        %v3528 = vpow.pop %v3527
        %v3529 = vmul.f32 %v3524, 1.442695
        %v3530 = vpow.pop %v3529
        %v3531 = vmul.f32 %v3525, 1.442695
        %v3532 = vpow.pop %v3531
        %v3533 = vmul.f32 %v3526, 1.442695
        %v3534 = vpow.pop %v3533
        %v3535 = vsel %vm2115, %v3528, 0.0
        %3536 = vadd.xlane.f32.xlu0 %v3535
        %v3537 = vpop.xlane.xlu0 %3536
        %v3538 = vsel %vm2115, %v3530, 0.0
        %3539 = vadd.xlane.f32.xlu0 %v3538
        %v3540 = vpop.xlane.xlu0 %3539
        %v3541 = vsel %vm2115, %v3532, 0.0
        %3542 = vadd.xlane.f32.xlu0 %v3541
        %v3543 = vpop.xlane.xlu0 %3542
        %v3544 = vsel %vm2115, %v3534, 0.0
        %3545 = vadd.xlane.f32.xlu0 %v3544
        %v3546 = vpop.xlane.xlu0 %3545
        %v3547 = vrcp.pop %v3537
        %v3548 = vmul.f32 %v3537, %v3547
        %v3549 = vsub.f32 1.0, %v3548
        %v3550 = vmul.f32 %v3547, %v3549
        %v3551 = vadd.f32 %v3547, %v3550
        %vm3552 = vweird.f32 %v3537
        %vm3553 = vweird.f32 %v3547
        %vm3554 = vmor %vm3552, %vm3553
        %v3555 = vsel %vm3554, %v3547, %v3551
        %v3556 = vand.u32 2147483647, %v3537
        %vm3557 = vcmp.eq.f32.partialorder %v3556, 8.507059e+37
        %v3558 = vand.u32 %v3537, 2147483648
        %v3559 = vor.u32 1.1754944e-38, %v3558
        %v3560 = vsel %vm3557, %v3559, %v3555
        %v3561 = vrcp.pop %v3540
        %v3562 = vmul.f32 %v3540, %v3561
        %v3563 = vsub.f32 1.0, %v3562
        %v3564 = vmul.f32 %v3561, %v3563
        %v3565 = vadd.f32 %v3561, %v3564
        %vm3566 = vweird.f32 %v3540
        %vm3567 = vweird.f32 %v3561
        %vm3568 = vmor %vm3566, %vm3567
        %v3569 = vsel %vm3568, %v3561, %v3565
        %v3570 = vand.u32 2147483647, %v3540
        %vm3571 = vcmp.eq.f32.partialorder %v3570, 8.507059e+37
        %v3572 = vand.u32 %v3540, 2147483648
        %v3573 = vor.u32 1.1754944e-38, %v3572
        %v3574 = vsel %vm3571, %v3573, %v3569
        %v3575 = vrcp.pop %v3543
        %v3576 = vmul.f32 %v3543, %v3575
        %v3577 = vsub.f32 1.0, %v3576
        %v3578 = vmul.f32 %v3575, %v3577
        %v3579 = vadd.f32 %v3575, %v3578
        %vm3580 = vweird.f32 %v3543
        %vm3581 = vweird.f32 %v3575
        %vm3582 = vmor %vm3580, %vm3581
        %v3583 = vsel %vm3582, %v3575, %v3579
        %v3584 = vand.u32 2147483647, %v3543
        %vm3585 = vcmp.eq.f32.partialorder %v3584, 8.507059e+37
        %v3586 = vand.u32 %v3543, 2147483648
        %v3587 = vor.u32 1.1754944e-38, %v3586
        %v3588 = vsel %vm3585, %v3587, %v3583
        %v3589 = vrcp.pop %v3546
        %v3590 = vmul.f32 %v3546, %v3589
        %v3591 = vsub.f32 1.0, %v3590
        %v3592 = vmul.f32 %v3589, %v3591
        %v3593 = vadd.f32 %v3589, %v3592
        %vm3594 = vweird.f32 %v3546
        %vm3595 = vweird.f32 %v3589
        %vm3596 = vmor %vm3594, %vm3595
        %v3597 = vsel %vm3596, %v3589, %v3593
        %v3598 = vand.u32 2147483647, %v3546
        %vm3599 = vcmp.eq.f32.partialorder %v3598, 8.507059e+37
        %v3600 = vand.u32 %v3546, 2147483648
        %v3601 = vor.u32 1.1754944e-38, %v3600
        %v3602 = vsel %vm3599, %v3601, %v3597
        %v3603 = vmul.f32 %v3528, %v3560
        %v3604 = vmul.f32 %v3530, %v3574
        %v3605 = vmul.f32 %v3532, %v3588
        %v3606 = vmul.f32 %v3534, %v3602
        %v3607 = vpack.c.bf16 %v3603, %v3603
        %v3608 = vpack.c.bf16 %v3604, %v3604
        %v3609 = vpack.c.bf16 %v3605, %v3605
        %v3610 = vpack.c.bf16 %v3606, %v3606
        %v3613 = vunpack.c.l.b16 %v3607
        %v3614 = vunpack.c.l.b16 %v3608
        %v3615 = vpack.c.b16 %v3614, %v3613
        %3616 = vrot.lane.b32.xlu0 %v3208, 104
        %v3617 = vpop.permute.xlu0 %3616
        %v3619 = vsel %vm2115, %v3615, 0
        %v3622 = vsel %vm3004, %v3617, 0
        %3624 = vmatpush.bf16.msra.mxu0 0
        %3625 = vmatpush.bf16.msra.mxu0 0
        %3626 = vmatpush.bf16.msra.mxu0 0
        %3627 = vmatpush.bf16.msra.mxu0 0
        %3628 = vmatpush.bf16.msra.mxu0 0
        %3629 = vmatpush.bf16.msra.mxu0 0
        %3630 = vmatpush.bf16.msra.mxu0 0
        %3631 = vmatpush.bf16.msra.mxu0 %v3622
        %3632 = vmatmul.bf16.gmra.mxu0 %v3619
        %v3633 = vpop.f32.mrf.mxu0
        %v3634 = vadd.f32 0.0, %v3633
        %v3635 = vpop.f32.mrf.mxu0
        %v3636 = vadd.f32 0.0, %v3635
        %3637 = vdwg.mxu0
        %v3640 = vunpack.c.l.b16 %v3609
        %v3641 = vunpack.c.l.b16 %v3610
        %v3642 = vpack.c.b16 %v3641, %v3640
        %3643 = vrot.lane.b32.xlu0 %v3238, 104
        %v3644 = vpop.permute.xlu0 %3643
        %v3646 = vsel %vm2115, %v3642, 0
        %v3649 = vsel %vm3004, %v3644, 0
        %3651 = vmatpush.bf16.msra.mxu0 0
        %3652 = vmatpush.bf16.msra.mxu0 0
        %3653 = vmatpush.bf16.msra.mxu0 0
        %3654 = vmatpush.bf16.msra.mxu0 0
        %3655 = vmatpush.bf16.msra.mxu0 0
        %3656 = vmatpush.bf16.msra.mxu0 0
        %3657 = vmatpush.bf16.msra.mxu0 0
        %3658 = vmatpush.bf16.msra.mxu0 %v3649
        %3659 = vmatmul.bf16.gmra.mxu0 %v3646
        %v3660 = vpop.f32.mrf.mxu0
        %v3661 = vadd.f32 0.0, %v3660
        %v3662 = vpop.f32.mrf.mxu0
        %v3663 = vadd.f32 0.0, %v3662
        %3664 = vdwg.mxu0
        %3669 = vrot.lane.b32.xlu0 %v3227, 8
        %v3670 = vpop.permute.xlu0 %3669
        %3671 = vrot.lane.b32.xlu0 %v3229, 8
        %v3672 = vpop.permute.xlu0 %3671
        %3673 = vrot.lane.b32.xlu0 %v3257, 8
        %v3674 = vpop.permute.xlu0 %3673
        %3675 = vrot.lane.b32.xlu0 %v3259, 8
        %v3676 = vpop.permute.xlu0 %3675
        %3685 = vrot.lane.b32.xlu0 %v3432, 16
        %v3686 = vpop.permute.xlu0 %3685
        %3687 = vrot.lane.b32.xlu0 %v3434, 16
        %v3688 = vpop.permute.xlu0 %3687
        %3689 = vrot.lane.b32.xlu0 %v3459, 16
        %v3690 = vpop.permute.xlu0 %3689
        %3691 = vrot.lane.b32.xlu0 %v3461, 16
        %v3692 = vpop.permute.xlu0 %3691
        %3701 = vrot.lane.b32.xlu0 %v3634, 24
        %v3702 = vpop.permute.xlu0 %3701
        %3703 = vrot.lane.b32.xlu0 %v3636, 24
        %v3704 = vpop.permute.xlu0 %3703
        %3705 = vrot.lane.b32.xlu0 %v3661, 24
        %v3706 = vpop.permute.xlu0 %3705
        %3707 = vrot.lane.b32.xlu0 %v3663, 24
        %v3708 = vpop.permute.xlu0 %3707
        %v3713 = vsel %vm2115, %v3018, %v3670
        %v3714 = vsel %vm2115, %v3020, %v3672
        %v3715 = vsel %vm2115, %v3043, %v3674
        %v3716 = vsel %vm2115, %v3045, %v3676
        %v3717 = vsel %vm2159, %v3713, %v3686
        %v3718 = vsel %vm2159, %v3714, %v3688
        %v3719 = vsel %vm2159, %v3715, %v3690
        %v3720 = vsel %vm2159, %v3716, %v3692
        %v3721 = vsel %vm2690, %v3717, %v3702
        %v3722 = vsel %vm2690, %v3718, %v3704
        %v3723 = vsel %vm2690, %v3719, %v3706
        %v3724 = vsel %vm2690, %v3720, %v3708
        %v3725 = vpack.c.bf16 %v3722, %v3721
        %v3726 = vpack.c.bf16 %v3724, %v3723
        %v3727 = vld [vmem:[%s1927] sm:$0xf]
        %v3728 = vld [vmem:[%s1927 + $0x4] sm:$0xf]
        %v3729 = vld [vmem:[%s1927 + $0x8] sm:$0xf]
        %v3730 = vld [vmem:[%s1927 + $0xc] sm:$0xf]
        %v3731 = vld [vmem:[%s1565] sm:$0x1]
        %v3733 = vperm.slane %v3731, 0
        %v3739 = vunpack.c.l.b16 %v3727
        %v3740 = vunpack.c.l.b16 %v3728
        %v3741 = vunpack.c.l.b16 %v3729
        %v3742 = vunpack.c.l.b16 %v3730
        %v3743 = vpack.c.b16 %v3740, %v3739
        %v3744 = vpack.c.b16 %v3742, %v3741
        %v3748 = vsel %vm1998, %v3725, 0
        %v3751 = vsel %vm1998, %v3726, 0
        %3753 = vmatpush.bf16.msra.mxu0 0
        %3754 = vmatpush.bf16.msra.mxu0 0
        %3755 = vmatpush.bf16.msra.mxu0 0
        %3756 = vmatpush.bf16.msra.mxu0 0
        %3757 = vmatpush.bf16.msra.mxu0 0
        %3758 = vmatpush.bf16.msra.mxu0 0
        %3759 = vmatpush.bf16.msra.mxu0 %v3744
        %3760 = vmatpush.bf16.msra.mxu0 %v3743
        %3761 = vmatmul.bf16.gmra.mxu0 %v3748
        %v3762 = vpop.f32.mrf.mxu0
        %v3763 = vadd.f32 %v3733, %v3762
        %v3764 = vpop.f32.mrf.mxu0
        %v3765 = vadd.f32 %v3733, %v3764
        %3766 = vmatmul.bf16.gmra.mxu0 %v3751
        %v3767 = vpop.f32.mrf.mxu0
        %v3768 = vadd.f32 %v3733, %v3767
        %v3769 = vpop.f32.mrf.mxu0
        %v3770 = vadd.f32 %v3733, %v3769
        %3771 = vdwg.mxu0
        %v3772 = vadd.f32 %v2727, %v1969
        %v3773 = vadd.f32 %v2729, %v1970
        %v3774 = vsel %vm1998, %v3772, 0.0
        %3775 = vadd.xlane.f32.xlu0 %v3774
        %v3776 = vpop.xlane.xlu0 %3775
        %v3777 = vsel %vm1998, %v3773, 0.0
        %3778 = vadd.xlane.f32.xlu0 %v3777
        %v3779 = vpop.xlane.xlu0 %3778
        %v3780 = vrot.slane %v3776, 4
        %v3781 = vadd.f32 %v3776, %v3780
        %v3782 = vrot.slane %v3781, 2
        %v3783 = vadd.f32 %v3781, %v3782
        %v3784 = vrot.slane %v3783, 1
        %v3785 = vadd.f32 %v3783, %v3784
        %v3786 = vrot.slane %v3779, 4
        %v3787 = vadd.f32 %v3779, %v3786
        %v3788 = vrot.slane %v3787, 2
        %v3789 = vadd.f32 %v3787, %v3788
        %v3790 = vrot.slane %v3789, 1
        %v3791 = vadd.f32 %v3789, %v3790
        %v3792 = vmul.f32 %v3785, 0.00390625
        %v3793 = vmul.f32 %v3791, 0.00390625
        %v3794 = vsub.f32 %v3772, %v3792
        %v3795 = vsub.f32 %v3773, %v3793
        %v3796 = vmul.f32 %v3794, %v3794
        %v3797 = vmul.f32 %v3795, %v3795
        %v3798 = vsel %vm1998, %v3796, 0.0
        %3799 = vadd.xlane.f32.xlu0 %v3798
        %v3800 = vpop.xlane.xlu0 %3799
        %v3801 = vsel %vm1998, %v3797, 0.0
        %3802 = vadd.xlane.f32.xlu0 %v3801
        %v3803 = vpop.xlane.xlu0 %3802
        %v3804 = vrot.slane %v3800, 4
        %v3805 = vadd.f32 %v3800, %v3804
        %v3806 = vrot.slane %v3805, 2
        %v3807 = vadd.f32 %v3805, %v3806
        %v3808 = vrot.slane %v3807, 1
        %v3809 = vadd.f32 %v3807, %v3808
        %v3810 = vrot.slane %v3803, 4
        %v3811 = vadd.f32 %v3803, %v3810
        %v3812 = vrot.slane %v3811, 2
        %v3813 = vadd.f32 %v3811, %v3812
        %v3814 = vrot.slane %v3813, 1
        %v3815 = vadd.f32 %v3813, %v3814
        %v3816 = vmul.f32 %v3809, 0.00390625
        %v3817 = vmul.f32 %v3815, 0.00390625
        %v3818 = vadd.f32 %v3816, 1e-05
        %v3819 = vadd.f32 %v3817, 1e-05
        %v3820 = vrsqrt.pop %v3818
        %v3821 = vmul.f32 %v3820, %v3818
        %v3822 = vmul.f32 %v3821, %v3820
        %v3823 = vmul.f32 0.5, %v3822
        %v3824 = vsub.f32 1.5, %v3823
        %v3825 = vmul.f32 %v3820, %v3824
        %vm3826 = vweird.f32 %v3818
        %vm3827 = vweird.f32 %v3820
        %vm3828 = vmor %vm3826, %vm3827
        %v3829 = vsel %vm3828, %v3820, %v3825
        %v3830 = vrsqrt.pop %v3819
        %v3831 = vmul.f32 %v3830, %v3819
        %v3832 = vmul.f32 %v3831, %v3830
        %v3833 = vmul.f32 0.5, %v3832
        %v3834 = vsub.f32 1.5, %v3833
        %v3835 = vmul.f32 %v3830, %v3834
        %vm3836 = vweird.f32 %v3819
        %vm3837 = vweird.f32 %v3830
        %vm3838 = vmor %vm3836, %vm3837
        %v3839 = vsel %vm3838, %v3830, %v3835
        %v3840 = vmul.f32 %v3794, %v3829
        %v3841 = vmul.f32 %v3795, %v3839
        %v3842 = vld [vmem:[%s1575] sm:$0xff]
        %v3843 = vmul.f32 %v3840, %v3842
        %v3844 = vmul.f32 %v3841, %v3842
        %v3845 = vld [vmem:[%s1585] sm:$0xff]
        %v3846 = vadd.f32 %v3843, %v3845
        %v3847 = vadd.f32 %v3844, %v3845
        %v3848 = vadd.f32 %v3763, %v1971
        %v3849 = vadd.f32 %v3765, %v1972
        %v3850 = vadd.f32 %v3768, %v1973
        %v3851 = vadd.f32 %v3770, %v1974
        %v3852 = vsel %vm1998, %v3848, 0.0
        %3853 = vadd.xlane.f32.xlu0 %v3852
        %v3854 = vpop.xlane.xlu0 %3853
        %v3855 = vsel %vm1998, %v3849, 0.0
        %3856 = vadd.xlane.f32.xlu0 %v3855
        %v3857 = vpop.xlane.xlu0 %3856
        %v3858 = vsel %vm1998, %v3850, 0.0
        %3859 = vadd.xlane.f32.xlu0 %v3858
        %v3860 = vpop.xlane.xlu0 %3859
        %v3861 = vsel %vm1998, %v3851, 0.0
        %3862 = vadd.xlane.f32.xlu0 %v3861
        %v3863 = vpop.xlane.xlu0 %3862
        %v3864 = vadd.f32 %v3854, %v3857
        %v3865 = vrot.slane %v3864, 4
        %v3866 = vadd.f32 %v3864, %v3865
        %v3867 = vrot.slane %v3866, 2
        %v3868 = vadd.f32 %v3866, %v3867
        %v3869 = vrot.slane %v3868, 1
        %v3870 = vadd.f32 %v3868, %v3869
        %v3871 = vadd.f32 %v3860, %v3863
        %v3872 = vrot.slane %v3871, 4
        %v3873 = vadd.f32 %v3871, %v3872
        %v3874 = vrot.slane %v3873, 2
        %v3875 = vadd.f32 %v3873, %v3874
        %v3876 = vrot.slane %v3875, 1
        %v3877 = vadd.f32 %v3875, %v3876
        %v3878 = vmul.f32 %v3870, 0.001953125
        %v3879 = vmul.f32 %v3877, 0.001953125
        %v3880 = vsub.f32 %v3848, %v3878
        %v3881 = vsub.f32 %v3849, %v3878
        %v3882 = vsub.f32 %v3850, %v3879
        %v3883 = vsub.f32 %v3851, %v3879
        %v3884 = vmul.f32 %v3880, %v3880
        %v3885 = vmul.f32 %v3881, %v3881
        %v3886 = vmul.f32 %v3882, %v3882
        %v3887 = vmul.f32 %v3883, %v3883
        %v3888 = vsel %vm1998, %v3884, 0.0
        %3889 = vadd.xlane.f32.xlu0 %v3888
        %v3890 = vpop.xlane.xlu0 %3889
        %v3891 = vsel %vm1998, %v3885, 0.0
        %3892 = vadd.xlane.f32.xlu0 %v3891
        %v3893 = vpop.xlane.xlu0 %3892
        %v3894 = vsel %vm1998, %v3886, 0.0
        %3895 = vadd.xlane.f32.xlu0 %v3894
        %v3896 = vpop.xlane.xlu0 %3895
        %v3897 = vsel %vm1998, %v3887, 0.0
        %3898 = vadd.xlane.f32.xlu0 %v3897
        %v3899 = vpop.xlane.xlu0 %3898
        %v3900 = vadd.f32 %v3890, %v3893
        %v3901 = vrot.slane %v3900, 4
        %v3902 = vadd.f32 %v3900, %v3901
        %v3903 = vrot.slane %v3902, 2
        %v3904 = vadd.f32 %v3902, %v3903
        %v3905 = vrot.slane %v3904, 1
        %v3906 = vadd.f32 %v3904, %v3905
        %v3907 = vadd.f32 %v3896, %v3899
        %v3908 = vrot.slane %v3907, 4
        %v3909 = vadd.f32 %v3907, %v3908
        %v3910 = vrot.slane %v3909, 2
        %v3911 = vadd.f32 %v3909, %v3910
        %v3912 = vrot.slane %v3911, 1
        %v3913 = vadd.f32 %v3911, %v3912
        %v3914 = vmul.f32 %v3906, 0.001953125
        %v3915 = vmul.f32 %v3913, 0.001953125
        %v3916 = vadd.f32 %v3914, 1e-05
        %v3917 = vadd.f32 %v3915, 1e-05
        %v3918 = vrsqrt.pop %v3916
        %v3919 = vmul.f32 %v3918, %v3916
        %v3920 = vmul.f32 %v3919, %v3918
        %v3921 = vmul.f32 0.5, %v3920
        %v3922 = vsub.f32 1.5, %v3921
        %v3923 = vmul.f32 %v3918, %v3922
        %vm3924 = vweird.f32 %v3916
        %vm3925 = vweird.f32 %v3918
        %vm3926 = vmor %vm3924, %vm3925
        %v3927 = vsel %vm3926, %v3918, %v3923
        %v3928 = vrsqrt.pop %v3917
        %v3929 = vmul.f32 %v3928, %v3917
        %v3930 = vmul.f32 %v3929, %v3928
        %v3931 = vmul.f32 0.5, %v3930
        %v3932 = vsub.f32 1.5, %v3931
        %v3933 = vmul.f32 %v3928, %v3932
        %vm3934 = vweird.f32 %v3917
        %vm3935 = vweird.f32 %v3928
        %vm3936 = vmor %vm3934, %vm3935
        %v3937 = vsel %vm3936, %v3928, %v3933
        %v3938 = vmul.f32 %v3880, %v3927
        %v3939 = vmul.f32 %v3881, %v3927
        %v3940 = vmul.f32 %v3882, %v3937
        %v3941 = vmul.f32 %v3883, %v3937
        %v3942 = vld [vmem:[%s1595] sm:$0xff]
        %v3943 = vld [vmem:[%s1595 + $0x8] sm:$0xff]
        %v3944 = vmul.f32 %v3938, %v3942
        %v3945 = vmul.f32 %v3939, %v3943
        %v3946 = vmul.f32 %v3940, %v3942
        %v3947 = vmul.f32 %v3941, %v3943
        %v3948 = vld [vmem:[%s1605] sm:$0xff]
        %v3949 = vld [vmem:[%s1605 + $0x8] sm:$0xff]
        %v3950 = vadd.f32 %v3944, %v3948
        %v3951 = vadd.f32 %v3945, %v3949
        %v3952 = vadd.f32 %v3946, %v3948
        %v3953 = vadd.f32 %v3947, %v3949
        %v3954 = vpack.c.bf16 %v3847, %v3846
        %v3955 = vld [vmem:[%s1615] sm:$0xf]
        %v3956 = vld [vmem:[%s1615 + $0x4] sm:$0xf]
        %v3957 = vld [vmem:[%s1615 + $0x8] sm:$0xf]
        %v3958 = vld [vmem:[%s1615 + $0xc] sm:$0xf]
        %v3959 = vld [vmem:[%s1624] sm:$0x1]
        %v3961 = vperm.slane %v3959, 0
        %v3967 = vunpack.c.l.b16 %v3955
        %v3968 = vunpack.c.l.b16 %v3956
        %v3969 = vunpack.c.l.b16 %v3957
        %v3970 = vunpack.c.l.b16 %v3958
        %v3971 = vpack.c.b16 %v3968, %v3967
        %v3972 = vpack.c.b16 %v3970, %v3969
        %v3976 = vsel %vm1998, %v3954, 0
        %3978 = vmatpush.bf16.msra.mxu0 0
        %3979 = vmatpush.bf16.msra.mxu0 0
        %3980 = vmatpush.bf16.msra.mxu0 0
        %3981 = vmatpush.bf16.msra.mxu0 0
        %3982 = vmatpush.bf16.msra.mxu0 0
        %3983 = vmatpush.bf16.msra.mxu0 0
        %3984 = vmatpush.bf16.msra.mxu0 %v3972
        %3985 = vmatpush.bf16.msra.mxu0 %v3971
        %3986 = vmatmul.bf16.gmra.mxu0 %v3976
        %v3987 = vpop.f32.mrf.mxu0
        %v3988 = vadd.f32 %v3961, %v3987
        %v3989 = vpop.f32.mrf.mxu0
        %v3990 = vadd.f32 %v3961, %v3989
        %3991 = vdwg.mxu0
        %v3992 = vmax.f32 %v3988, 0.0
        %v3993 = vmax.f32 %v3990, 0.0
        %v3994 = vpack.c.bf16 %v3993, %v3992
        %v3995 = vld [vmem:[%s1932] sm:$0xf]
        %v3996 = vld [vmem:[%s1932 + $0x4] sm:$0xf]
        %v3997 = vld [vmem:[%s1932 + $0x8] sm:$0xf]
        %v3998 = vld [vmem:[%s1932 + $0xc] sm:$0xf]
        %v3999 = vld [vmem:[%s1932 + $0x10] sm:$0xf]
        %v4000 = vld [vmem:[%s1932 + $0x14] sm:$0xf]
        %v4001 = vld [vmem:[%s1932 + $0x18] sm:$0xf]
        %v4002 = vld [vmem:[%s1932 + $0x1c] sm:$0xf]
        %v4003 = vld [vmem:[%s1932 + $0x20] sm:$0xf]
        %v4004 = vld [vmem:[%s1932 + $0x24] sm:$0xf]
        %v4005 = vld [vmem:[%s1932 + $0x28] sm:$0xf]
        %v4006 = vld [vmem:[%s1932 + $0x2c] sm:$0xf]
        %v4007 = vld [vmem:[%s1932 + $0x30] sm:$0xf]
        %v4008 = vld [vmem:[%s1932 + $0x34] sm:$0xf]
        %v4009 = vld [vmem:[%s1932 + $0x38] sm:$0xf]
        %v4010 = vld [vmem:[%s1932 + $0x3c] sm:$0xf]
        %v4011 = vld [vmem:[%s1935] sm:$0x1]
        %v4013 = vperm.slane %v4011, 0
        %v4031 = vunpack.c.l.b16 %v3995
        %v4032 = vunpack.c.l.b16 %v3996
        %v4033 = vunpack.c.l.b16 %v3997
        %v4034 = vunpack.c.l.b16 %v3998
        %v4035 = vunpack.c.l.b16 %v3999
        %v4036 = vunpack.c.l.b16 %v4000
        %v4037 = vunpack.c.l.b16 %v4001
        %v4038 = vunpack.c.l.b16 %v4002
        %v4039 = vunpack.c.l.b16 %v4003
        %v4040 = vunpack.c.l.b16 %v4004
        %v4041 = vunpack.c.l.b16 %v4005
        %v4042 = vunpack.c.l.b16 %v4006
        %v4043 = vunpack.c.l.b16 %v4007
        %v4044 = vunpack.c.l.b16 %v4008
        %v4045 = vunpack.c.l.b16 %v4009
        %v4046 = vunpack.c.l.b16 %v4010
        %v4047 = vpack.c.b16 %v4032, %v4031
        %v4048 = vpack.c.b16 %v4034, %v4033
        %v4049 = vpack.c.b16 %v4036, %v4035
        %v4050 = vpack.c.b16 %v4038, %v4037
        %v4051 = vpack.c.b16 %v4040, %v4039
        %v4052 = vpack.c.b16 %v4042, %v4041
        %v4053 = vpack.c.b16 %v4044, %v4043
        %v4054 = vpack.c.b16 %v4046, %v4045
        %4063 = vmatpush.bf16.msra.mxu0 %v4054
        %4064 = vmatpush.bf16.msra.mxu0 %v4053
        %4065 = vmatpush.bf16.msra.mxu0 %v4052
        %4066 = vmatpush.bf16.msra.mxu0 %v4051
        %4067 = vmatpush.bf16.msra.mxu0 %v4050
        %4068 = vmatpush.bf16.msra.mxu0 %v4049
        %4069 = vmatpush.bf16.msra.mxu0 %v4048
        %4070 = vmatpush.bf16.msra.mxu0 %v4047
        %4071 = vmatmul.bf16.gmra.mxu0 %v3994
        %v4072 = vpop.f32.mrf.mxu0
        %v4073 = vadd.f32 %v4013, %v4072
        %v4074 = vpop.f32.mrf.mxu0
        %v4075 = vadd.f32 %v4013, %v4074
        %4076 = vdwg.mxu0
        %v4077 = vpack.c.bf16 %v3951, %v3950
        %v4078 = vpack.c.bf16 %v3953, %v3952
        %v4079 = vld [vmem:[%s1634] sm:$0xf]
        %v4080 = vld [vmem:[%s1634 + $0x4] sm:$0xf]
        %v4081 = vld [vmem:[%s1634 + $0x8] sm:$0xf]
        %v4082 = vld [vmem:[%s1634 + $0xc] sm:$0xf]
        %v4083 = vld [vmem:[%s1938] sm:$0x1]
        %v4085 = vperm.slane %v4083, 0
        %v4091 = vunpack.c.l.b16 %v4079
        %v4092 = vunpack.c.l.b16 %v4080
        %v4093 = vunpack.c.l.b16 %v4081
        %v4094 = vunpack.c.l.b16 %v4082
        %v4095 = vpack.c.b16 %v4092, %v4091
        %v4096 = vpack.c.b16 %v4094, %v4093
        %v4100 = vsel %vm1998, %v4077, 0
        %v4103 = vsel %vm1998, %v4078, 0
        %4105 = vmatpush.bf16.msra.mxu0 0
        %4106 = vmatpush.bf16.msra.mxu0 0
        %4107 = vmatpush.bf16.msra.mxu0 0
        %4108 = vmatpush.bf16.msra.mxu0 0
        %4109 = vmatpush.bf16.msra.mxu0 0
        %4110 = vmatpush.bf16.msra.mxu0 0
        %4111 = vmatpush.bf16.msra.mxu0 %v4096
        %4112 = vmatpush.bf16.msra.mxu0 %v4095
        %4113 = vmatmul.bf16.gmra.mxu0 %v4100
        %v4114 = vpop.f32.mrf.mxu0
        %v4115 = vadd.f32 %v4085, %v4114
        %v4116 = vpop.f32.mrf.mxu0
        %v4117 = vadd.f32 %v4085, %v4116
        %4118 = vmatmul.bf16.gmra.mxu0 %v4103
        %v4119 = vpop.f32.mrf.mxu0
        %v4120 = vadd.f32 %v4085, %v4119
        %v4121 = vpop.f32.mrf.mxu0
        %v4122 = vadd.f32 %v4085, %v4121
        %4123 = vdwg.mxu0
        %v4124 = vmax.f32 %v4115, 0.0
        %v4125 = vmax.f32 %v4117, 0.0
        %v4126 = vmax.f32 %v4120, 0.0
        %v4127 = vmax.f32 %v4122, 0.0
        %v4128 = vpack.c.bf16 %v4125, %v4124
        %v4129 = vpack.c.bf16 %v4127, %v4126
        %v4130 = vld [vmem:[%s1943] sm:$0xf]
        %v4131 = vld [vmem:[%s1943 + $0x4] sm:$0xf]
        %v4132 = vld [vmem:[%s1943 + $0x8] sm:$0xf]
        %v4133 = vld [vmem:[%s1943 + $0xc] sm:$0xf]
        %v4134 = vld [vmem:[%s1943 + $0x10] sm:$0xf]
        %v4135 = vld [vmem:[%s1943 + $0x14] sm:$0xf]
        %v4136 = vld [vmem:[%s1943 + $0x18] sm:$0xf]
        %v4137 = vld [vmem:[%s1943 + $0x1c] sm:$0xf]
        %v4138 = vld [vmem:[%s1943 + $0x20] sm:$0xf]
        %v4139 = vld [vmem:[%s1943 + $0x24] sm:$0xf]
        %v4140 = vld [vmem:[%s1943 + $0x28] sm:$0xf]
        %v4141 = vld [vmem:[%s1943 + $0x2c] sm:$0xf]
        %v4142 = vld [vmem:[%s1943 + $0x30] sm:$0xf]
        %v4143 = vld [vmem:[%s1943 + $0x34] sm:$0xf]
        %v4144 = vld [vmem:[%s1943 + $0x38] sm:$0xf]
        %v4145 = vld [vmem:[%s1943 + $0x3c] sm:$0xf]
        %v4146 = vld [vmem:[%s1946] sm:$0x1]
        %v4148 = vperm.slane %v4146, 0
        %v4166 = vunpack.c.l.b16 %v4130
        %v4167 = vunpack.c.l.b16 %v4131
        %v4168 = vunpack.c.l.b16 %v4132
        %v4169 = vunpack.c.l.b16 %v4133
        %v4170 = vunpack.c.l.b16 %v4134
        %v4171 = vunpack.c.l.b16 %v4135
        %v4172 = vunpack.c.l.b16 %v4136
        %v4173 = vunpack.c.l.b16 %v4137
        %v4174 = vunpack.c.l.b16 %v4138
        %v4175 = vunpack.c.l.b16 %v4139
        %v4176 = vunpack.c.l.b16 %v4140
        %v4177 = vunpack.c.l.b16 %v4141
        %v4178 = vunpack.c.l.b16 %v4142
        %v4179 = vunpack.c.l.b16 %v4143
        %v4180 = vunpack.c.l.b16 %v4144
        %v4181 = vunpack.c.l.b16 %v4145
        %v4182 = vpack.c.b16 %v4167, %v4166
        %v4183 = vpack.c.b16 %v4169, %v4168
        %v4184 = vpack.c.b16 %v4171, %v4170
        %v4185 = vpack.c.b16 %v4173, %v4172
        %v4186 = vpack.c.b16 %v4175, %v4174
        %v4187 = vpack.c.b16 %v4177, %v4176
        %v4188 = vpack.c.b16 %v4179, %v4178
        %v4189 = vpack.c.b16 %v4181, %v4180
        %4198 = vmatpush.bf16.msra.mxu0 %v4189
        %4199 = vmatpush.bf16.msra.mxu0 %v4188
        %4200 = vmatpush.bf16.msra.mxu0 %v4187
        %4201 = vmatpush.bf16.msra.mxu0 %v4186
        %4202 = vmatpush.bf16.msra.mxu0 %v4185
        %4203 = vmatpush.bf16.msra.mxu0 %v4184
        %4204 = vmatpush.bf16.msra.mxu0 %v4183
        %4205 = vmatpush.bf16.msra.mxu0 %v4182
        %4206 = vmatmul.bf16.gmra.mxu0 %v4128
        %v4207 = vpop.f32.mrf.mxu0
        %v4208 = vadd.f32 %v4148, %v4207
        %v4209 = vpop.f32.mrf.mxu0
        %v4210 = vadd.f32 %v4148, %v4209
        %4211 = vmatmul.bf16.gmra.mxu0 %v4129
        %v4212 = vpop.f32.mrf.mxu0
        %v4213 = vadd.f32 %v4148, %v4212
        %v4214 = vpop.f32.mrf.mxu0
        %v4215 = vadd.f32 %v4148, %v4214
        %4216 = vdwg.mxu0
        %v4217 = vadd.f32 %v4073, %v3846
        %v4218 = vadd.f32 %v4075, %v3847
        %v4219 = vsel %vm1998, %v4217, 0.0
        %4220 = vadd.xlane.f32.xlu0 %v4219
        %v4221 = vpop.xlane.xlu0 %4220
        %v4222 = vsel %vm1998, %v4218, 0.0
        %4223 = vadd.xlane.f32.xlu0 %v4222
        %v4224 = vpop.xlane.xlu0 %4223
        %v4225 = vrot.slane %v4221, 4
        %v4226 = vadd.f32 %v4221, %v4225
        %v4227 = vrot.slane %v4226, 2
        %v4228 = vadd.f32 %v4226, %v4227
        %v4229 = vrot.slane %v4228, 1
        %v4230 = vadd.f32 %v4228, %v4229
        %v4231 = vrot.slane %v4224, 4
        %v4232 = vadd.f32 %v4224, %v4231
        %v4233 = vrot.slane %v4232, 2
        %v4234 = vadd.f32 %v4232, %v4233
        %v4235 = vrot.slane %v4234, 1
        %v4236 = vadd.f32 %v4234, %v4235
        %v4237 = vmul.f32 %v4230, 0.00390625
        %v4238 = vmul.f32 %v4236, 0.00390625
        %v4239 = vsub.f32 %v4217, %v4237
        %v4240 = vsub.f32 %v4218, %v4238
        %v4241 = vmul.f32 %v4239, %v4239
        %v4242 = vmul.f32 %v4240, %v4240
        %v4243 = vsel %vm1998, %v4241, 0.0
        %4244 = vadd.xlane.f32.xlu0 %v4243
        %v4245 = vpop.xlane.xlu0 %4244
        %v4246 = vsel %vm1998, %v4242, 0.0
        %4247 = vadd.xlane.f32.xlu0 %v4246
        %v4248 = vpop.xlane.xlu0 %4247
        %v4249 = vrot.slane %v4245, 4
        %v4250 = vadd.f32 %v4245, %v4249
        %v4251 = vrot.slane %v4250, 2
        %v4252 = vadd.f32 %v4250, %v4251
        %v4253 = vrot.slane %v4252, 1
        %v4254 = vadd.f32 %v4252, %v4253
        %v4255 = vrot.slane %v4248, 4
        %v4256 = vadd.f32 %v4248, %v4255
        %v4257 = vrot.slane %v4256, 2
        %v4258 = vadd.f32 %v4256, %v4257
        %v4259 = vrot.slane %v4258, 1
        %v4260 = vadd.f32 %v4258, %v4259
        %v4261 = vmul.f32 %v4254, 0.00390625
        %v4262 = vmul.f32 %v4260, 0.00390625
        %v4263 = vadd.f32 %v4261, 1e-05
        %v4264 = vadd.f32 %v4262, 1e-05
        %v4265 = vrsqrt.pop %v4263
        %v4266 = vmul.f32 %v4265, %v4263
        %v4267 = vmul.f32 %v4266, %v4265
        %v4268 = vmul.f32 0.5, %v4267
        %v4269 = vsub.f32 1.5, %v4268
        %v4270 = vmul.f32 %v4265, %v4269
        %vm4271 = vweird.f32 %v4263
        %vm4272 = vweird.f32 %v4265
        %vm4273 = vmor %vm4271, %vm4272
        %v4274 = vsel %vm4273, %v4265, %v4270
        %v4275 = vrsqrt.pop %v4264
        %v4276 = vmul.f32 %v4275, %v4264
        %v4277 = vmul.f32 %v4276, %v4275
        %v4278 = vmul.f32 0.5, %v4277
        %v4279 = vsub.f32 1.5, %v4278
        %v4280 = vmul.f32 %v4275, %v4279
        %vm4281 = vweird.f32 %v4264
        %vm4282 = vweird.f32 %v4275
        %vm4283 = vmor %vm4281, %vm4282
        %v4284 = vsel %vm4283, %v4275, %v4280
        %v4285 = vmul.f32 %v4239, %v4274
        %v4286 = vmul.f32 %v4240, %v4284
        %v4287 = vld [vmem:[%s1950] sm:$0xff]
        %v4288 = vmul.f32 %v4285, %v4287
        %v4289 = vmul.f32 %v4286, %v4287
        %v4290 = vld [vmem:[%s1644] sm:$0xff]
        %v4291 = vadd.f32 %v4288, %v4290
        %v4292 = vadd.f32 %v4289, %v4290
        %4293 = vst.msk [vmem:[#allocation31] sm:$0xff] %vm1998, %v4291
        %4294 = vst.msk [vmem:[#allocation31 + $0x8] sm:$0xff] %vm1998, %v4292
        %v4295 = vadd.f32 %v4208, %v3950
        %v4296 = vadd.f32 %v4210, %v3951
        %v4297 = vadd.f32 %v4213, %v3952
        %v4298 = vadd.f32 %v4215, %v3953
        %v4299 = vsel %vm1998, %v4295, 0.0
        %4300 = vadd.xlane.f32.xlu0 %v4299
        %v4301 = vpop.xlane.xlu0 %4300
        %v4302 = vsel %vm1998, %v4296, 0.0
        %4303 = vadd.xlane.f32.xlu0 %v4302
        %v4304 = vpop.xlane.xlu0 %4303
        %v4305 = vsel %vm1998, %v4297, 0.0
        %4306 = vadd.xlane.f32.xlu0 %v4305
        %v4307 = vpop.xlane.xlu0 %4306
        %v4308 = vsel %vm1998, %v4298, 0.0
        %4309 = vadd.xlane.f32.xlu0 %v4308
        %v4310 = vpop.xlane.xlu0 %4309
        %v4311 = vadd.f32 %v4301, %v4304
        %v4312 = vrot.slane %v4311, 4
        %v4313 = vadd.f32 %v4311, %v4312
        %v4314 = vrot.slane %v4313, 2
        %v4315 = vadd.f32 %v4313, %v4314
        %v4316 = vrot.slane %v4315, 1
        %v4317 = vadd.f32 %v4315, %v4316
        %v4318 = vadd.f32 %v4307, %v4310
        %v4319 = vrot.slane %v4318, 4
        %v4320 = vadd.f32 %v4318, %v4319
        %v4321 = vrot.slane %v4320, 2
        %v4322 = vadd.f32 %v4320, %v4321
        %v4323 = vrot.slane %v4322, 1
        %v4324 = vadd.f32 %v4322, %v4323
        %v4325 = vmul.f32 %v4317, 0.001953125
        %v4326 = vmul.f32 %v4324, 0.001953125
        %v4327 = vsub.f32 %v4295, %v4325
        %v4328 = vsub.f32 %v4296, %v4325
        %v4329 = vsub.f32 %v4297, %v4326
        %v4330 = vsub.f32 %v4298, %v4326
        %v4331 = vmul.f32 %v4327, %v4327
        %v4332 = vmul.f32 %v4328, %v4328
        %v4333 = vmul.f32 %v4329, %v4329
        %v4334 = vmul.f32 %v4330, %v4330
        %v4335 = vsel %vm1998, %v4331, 0.0
        %4336 = vadd.xlane.f32.xlu0 %v4335
        %v4337 = vpop.xlane.xlu0 %4336
        %v4338 = vsel %vm1998, %v4332, 0.0
        %4339 = vadd.xlane.f32.xlu0 %v4338
        %v4340 = vpop.xlane.xlu0 %4339
        %v4341 = vsel %vm1998, %v4333, 0.0
        %4342 = vadd.xlane.f32.xlu0 %v4341
        %v4343 = vpop.xlane.xlu0 %4342
        %v4344 = vsel %vm1998, %v4334, 0.0
        %4345 = vadd.xlane.f32.xlu0 %v4344
        %v4346 = vpop.xlane.xlu0 %4345
        %v4347 = vadd.f32 %v4337, %v4340
        %v4348 = vrot.slane %v4347, 4
        %v4349 = vadd.f32 %v4347, %v4348
        %v4350 = vrot.slane %v4349, 2
        %v4351 = vadd.f32 %v4349, %v4350
        %v4352 = vrot.slane %v4351, 1
        %v4353 = vadd.f32 %v4351, %v4352
        %v4354 = vadd.f32 %v4343, %v4346
        %v4355 = vrot.slane %v4354, 4
        %v4356 = vadd.f32 %v4354, %v4355
        %v4357 = vrot.slane %v4356, 2
        %v4358 = vadd.f32 %v4356, %v4357
        %v4359 = vrot.slane %v4358, 1
        %v4360 = vadd.f32 %v4358, %v4359
        %v4361 = vmul.f32 %v4353, 0.001953125
        %v4362 = vmul.f32 %v4360, 0.001953125
        %v4363 = vadd.f32 %v4361, 1e-05
        %v4364 = vadd.f32 %v4362, 1e-05
        %v4365 = vrsqrt.pop %v4363
        %v4366 = vmul.f32 %v4365, %v4363
        %v4367 = vmul.f32 %v4366, %v4365
        %v4368 = vmul.f32 0.5, %v4367
        %v4369 = vsub.f32 1.5, %v4368
        %v4370 = vmul.f32 %v4365, %v4369
        %vm4371 = vweird.f32 %v4363
        %vm4372 = vweird.f32 %v4365
        %vm4373 = vmor %vm4371, %vm4372
        %v4374 = vsel %vm4373, %v4365, %v4370
        %v4375 = vrsqrt.pop %v4364
        %v4376 = vmul.f32 %v4375, %v4364
        %v4377 = vmul.f32 %v4376, %v4375
        %v4378 = vmul.f32 0.5, %v4377
        %v4379 = vsub.f32 1.5, %v4378
        %v4380 = vmul.f32 %v4375, %v4379
        %vm4381 = vweird.f32 %v4364
        %vm4382 = vweird.f32 %v4375
        %vm4383 = vmor %vm4381, %vm4382
        %v4384 = vsel %vm4383, %v4375, %v4380
        %v4385 = vmul.f32 %v4327, %v4374
        %v4386 = vmul.f32 %v4328, %v4374
        %v4387 = vmul.f32 %v4329, %v4384
        %v4388 = vmul.f32 %v4330, %v4384
        %v4389 = vld [vmem:[%s1654] sm:$0xff]
        %v4390 = vld [vmem:[%s1654 + $0x8] sm:$0xff]
        %v4391 = vmul.f32 %v4385, %v4389
        %v4392 = vmul.f32 %v4386, %v4390
        %v4393 = vmul.f32 %v4387, %v4389
        %v4394 = vmul.f32 %v4388, %v4390
        %v4395 = vld [vmem:[%s1664] sm:$0xff]
        %v4396 = vld [vmem:[%s1664 + $0x8] sm:$0xff]
        %v4397 = vadd.f32 %v4391, %v4395
        %v4398 = vadd.f32 %v4392, %v4396
        %v4399 = vadd.f32 %v4393, %v4395
        %v4400 = vadd.f32 %v4394, %v4396
        %4401 = vst.msk [vmem:[#allocation32] sm:$0xff] %vm1998, %v4397
        %4402 = vst.msk [vmem:[#allocation32 + $0x8] sm:$0xff] %vm1998, %v4398
        %4403 = vst.msk [vmem:[#allocation32 + $0x10] sm:$0xff] %vm1998, %v4399
        %4404 = vst.msk [vmem:[#allocation32 + $0x18] sm:$0xff] %vm1998, %v4400
        // Predicated region
        $region233: #{tpu_custom_call.1} parent=155 // pred_check
          %p4405 = pneg %p1000
        $region234: #{tpu_custom_call.1} parent=155 // pred_check_branch
          %4407 = sbr.rel (%p4405) target = $region236
        $region235: #{tpu_custom_call.1} parent=155 // pred_region
          %4409 = vsyncadd [#allocation4], 0
          %s4410 = sshll.u32 [#allocation31], 4
          %s4411 = int_to_ptr.vmem [resolvable:$true] %s4410
          %s4412 = sshll.u32 %s69, 4
          %s4413 = int_to_ptr.hbm [resolvable:$true] %s4412
          %4418 = dma.vmem_to_hbm [thread:$0]  %s4411, 256, %s4413, [#allocation4], 128, 128, 8
        $region236: #{tpu_custom_call.1} parent=155 // pred_fallthru
          _
        // Predicated region
        $region237: #{tpu_custom_call.1} parent=155 // pred_check
          %p4419 = pneg %p1021
        $region238: #{tpu_custom_call.1} parent=155 // pred_check_branch
          %4421 = sbr.rel (%p4419) target = $region240
        $region239: #{tpu_custom_call.1} parent=155 // pred_region
          %4423 = vsyncadd [#allocation33], 0
          %s4424 = sshll.u32 [#allocation32], 4
          %s4425 = int_to_ptr.vmem [resolvable:$true] %s4424
          %s4426 = sshll.u32 %s71, 4
          %s4427 = int_to_ptr.hbm [resolvable:$true] %s4426
          %4432 = dma.vmem_to_hbm [thread:$0]  %s4425, 512, %s4427, [#allocation33], 128, 128, 8
        $region240: #{tpu_custom_call.1} parent=155 // pred_fallthru
          _
        // Predicated region
        $region241: #{tpu_custom_call.1} parent=155 // pred_check
          %p4433 = pneg %p1000
        $region242: #{tpu_custom_call.1} parent=155 // pred_check_branch
          %4435 = sbr.rel (%p4433) target = $region244
        $region243: #{tpu_custom_call.1} parent=155 // pred_region
          %4437 = dma.done [#allocation4], 256
        $region244: #{tpu_custom_call.1} parent=155 // pred_fallthru
          _
        // Predicated region
        $region245: #{tpu_custom_call.1} parent=155 // pred_check
          %p4438 = pneg %p1021
        $region246: #{tpu_custom_call.1} parent=155 // pred_check_branch
          %4440 = sbr.rel (%p4438) target = $region248
        $region247: #{tpu_custom_call.1} parent=155 // pred_region
          %4442 = dma.done [#allocation33], 512
        $region248: #{tpu_custom_call.1} parent=155 // pred_fallthru
          _
      $region156: #{tpu_custom_call.1} parent=5 // pred_fallthru
        _
      %p4443 = scmp.le.s32.totalorder 2, %s108
      // Predicated region
      $region249: #{tpu_custom_call.1} parent=5 // pred_check
        %p4444 = pneg %p4443
      $region250: #{tpu_custom_call.1} parent=5 // pred_check_branch
        %4446 = sbr.rel (%p4444) target = $region252
      $region251: #{tpu_custom_call.1} parent=5 // pred_region
        %s4447 = ssub.s32 %s108, 2
      $region252: #{tpu_custom_call.1} parent=5 // pred_fallthru
        _
    $region6: #{tpu_custom_call.1} parent=1 // loop_footer
      %s112 = sadd.s32 1, %s108
    $region7: #{tpu_custom_call.1} parent=1 // loop_footer_branch
      %107 = sbr.rel target = $region3
    $region8: #{tpu_custom_call.1} parent=1 // loop_exit
      _
    %4448 = vsyncpa [#allocation3], 1
    %s4449 = scalar_lea.sflag [#allocation3], 1
    %4450 = vsyncpa %s4449, 1
    %4451 = vsyncpa [#allocation6], 1
    %s4452 = scalar_lea.sflag [#allocation6], 1
    %4453 = vsyncpa %s4452, 1
    %4454 = vsyncpa [#allocation9], 1
    %s4455 = scalar_lea.sflag [#allocation9], 1
    %4456 = vsyncpa %s4455, 1
    %4457 = vsyncpa [#allocation12], 1
    %s4458 = scalar_lea.sflag [#allocation12], 1
    %4459 = vsyncpa %s4458, 1
    %4460 = vsyncpa [#allocation15], 1
    %s4461 = scalar_lea.sflag [#allocation15], 1
    %4462 = vsyncpa %s4461, 1
    %4463 = vsyncpa [#allocation18], 1
    %s4464 = scalar_lea.sflag [#allocation18], 1
    %4465 = vsyncpa %s4464, 1
    %4466 = vsyncpa [#allocation21], 1
    %s4467 = scalar_lea.sflag [#allocation21], 1
    %4468 = vsyncpa %s4467, 1
    %4469 = vsyncpa [#allocation24], 1
    %s4470 = scalar_lea.sflag [#allocation24], 1
    %4471 = vsyncpa %s4470, 1
    %4472 = vsyncpa [#allocation27], 1
    %s4473 = scalar_lea.sflag [#allocation27], 1
    %4474 = vsyncpa %s4473, 1
    %4475 = vsyncpa [#allocation30], 1
    %s4476 = scalar_lea.sflag [#allocation30], 1
    %4477 = vsyncpa %s4476, 1
    %4478 = vsyncpa [#allocation4], 1
    %s4479 = scalar_lea.sflag [#allocation4], 1
    %4480 = vsyncpa %s4479, 1
    %4481 = vsyncpa [#allocation33], 1

</llo_original>
